<compile_context>
chip_gen: v5e
topology: v5e:2x2
jax: 0.10.0
libtpu: 0.0.40
codegen_flags: <defaults>
</compile_context>

<pallas_src>
import math
import functools

import jax
import jax.numpy as jnp
from jax.experimental import pallas as pl
from jax.experimental.pallas import tpu as pltpu


LANE = 128     # lane-dense padding for the OUTPUT feature axis
SUBLANE = 8    # input feature axis only needs sublane-multiple padding


def _round_up(n, m):
    return ((n + m - 1) // m) * m


# --------------------------------------------------------------------------
# in-kernel helpers
# --------------------------------------------------------------------------
def _layer_norm(x, gamma, beta, eps=1e-5):
    mean = jnp.mean(x, axis=-1, keepdims=True)
    var = jnp.mean((x - mean) ** 2, axis=-1, keepdims=True)
    return (x - mean) * jax.lax.rsqrt(var + eps) * gamma + beta


# --------------------------------------------------------------------------
# fused kernel: one grid step == one batch element
# input_proj + pos-enc + num_layers encoder layers + output_proj
# (eval-mode BatchNorms folded into the linears on the host)
# --------------------------------------------------------------------------
def fused_transformer_kernel(nhead, num_layers,
                             x_ref, w_in_ref, b_in_ref, pe_ref,
                             wqkv_ref, bqkv_ref, wo_ref, bo_ref,
                             g1_ref, bt1_ref, w1_ref, bb1_ref,
                             w2_ref, bb2_ref, g2_ref, bt2_ref,
                             w_out_ref, b_out_ref, o_ref):
    S = x_ref.shape[0]                    # leading batch dim is squeezed away
    H = w_in_ref.shape[-1]
    hd = H // nhead
    cd = w_in_ref.dtype                   # MXU operand dtype (f32 or bf16)

    # ---- input projection (BatchNorm1d(input) folded) + positional encoding
    h = jnp.dot(x_ref[...].astype(cd), w_in_ref[...],
                preferred_element_type=jnp.float32) + b_in_ref[...]
    h = h + pe_ref[...]                                        # (S, H), f32

    # ---- encoder layers (statically unrolled; num_layers is small here).
    # TODO(synk): switch to lax.fori_loop with dynamic wqkv_ref[l] indexing
    #             once num_layers grows enough for vreg pressure to matter.
    for l in range(num_layers):
        # -- multi-head self-attention: all heads in single batched einsums --
        # wqkv_ref[l] is (3*nhead, H, hd) so every head's q/k/v comes out with
        # head on the leading (major) axis: no lane slicing, no lane concat.
        hb = jnp.broadcast_to(h.astype(cd)[None], (3 * nhead, S, H))
        qkv = jnp.einsum('htd,hdk->htk', hb, wqkv_ref[l],
                         preferred_element_type=jnp.float32) + bqkv_ref[l]
        q = qkv[:nhead]                    # (nhead, S, hd); 1/sqrt(hd) folded
        k = qkv[nhead:2 * nhead]
        v = qkv[2 * nhead:]

        s = jnp.einsum('hqd,hkd->hqk', q.astype(cd), k.astype(cd),
                       preferred_element_type=jnp.float32)     # (nhead, S, S)
        s = s - jnp.max(s, axis=-1, keepdims=True)
        p = jnp.exp(s)
        p = p * pl.reciprocal(jnp.sum(p, axis=-1, keepdims=True), approx=False)
        pv = jnp.einsum('hqk,hkd->hqd', p.astype(cd), v.astype(cd),
                        preferred_element_type=jnp.float32)    # (nhead, S, hd)

        # head recombination folded into per-head W_o: sum_h pv_h @ Wo_h
        part = jnp.einsum('hsd,hdk->hsk', pv.astype(cd), wo_ref[l],
                          preferred_element_type=jnp.float32)  # (nhead, S, H)
        attn = jnp.sum(part, axis=0) + bo_ref[l]

        # residual + LayerNorm 1 (post-norm, PyTorch default)
        h = _layer_norm(h + attn, g1_ref[l], bt1_ref[l])

        # feed-forward (ReLU)
        ff = jnp.dot(h.astype(cd), w1_ref[l],
                     preferred_element_type=jnp.float32) + bb1_ref[l]
        ff = jnp.maximum(ff, 0.0)
        ff = jnp.dot(ff.astype(cd), w2_ref[l],
                     preferred_element_type=jnp.float32) + bb2_ref[l]

        # residual + LayerNorm 2
        h = _layer_norm(h + ff, g2_ref[l], bt2_ref[l])

    # ---- output projection (BatchNorm1d(hidden) folded), lane-dense store ---
    o_ref[...] = (jnp.dot(h.astype(cd), w_out_ref[...],
                          preferred_element_type=jnp.float32)
                  + b_out_ref[...]).astype(o_ref.dtype)


# --------------------------------------------------------------------------
# wrapper: one pallas_call, grid over the batch
# --------------------------------------------------------------------------
def transformer_model_forward(x, kp):
    B, S, in_size = x.shape
    nhead = kp["nhead"]
    num_layers = kp["num_layers"]
    in_pad = kp["w_in"].shape[0]
    out_pad = kp["w_out"].shape[1]

    # pad the ragged input-feature axis only to a sublane multiple (w_in rows
    # for the pad are zero, so the pad contributes nothing).
    x_pad = jnp.pad(x, ((0, 0), (0, 0), (0, in_pad - in_size)))
    pe = kp["pe"][:S]                                  # (S, H), NOT tiled by B

    weights = [kp["w_in"], kp["b_in"], pe,
               kp["wqkv"], kp["bqkv"], kp["wo"], kp["bo"],
               kp["g1"], kp["bt1"], kp["w1"], kp["bb1"],
               kp["w2"], kp["bb2"], kp["g2"], kp["bt2"],
               kp["w_out"], kp["b_out"]]

    def const_spec(a):
        # full-array block, constant index map => weight stays VMEM-resident.
        return pl.BlockSpec(a.shape, lambda b, _nd=a.ndim: (0,) * _nd)

    in_specs = ([pl.BlockSpec((None, S, in_pad), lambda b: (b, 0, 0))]
                + [const_spec(a) for a in weights])
    out_spec = pl.BlockSpec((None, S, out_pad), lambda b: (b, 0, 0))

    # explicit VMEM budget: all operands resident once + headroom.
    total_bytes = (x_pad.size * x_pad.dtype.itemsize + B * S * out_pad * 4
                   + sum(a.size * a.dtype.itemsize for a in weights))
    vmem_limit = int(min(64 * 2**20, 2 * total_bytes + 8 * 2**20))

    kernel = functools.partial(fused_transformer_kernel, nhead, num_layers)
    out = pl.pallas_call(
        kernel,
        grid=(B,),
        in_specs=in_specs,
        out_specs=out_spec,
        out_shape=jax.ShapeDtypeStruct((B, S, out_pad), jnp.float32),
        compiler_params=pltpu.CompilerParams(
            dimension_semantics=("parallel",),      # megacore split on v7x
            vmem_limit_bytes=vmem_limit),
    )(x_pad, *weights)
    return out[:, :, :kp["output_size"]]


# --------------------------------------------------------------------------
# parameter construction (PyTorch layout) + host-side kernel prep
# --------------------------------------------------------------------------
def make_torch_params(key, input_size, hidden_size, num_layers, output_size):
    """Synthetic parameters in PyTorch layout (eval-mode BN running stats)."""
    H = hidden_size

    def nrm(k, shape, s=0.05):
        return jax.random.normal(k, shape, jnp.float32) * s

    keys = iter(jax.random.split(key, 16 * (num_layers + 4)))
    p = {}
    p["bn1"] = dict(gamma=1.0 + nrm(next(keys), (input_size,)),
                    beta=nrm(next(keys), (input_size,)),
                    mean=nrm(next(keys), (input_size,)),
                    var=1.0 + jnp.abs(nrm(next(keys), (input_size,))))
    p["input_proj"] = dict(w=nrm(next(keys), (H, input_size), 0.1),
                           b=nrm(next(keys), (H,)))
    layers = []
    for _ in range(num_layers):
        layers.append(dict(
            in_proj_w=nrm(next(keys), (3 * H, H), 0.1),
            in_proj_b=nrm(next(keys), (3 * H,)),
            out_proj_w=nrm(next(keys), (H, H), 0.1),
            out_proj_b=nrm(next(keys), (H,)),
            ln1_g=1.0 + nrm(next(keys), (H,)),
            ln1_b=nrm(next(keys), (H,)),
            ff1_w=nrm(next(keys), (4 * H, H), 0.1),
            ff1_b=nrm(next(keys), (4 * H,)),
            ff2_w=nrm(next(keys), (H, 4 * H), 0.1),
            ff2_b=nrm(next(keys), (H,)),
            ln2_g=1.0 + nrm(next(keys), (H,)),
            ln2_b=nrm(next(keys), (H,)),
        ))
    p["layers"] = layers
    p["bn2"] = dict(gamma=1.0 + nrm(next(keys), (H,)),
                    beta=nrm(next(keys), (H,)),
                    mean=nrm(next(keys), (H,)),
                    var=1.0 + jnp.abs(nrm(next(keys), (H,))))
    p["output_proj"] = dict(w=nrm(next(keys), (output_size, H), 0.1),
                            b=nrm(next(keys), (output_size,)))
    return p


def prepare_kernel_params(p, nhead, max_len=5000, compute_dtype=jnp.float32):
    """Fold eval-mode BN into adjacent linears, pre-transpose & head-split the
    attention weights (so heads land on a leading batch axis in-kernel), fold
    the 1/sqrt(head_dim) scale into Q, pad feature axes, and stack per-layer
    weights along a leading layer axis."""
    H = p["input_proj"]["w"].shape[0]
    input_size = p["input_proj"]["w"].shape[1]
    output_size = p["output_proj"]["w"].shape[0]
    hd = H // nhead
    eps = 1e-5

    def fold_bn(bn):
        scale = bn["gamma"] / jnp.sqrt(bn["var"] + eps)
        shift = bn["beta"] - bn["mean"] * scale
        return scale, shift

    in_pad = _round_up(input_size, SUBLANE)     # sublane multiple is enough
    out_pad = _round_up(output_size, LANE)      # keep lane-dense output stores

    # BatchNorm1d(input) folded into input_proj; pre-transposed & padded.
    s1, t1 = fold_bn(p["bn1"])
    w_in_t = p["input_proj"]["w"].T * s1[:, None]                     # (In, H)
    b_in = (t1 @ p["input_proj"]["w"].T + p["input_proj"]["b"])[None, :]
    w_in_t = jnp.zeros((in_pad, H), jnp.float32).at[:input_size].set(w_in_t)

    # positional encoding table.
    pos = jnp.arange(max_len, dtype=jnp.float32)[:, None]
    div = jnp.exp(jnp.arange(0, H, 2, dtype=jnp.float32)
                  * (-math.log(10000.0) / H))
    pe = jnp.zeros((max_len, H), jnp.float32)
    pe = pe.at[:, 0::2].set(jnp.sin(pos * div))
    pe = pe.at[:, 1::2].set(jnp.cos(pos * div))

    def split_heads_cols(w_t):                  # (H, H) -> (nhead, H, hd)
        return w_t.reshape(H, nhead, hd).transpose(1, 0, 2)

    def prep_layer(l):
        scale = 1.0 / math.sqrt(hd)
        wq_t = l["in_proj_w"][:H].T * scale          # fold attention scale
        wk_t = l["in_proj_w"][H:2 * H].T
        wv_t = l["in_proj_w"][2 * H:].T
        wqkv = jnp.concatenate([split_heads_cols(wq_t),
                                split_heads_cols(wk_t),
                                split_heads_cols(wv_t)], axis=0)  # (3nh, H, hd)
        bq = l["in_proj_b"][:H] * scale
        bk = l["in_proj_b"][H:2 * H]
        bv = l["in_proj_b"][2 * H:]
        bqkv = jnp.concatenate([bq.reshape(nhead, 1, hd),
                                bk.reshape(nhead, 1, hd),
                                bv.reshape(nhead, 1, hd)], axis=0)  # (3nh,1,hd)
        wo = l["out_proj_w"].T.reshape(nhead, hd, H)                # (nh,hd,H)
        return dict(
            wqkv=wqkv, bqkv=bqkv,
            wo=wo, bo=l["out_proj_b"][None, :],
            g1=l["ln1_g"][None, :], bt1=l["ln1_b"][None, :],
            w1=l["ff1_w"].T, bb1=l["ff1_b"][None, :],
            w2=l["ff2_w"].T, bb2=l["ff2_b"][None, :],
            g2=l["ln2_g"][None, :], bt2=l["ln2_b"][None, :],
        )

    prepped = [prep_layer(l) for l in p["layers"]]

    def stack(name):
        return jnp.stack([lp[name] for lp in prepped], axis=0)

    # BatchNorm1d(hidden) folded into output_proj; pre-transposed, lane-padded.
    s2, t2 = fold_bn(p["bn2"])
    w_out_t = p["output_proj"]["w"].T * s2[:, None]                    # (H, O)
    b_out = (t2 @ p["output_proj"]["w"].T + p["output_proj"]["b"])[None, :]
    w_out_p = jnp.zeros((H, out_pad), jnp.float32).at[:, :output_size].set(w_out_t)
    b_out_p = jnp.zeros((1, out_pad), jnp.float32).at[:, :output_size].set(b_out)

    cd = compute_dtype  # bf16 recommended on v6e/v7x MXU; f32 matches PyTorch.
    return dict(
        nhead=nhead, num_layers=len(p["layers"]),
        input_size=input_size, output_size=output_size,
        w_in=w_in_t.astype(cd), b_in=b_in, pe=pe,
        wqkv=stack("wqkv").astype(cd), bqkv=stack("bqkv"),
        wo=stack("wo").astype(cd), bo=stack("bo"),
        g1=stack("g1"), bt1=stack("bt1"),
        w1=stack("w1").astype(cd), bb1=stack("bb1"),
        w2=stack("w2").astype(cd), bb2=stack("bb2"),
        g2=stack("g2"), bt2=stack("bt2"),
        w_out=w_out_p.astype(cd), b_out=b_out_p,
    )


# --------------------------------------------------------------------------
if __name__ == "__main__":
    B, S = 2, 8
    input_size, hidden_size, num_layers, output_size, nhead = 4, 32, 2, 4, 8

    key = jax.random.PRNGKey(0)
    kx, kparams_key = jax.random.split(key)
    x = jax.random.normal(kx, (B, S, input_size), jnp.float32)

    torch_params = make_torch_params(kparams_key, input_size, hidden_size,
                                     num_layers, output_size)
    # compute_dtype=jnp.bfloat16 is the recommended setting on v6e/v7x (MXU
    # peak, half the weight bytes); f32 keeps parity with the PyTorch reference.
    kparams = prepare_kernel_params(torch_params, nhead, max_len=5000,
                                    compute_dtype=jnp.float32)

    out = transformer_model_forward(x, kparams)
    out = jax.block_until_ready(out)
    assert out.shape == (B, S, output_size), out.shape
    print("KERNEL_OK")
</pallas_src>

<mosaic_0001>
module attributes {stable_mosaic.version = 11 : i64} {
  func.func @fused_transformer_kernel(%arg0: i32, %arg1: memref<1x8x8xf32, #tpu.memory_space<vmem>>, %arg2: memref<8x32xf32, #tpu.memory_space<vmem>>, %arg3: memref<1x32xf32, #tpu.memory_space<vmem>>, %arg4: memref<8x32xf32, #tpu.memory_space<vmem>>, %arg5: memref<2x24x32x4xf32, #tpu.memory_space<vmem>>, %arg6: memref<2x24x1x4xf32, #tpu.memory_space<vmem>>, %arg7: memref<2x8x4x32xf32, #tpu.memory_space<vmem>>, %arg8: memref<2x1x32xf32, #tpu.memory_space<vmem>>, %arg9: memref<2x1x32xf32, #tpu.memory_space<vmem>>, %arg10: memref<2x1x32xf32, #tpu.memory_space<vmem>>, %arg11: memref<2x32x128xf32, #tpu.memory_space<vmem>>, %arg12: memref<2x1x128xf32, #tpu.memory_space<vmem>>, %arg13: memref<2x128x32xf32, #tpu.memory_space<vmem>>, %arg14: memref<2x1x32xf32, #tpu.memory_space<vmem>>, %arg15: memref<2x1x32xf32, #tpu.memory_space<vmem>>, %arg16: memref<2x1x32xf32, #tpu.memory_space<vmem>>, %arg17: memref<32x128xf32, #tpu.memory_space<vmem>>, %arg18: memref<1x128xf32, #tpu.memory_space<vmem>>, %arg19: memref<1x8x128xf32, #tpu.memory_space<vmem>>) attributes {dimension_semantics = [#tpu.dimension_semantics<parallel>], iteration_bounds = array<i64: 2>, scalar_prefetch = 0 : i64, scratch_operands = 0 : i64, tpu.core_type = #tpu.core_type<tc>, window_params = [{transform_indices = @transform_0, window_bounds = array<i64: 1, 8, 8>}, {pipeline_mode = #tpu.pipeline_mode<synchronous>, transform_indices = @transform_1, window_bounds = array<i64: 8, 32>}, {pipeline_mode = #tpu.pipeline_mode<synchronous>, transform_indices = @transform_2, window_bounds = array<i64: 1, 32>}, {pipeline_mode = #tpu.pipeline_mode<synchronous>, transform_indices = @transform_3, window_bounds = array<i64: 8, 32>}, {pipeline_mode = #tpu.pipeline_mode<synchronous>, transform_indices = @transform_4, window_bounds = array<i64: 2, 24, 32, 4>}, {pipeline_mode = #tpu.pipeline_mode<synchronous>, transform_indices = @transform_5, window_bounds = array<i64: 2, 24, 1, 4>}, {pipeline_mode = #tpu.pipeline_mode<synchronous>, transform_indices = @transform_6, window_bounds = array<i64: 2, 8, 4, 32>}, {pipeline_mode = #tpu.pipeline_mode<synchronous>, transform_indices = @transform_7, window_bounds = array<i64: 2, 1, 32>}, {pipeline_mode = #tpu.pipeline_mode<synchronous>, transform_indices = @transform_8, window_bounds = array<i64: 2, 1, 32>}, {pipeline_mode = #tpu.pipeline_mode<synchronous>, transform_indices = @transform_9, window_bounds = array<i64: 2, 1, 32>}, {pipeline_mode = #tpu.pipeline_mode<synchronous>, transform_indices = @transform_10, window_bounds = array<i64: 2, 32, 128>}, {pipeline_mode = #tpu.pipeline_mode<synchronous>, transform_indices = @transform_11, window_bounds = array<i64: 2, 1, 128>}, {pipeline_mode = #tpu.pipeline_mode<synchronous>, transform_indices = @transform_12, window_bounds = array<i64: 2, 128, 32>}, {pipeline_mode = #tpu.pipeline_mode<synchronous>, transform_indices = @transform_13, window_bounds = array<i64: 2, 1, 32>}, {pipeline_mode = #tpu.pipeline_mode<synchronous>, transform_indices = @transform_14, window_bounds = array<i64: 2, 1, 32>}, {pipeline_mode = #tpu.pipeline_mode<synchronous>, transform_indices = @transform_15, window_bounds = array<i64: 2, 1, 32>}, {pipeline_mode = #tpu.pipeline_mode<synchronous>, transform_indices = @transform_16, window_bounds = array<i64: 32, 128>}, {pipeline_mode = #tpu.pipeline_mode<synchronous>, transform_indices = @transform_17, window_bounds = array<i64: 1, 128>}, {transform_indices = @transform_18, window_bounds = array<i64: 1, 8, 128>}]} {
    %c0 = arith.constant 0 : index
    %c0_0 = arith.constant 0 : index
    %c0_1 = arith.constant 0 : index
    %0 = vector.load %arg1[%c0, %c0_0, %c0_1] : memref<1x8x8xf32, #tpu.memory_space<vmem>>, vector<1x8x8xf32>
    %1 = vector.shape_cast %0 : vector<1x8x8xf32> to vector<8x8xf32>
    %c0_2 = arith.constant 0 : index
    %c0_3 = arith.constant 0 : index
    %2 = vector.load %arg2[%c0_2, %c0_3] : memref<8x32xf32, #tpu.memory_space<vmem>>, vector<8x32xf32>
    %cst = arith.constant dense<0.000000e+00> : vector<8x32xf32>
    %3 = tpu.matmul %1, %2, %cst {dimension_numbers = #tpu.dot_dimension_numbers<[1], [0], [0], [1], [0, 0, 1, 1], [], []>} : vector<8x8xf32>, vector<8x32xf32>, vector<8x32xf32> -> vector<8x32xf32>
    %c0_4 = arith.constant 0 : index
    %c0_5 = arith.constant 0 : index
    %4 = vector.load %arg3[%c0_4, %c0_5] : memref<1x32xf32, #tpu.memory_space<vmem>>, vector<1x32xf32>
    %5 = vector.broadcast %4 : vector<1x32xf32> to vector<8x32xf32>
    %6 = arith.addf %3, %5 : vector<8x32xf32>
    %c0_6 = arith.constant 0 : index
    %c0_7 = arith.constant 0 : index
    %7 = vector.load %arg4[%c0_6, %c0_7] : memref<8x32xf32, #tpu.memory_space<vmem>>, vector<8x32xf32>
    %8 = arith.addf %6, %7 : vector<8x32xf32>
    %9 = vector.shape_cast %8 : vector<8x32xf32> to vector<1x8x32xf32>
    %10 = vector.shape_cast %9 : vector<1x8x32xf32> to vector<1x8x32xf32>
    %11 = vector.broadcast %10 : vector<1x8x32xf32> to vector<24x8x32xf32>
    %c0_8 = arith.constant 0 : index
    %c0_9 = arith.constant 0 : index
    %c0_10 = arith.constant 0 : index
    %c0_11 = arith.constant 0 : index
    %12 = vector.load %arg5[%c0_8, %c0_9, %c0_10, %c0_11] : memref<2x24x32x4xf32, #tpu.memory_space<vmem>>, vector<1x24x32x4xf32>
    %13 = vector.shape_cast %12 : vector<1x24x32x4xf32> to vector<24x32x4xf32>
    "tpu.trace_start"() <{level = 10 : i32, message = "htd,hdk->htk"}> : () -> ()
    %cst_12 = arith.constant dense<0.000000e+00> : vector<24x8x4xf32>
    %14 = tpu.matmul %11, %13, %cst_12 {dimension_numbers = #tpu.dot_dimension_numbers<[2], [1], [1], [2], [0, 0, 0, 1, 1, 2], [0], [0]>} : vector<24x8x32xf32>, vector<24x32x4xf32>, vector<24x8x4xf32> -> vector<24x8x4xf32>
    "tpu.trace_stop"() : () -> ()
    %c0_13 = arith.constant 0 : index
    %c0_14 = arith.constant 0 : index
    %c0_15 = arith.constant 0 : index
    %c0_16 = arith.constant 0 : index
    %15 = vector.load %arg6[%c0_13, %c0_14, %c0_15, %c0_16] : memref<2x24x1x4xf32, #tpu.memory_space<vmem>>, vector<1x24x1x4xf32>
    %16 = vector.shape_cast %15 : vector<1x24x1x4xf32> to vector<24x1x4xf32>
    %17 = vector.broadcast %16 : vector<24x1x4xf32> to vector<24x8x4xf32>
    %18 = arith.addf %14, %17 : vector<24x8x4xf32>
    %19 = vector.extract_strided_slice %18 {offsets = [0, 0, 0], sizes = [8, 8, 4], strides = [1, 1, 1]} : vector<24x8x4xf32> to vector<8x8x4xf32>
    %20 = vector.extract_strided_slice %18 {offsets = [8, 0, 0], sizes = [8, 8, 4], strides = [1, 1, 1]} : vector<24x8x4xf32> to vector<8x8x4xf32>
    %21 = vector.extract_strided_slice %18 {offsets = [16, 0, 0], sizes = [8, 8, 4], strides = [1, 1, 1]} : vector<24x8x4xf32> to vector<8x8x4xf32>
    "tpu.trace_start"() <{level = 10 : i32, message = "hqd,hkd->hqk"}> : () -> ()
    %cst_17 = arith.constant dense<0.000000e+00> : vector<8x8x8xf32>
    %22 = tpu.matmul %19, %20, %cst_17 {dimension_numbers = #tpu.dot_dimension_numbers<[2], [2], [1], [1], [0, 0, 0, 1, 1, 1], [0], [0]>} : vector<8x8x4xf32>, vector<8x8x4xf32>, vector<8x8x8xf32> -> vector<8x8x8xf32>
    "tpu.trace_stop"() : () -> ()
    %cst_18 = arith.constant dense<0xFF800000> : vector<8x8xf32>
    %23 = vector.multi_reduction <maximumf>, %22, %cst_18 [2] : vector<8x8x8xf32> to vector<8x8xf32>
    %24 = vector.shape_cast %23 : vector<8x8xf32> to vector<8x8x1xf32>
    %25 = vector.broadcast %24 : vector<8x8x1xf32> to vector<8x8x8xf32>
    %26 = arith.subf %22, %25 : vector<8x8x8xf32>
    %27 = math.exp %26 : vector<8x8x8xf32>
    %cst_19 = arith.constant dense<0.000000e+00> : vector<8x8xf32>
    %28 = vector.multi_reduction <add>, %27, %cst_19 [2] : vector<8x8x8xf32> to vector<8x8xf32>
    %29 = vector.shape_cast %28 : vector<8x8xf32> to vector<8x8x1xf32>
    %30 = tpu.reciprocal %29 : vector<8x8x1xf32> -> vector<8x8x1xf32>
    %31 = vector.broadcast %30 : vector<8x8x1xf32> to vector<8x8x8xf32>
    %32 = arith.mulf %27, %31 : vector<8x8x8xf32>
    "tpu.trace_start"() <{level = 10 : i32, message = "hqk,hkd->hqd"}> : () -> ()
    %cst_20 = arith.constant dense<0.000000e+00> : vector<8x8x4xf32>
    %33 = tpu.matmul %32, %21, %cst_20 {dimension_numbers = #tpu.dot_dimension_numbers<[2], [1], [1], [2], [0, 0, 0, 1, 1, 2], [0], [0]>} : vector<8x8x8xf32>, vector<8x8x4xf32>, vector<8x8x4xf32> -> vector<8x8x4xf32>
    "tpu.trace_stop"() : () -> ()
    %c0_21 = arith.constant 0 : index
    %c0_22 = arith.constant 0 : index
    %c0_23 = arith.constant 0 : index
    %c0_24 = arith.constant 0 : index
    %34 = vector.load %arg7[%c0_21, %c0_22, %c0_23, %c0_24] : memref<2x8x4x32xf32, #tpu.memory_space<vmem>>, vector<1x8x4x32xf32>
    %35 = vector.shape_cast %34 : vector<1x8x4x32xf32> to vector<8x4x32xf32>
    "tpu.trace_start"() <{level = 10 : i32, message = "hsd,hdk->hsk"}> : () -> ()
    %cst_25 = arith.constant dense<0.000000e+00> : vector<8x8x32xf32>
    %36 = tpu.matmul %33, %35, %cst_25 {dimension_numbers = #tpu.dot_dimension_numbers<[2], [1], [1], [2], [0, 0, 0, 1, 1, 2], [0], [0]>} : vector<8x8x4xf32>, vector<8x4x32xf32>, vector<8x8x32xf32> -> vector<8x8x32xf32>
    "tpu.trace_stop"() : () -> ()
    %cst_26 = arith.constant dense<0.000000e+00> : vector<8x32xf32>
    %37 = vector.multi_reduction <add>, %36, %cst_26 [0] : vector<8x8x32xf32> to vector<8x32xf32>
    %c0_27 = arith.constant 0 : index
    %c0_28 = arith.constant 0 : index
    %c0_29 = arith.constant 0 : index
    %38 = vector.load %arg8[%c0_27, %c0_28, %c0_29] : memref<2x1x32xf32, #tpu.memory_space<vmem>>, vector<1x1x32xf32>
    %39 = vector.shape_cast %38 : vector<1x1x32xf32> to vector<1x32xf32>
    %40 = vector.broadcast %39 : vector<1x32xf32> to vector<8x32xf32>
    %41 = arith.addf %37, %40 : vector<8x32xf32>
    %42 = arith.addf %8, %41 : vector<8x32xf32>
    %c0_30 = arith.constant 0 : index
    %c0_31 = arith.constant 0 : index
    %c0_32 = arith.constant 0 : index
    %43 = vector.load %arg9[%c0_30, %c0_31, %c0_32] : memref<2x1x32xf32, #tpu.memory_space<vmem>>, vector<1x1x32xf32>
    %44 = vector.shape_cast %43 : vector<1x1x32xf32> to vector<1x32xf32>
    %c0_33 = arith.constant 0 : index
    %c0_34 = arith.constant 0 : index
    %c0_35 = arith.constant 0 : index
    %45 = vector.load %arg10[%c0_33, %c0_34, %c0_35] : memref<2x1x32xf32, #tpu.memory_space<vmem>>, vector<1x1x32xf32>
    %46 = vector.shape_cast %45 : vector<1x1x32xf32> to vector<1x32xf32>
    %cst_36 = arith.constant dense<0.000000e+00> : vector<8xf32>
    %47 = vector.multi_reduction <add>, %42, %cst_36 [1] : vector<8x32xf32> to vector<8xf32>
    %48 = vector.shape_cast %47 : vector<8xf32> to vector<8x1xf32>
    %cst_37 = arith.constant 3.200000e+01 : f32
    %49 = vector.broadcast %cst_37 : f32 to vector<8x1xf32>
    %50 = arith.divf %48, %49 : vector<8x1xf32>
    %51 = vector.broadcast %50 : vector<8x1xf32> to vector<8x32xf32>
    %52 = arith.subf %42, %51 : vector<8x32xf32>
    %53 = arith.mulf %52, %52 : vector<8x32xf32>
    %cst_38 = arith.constant dense<0.000000e+00> : vector<8xf32>
    %54 = vector.multi_reduction <add>, %53, %cst_38 [1] : vector<8x32xf32> to vector<8xf32>
    %55 = vector.shape_cast %54 : vector<8xf32> to vector<8x1xf32>
    %cst_39 = arith.constant 3.200000e+01 : f32
    %56 = vector.broadcast %cst_39 : f32 to vector<8x1xf32>
    %57 = arith.divf %55, %56 : vector<8x1xf32>
    %58 = vector.broadcast %50 : vector<8x1xf32> to vector<8x32xf32>
    %59 = arith.subf %42, %58 : vector<8x32xf32>
    %cst_40 = arith.constant 9.99999974E-6 : f32
    %60 = vector.broadcast %cst_40 : f32 to vector<8x1xf32>
    %61 = arith.addf %57, %60 : vector<8x1xf32>
    %62 = math.rsqrt %61 : vector<8x1xf32>
    %63 = vector.broadcast %62 : vector<8x1xf32> to vector<8x32xf32>
    %64 = arith.mulf %59, %63 : vector<8x32xf32>
    %65 = vector.broadcast %44 : vector<1x32xf32> to vector<8x32xf32>
    %66 = arith.mulf %64, %65 : vector<8x32xf32>
    %67 = vector.broadcast %46 : vector<1x32xf32> to vector<8x32xf32>
    %68 = arith.addf %66, %67 : vector<8x32xf32>
    %c0_41 = arith.constant 0 : index
    %c0_42 = arith.constant 0 : index
    %c0_43 = arith.constant 0 : index
    %69 = vector.load %arg11[%c0_41, %c0_42, %c0_43] : memref<2x32x128xf32, #tpu.memory_space<vmem>>, vector<1x32x128xf32>
    %70 = vector.shape_cast %69 : vector<1x32x128xf32> to vector<32x128xf32>
    %cst_44 = arith.constant dense<0.000000e+00> : vector<8x128xf32>
    %71 = tpu.matmul %68, %70, %cst_44 {dimension_numbers = #tpu.dot_dimension_numbers<[1], [0], [0], [1], [0, 0, 1, 1], [], []>} : vector<8x32xf32>, vector<32x128xf32>, vector<8x128xf32> -> vector<8x128xf32>
    %c0_45 = arith.constant 0 : index
    %c0_46 = arith.constant 0 : index
    %c0_47 = arith.constant 0 : index
    %72 = vector.load %arg12[%c0_45, %c0_46, %c0_47] : memref<2x1x128xf32, #tpu.memory_space<vmem>>, vector<1x1x128xf32>
    %73 = vector.shape_cast %72 : vector<1x1x128xf32> to vector<1x128xf32>
    %74 = vector.broadcast %73 : vector<1x128xf32> to vector<8x128xf32>
    %75 = arith.addf %71, %74 : vector<8x128xf32>
    %cst_48 = arith.constant 0.000000e+00 : f32
    %76 = vector.broadcast %cst_48 : f32 to vector<8x128xf32>
    %77 = arith.maximumf %75, %76 : vector<8x128xf32>
    %c0_49 = arith.constant 0 : index
    %c0_50 = arith.constant 0 : index
    %c0_51 = arith.constant 0 : index
    %78 = vector.load %arg13[%c0_49, %c0_50, %c0_51] : memref<2x128x32xf32, #tpu.memory_space<vmem>>, vector<1x128x32xf32>
    %79 = vector.shape_cast %78 : vector<1x128x32xf32> to vector<128x32xf32>
    %cst_52 = arith.constant dense<0.000000e+00> : vector<8x32xf32>
    %80 = tpu.matmul %77, %79, %cst_52 {dimension_numbers = #tpu.dot_dimension_numbers<[1], [0], [0], [1], [0, 0, 1, 1], [], []>} : vector<8x128xf32>, vector<128x32xf32>, vector<8x32xf32> -> vector<8x32xf32>
    %c0_53 = arith.constant 0 : index
    %c0_54 = arith.constant 0 : index
    %c0_55 = arith.constant 0 : index
    %81 = vector.load %arg14[%c0_53, %c0_54, %c0_55] : memref<2x1x32xf32, #tpu.memory_space<vmem>>, vector<1x1x32xf32>
    %82 = vector.shape_cast %81 : vector<1x1x32xf32> to vector<1x32xf32>
    %83 = vector.broadcast %82 : vector<1x32xf32> to vector<8x32xf32>
    %84 = arith.addf %80, %83 : vector<8x32xf32>
    %85 = arith.addf %68, %84 : vector<8x32xf32>
    %c0_56 = arith.constant 0 : index
    %c0_57 = arith.constant 0 : index
    %c0_58 = arith.constant 0 : index
    %86 = vector.load %arg15[%c0_56, %c0_57, %c0_58] : memref<2x1x32xf32, #tpu.memory_space<vmem>>, vector<1x1x32xf32>
    %87 = vector.shape_cast %86 : vector<1x1x32xf32> to vector<1x32xf32>
    %c0_59 = arith.constant 0 : index
    %c0_60 = arith.constant 0 : index
    %c0_61 = arith.constant 0 : index
    %88 = vector.load %arg16[%c0_59, %c0_60, %c0_61] : memref<2x1x32xf32, #tpu.memory_space<vmem>>, vector<1x1x32xf32>
    %89 = vector.shape_cast %88 : vector<1x1x32xf32> to vector<1x32xf32>
    %cst_62 = arith.constant dense<0.000000e+00> : vector<8xf32>
    %90 = vector.multi_reduction <add>, %85, %cst_62 [1] : vector<8x32xf32> to vector<8xf32>
    %91 = vector.shape_cast %90 : vector<8xf32> to vector<8x1xf32>
    %cst_63 = arith.constant 3.200000e+01 : f32
    %92 = vector.broadcast %cst_63 : f32 to vector<8x1xf32>
    %93 = arith.divf %91, %92 : vector<8x1xf32>
    %94 = vector.broadcast %93 : vector<8x1xf32> to vector<8x32xf32>
    %95 = arith.subf %85, %94 : vector<8x32xf32>
    %96 = arith.mulf %95, %95 : vector<8x32xf32>
    %cst_64 = arith.constant dense<0.000000e+00> : vector<8xf32>
    %97 = vector.multi_reduction <add>, %96, %cst_64 [1] : vector<8x32xf32> to vector<8xf32>
    %98 = vector.shape_cast %97 : vector<8xf32> to vector<8x1xf32>
    %cst_65 = arith.constant 3.200000e+01 : f32
    %99 = vector.broadcast %cst_65 : f32 to vector<8x1xf32>
    %100 = arith.divf %98, %99 : vector<8x1xf32>
    %101 = vector.broadcast %93 : vector<8x1xf32> to vector<8x32xf32>
    %102 = arith.subf %85, %101 : vector<8x32xf32>
    %cst_66 = arith.constant 9.99999974E-6 : f32
    %103 = vector.broadcast %cst_66 : f32 to vector<8x1xf32>
    %104 = arith.addf %100, %103 : vector<8x1xf32>
    %105 = math.rsqrt %104 : vector<8x1xf32>
    %106 = vector.broadcast %105 : vector<8x1xf32> to vector<8x32xf32>
    %107 = arith.mulf %102, %106 : vector<8x32xf32>
    %108 = vector.broadcast %87 : vector<1x32xf32> to vector<8x32xf32>
    %109 = arith.mulf %107, %108 : vector<8x32xf32>
    %110 = vector.broadcast %89 : vector<1x32xf32> to vector<8x32xf32>
    %111 = arith.addf %109, %110 : vector<8x32xf32>
    %112 = vector.shape_cast %111 : vector<8x32xf32> to vector<1x8x32xf32>
    %113 = vector.shape_cast %112 : vector<1x8x32xf32> to vector<1x8x32xf32>
    %114 = vector.broadcast %113 : vector<1x8x32xf32> to vector<24x8x32xf32>
    %c1 = arith.constant 1 : index
    %c0_67 = arith.constant 0 : index
    %c0_68 = arith.constant 0 : index
    %c0_69 = arith.constant 0 : index
    %115 = vector.load %arg5[%c1, %c0_67, %c0_68, %c0_69] : memref<2x24x32x4xf32, #tpu.memory_space<vmem>>, vector<1x24x32x4xf32>
    %116 = vector.shape_cast %115 : vector<1x24x32x4xf32> to vector<24x32x4xf32>
    "tpu.trace_start"() <{level = 10 : i32, message = "htd,hdk->htk"}> : () -> ()
    %cst_70 = arith.constant dense<0.000000e+00> : vector<24x8x4xf32>
    %117 = tpu.matmul %114, %116, %cst_70 {dimension_numbers = #tpu.dot_dimension_numbers<[2], [1], [1], [2], [0, 0, 0, 1, 1, 2], [0], [0]>} : vector<24x8x32xf32>, vector<24x32x4xf32>, vector<24x8x4xf32> -> vector<24x8x4xf32>
    "tpu.trace_stop"() : () -> ()
    %c1_71 = arith.constant 1 : index
    %c0_72 = arith.constant 0 : index
    %c0_73 = arith.constant 0 : index
    %c0_74 = arith.constant 0 : index
    %118 = vector.load %arg6[%c1_71, %c0_72, %c0_73, %c0_74] : memref<2x24x1x4xf32, #tpu.memory_space<vmem>>, vector<1x24x1x4xf32>
    %119 = vector.shape_cast %118 : vector<1x24x1x4xf32> to vector<24x1x4xf32>
    %120 = vector.broadcast %119 : vector<24x1x4xf32> to vector<24x8x4xf32>
    %121 = arith.addf %117, %120 : vector<24x8x4xf32>
    %122 = vector.extract_strided_slice %121 {offsets = [0, 0, 0], sizes = [8, 8, 4], strides = [1, 1, 1]} : vector<24x8x4xf32> to vector<8x8x4xf32>
    %123 = vector.extract_strided_slice %121 {offsets = [8, 0, 0], sizes = [8, 8, 4], strides = [1, 1, 1]} : vector<24x8x4xf32> to vector<8x8x4xf32>
    %124 = vector.extract_strided_slice %121 {offsets = [16, 0, 0], sizes = [8, 8, 4], strides = [1, 1, 1]} : vector<24x8x4xf32> to vector<8x8x4xf32>
    "tpu.trace_start"() <{level = 10 : i32, message = "hqd,hkd->hqk"}> : () -> ()
    %cst_75 = arith.constant dense<0.000000e+00> : vector<8x8x8xf32>
    %125 = tpu.matmul %122, %123, %cst_75 {dimension_numbers = #tpu.dot_dimension_numbers<[2], [2], [1], [1], [0, 0, 0, 1, 1, 1], [0], [0]>} : vector<8x8x4xf32>, vector<8x8x4xf32>, vector<8x8x8xf32> -> vector<8x8x8xf32>
    "tpu.trace_stop"() : () -> ()
    %cst_76 = arith.constant dense<0xFF800000> : vector<8x8xf32>
    %126 = vector.multi_reduction <maximumf>, %125, %cst_76 [2] : vector<8x8x8xf32> to vector<8x8xf32>
    %127 = vector.shape_cast %126 : vector<8x8xf32> to vector<8x8x1xf32>
    %128 = vector.broadcast %127 : vector<8x8x1xf32> to vector<8x8x8xf32>
    %129 = arith.subf %125, %128 : vector<8x8x8xf32>
    %130 = math.exp %129 : vector<8x8x8xf32>
    %cst_77 = arith.constant dense<0.000000e+00> : vector<8x8xf32>
    %131 = vector.multi_reduction <add>, %130, %cst_77 [2] : vector<8x8x8xf32> to vector<8x8xf32>
    %132 = vector.shape_cast %131 : vector<8x8xf32> to vector<8x8x1xf32>
    %133 = tpu.reciprocal %132 : vector<8x8x1xf32> -> vector<8x8x1xf32>
    %134 = vector.broadcast %133 : vector<8x8x1xf32> to vector<8x8x8xf32>
    %135 = arith.mulf %130, %134 : vector<8x8x8xf32>
    "tpu.trace_start"() <{level = 10 : i32, message = "hqk,hkd->hqd"}> : () -> ()
    %cst_78 = arith.constant dense<0.000000e+00> : vector<8x8x4xf32>
    %136 = tpu.matmul %135, %124, %cst_78 {dimension_numbers = #tpu.dot_dimension_numbers<[2], [1], [1], [2], [0, 0, 0, 1, 1, 2], [0], [0]>} : vector<8x8x8xf32>, vector<8x8x4xf32>, vector<8x8x4xf32> -> vector<8x8x4xf32>
    "tpu.trace_stop"() : () -> ()
    %c1_79 = arith.constant 1 : index
    %c0_80 = arith.constant 0 : index
    %c0_81 = arith.constant 0 : index
    %c0_82 = arith.constant 0 : index
    %137 = vector.load %arg7[%c1_79, %c0_80, %c0_81, %c0_82] : memref<2x8x4x32xf32, #tpu.memory_space<vmem>>, vector<1x8x4x32xf32>
    %138 = vector.shape_cast %137 : vector<1x8x4x32xf32> to vector<8x4x32xf32>
    "tpu.trace_start"() <{level = 10 : i32, message = "hsd,hdk->hsk"}> : () -> ()
    %cst_83 = arith.constant dense<0.000000e+00> : vector<8x8x32xf32>
    %139 = tpu.matmul %136, %138, %cst_83 {dimension_numbers = #tpu.dot_dimension_numbers<[2], [1], [1], [2], [0, 0, 0, 1, 1, 2], [0], [0]>} : vector<8x8x4xf32>, vector<8x4x32xf32>, vector<8x8x32xf32> -> vector<8x8x32xf32>
    "tpu.trace_stop"() : () -> ()
    %cst_84 = arith.constant dense<0.000000e+00> : vector<8x32xf32>
    %140 = vector.multi_reduction <add>, %139, %cst_84 [0] : vector<8x8x32xf32> to vector<8x32xf32>
    %c1_85 = arith.constant 1 : index
    %c0_86 = arith.constant 0 : index
    %c0_87 = arith.constant 0 : index
    %141 = vector.load %arg8[%c1_85, %c0_86, %c0_87] : memref<2x1x32xf32, #tpu.memory_space<vmem>>, vector<1x1x32xf32>
    %142 = vector.shape_cast %141 : vector<1x1x32xf32> to vector<1x32xf32>
    %143 = vector.broadcast %142 : vector<1x32xf32> to vector<8x32xf32>
    %144 = arith.addf %140, %143 : vector<8x32xf32>
    %145 = arith.addf %111, %144 : vector<8x32xf32>
    %c1_88 = arith.constant 1 : index
    %c0_89 = arith.constant 0 : index
    %c0_90 = arith.constant 0 : index
    %146 = vector.load %arg9[%c1_88, %c0_89, %c0_90] : memref<2x1x32xf32, #tpu.memory_space<vmem>>, vector<1x1x32xf32>
    %147 = vector.shape_cast %146 : vector<1x1x32xf32> to vector<1x32xf32>
    %c1_91 = arith.constant 1 : index
    %c0_92 = arith.constant 0 : index
    %c0_93 = arith.constant 0 : index
    %148 = vector.load %arg10[%c1_91, %c0_92, %c0_93] : memref<2x1x32xf32, #tpu.memory_space<vmem>>, vector<1x1x32xf32>
    %149 = vector.shape_cast %148 : vector<1x1x32xf32> to vector<1x32xf32>
    %cst_94 = arith.constant dense<0.000000e+00> : vector<8xf32>
    %150 = vector.multi_reduction <add>, %145, %cst_94 [1] : vector<8x32xf32> to vector<8xf32>
    %151 = vector.shape_cast %150 : vector<8xf32> to vector<8x1xf32>
    %cst_95 = arith.constant 3.200000e+01 : f32
    %152 = vector.broadcast %cst_95 : f32 to vector<8x1xf32>
    %153 = arith.divf %151, %152 : vector<8x1xf32>
    %154 = vector.broadcast %153 : vector<8x1xf32> to vector<8x32xf32>
    %155 = arith.subf %145, %154 : vector<8x32xf32>
    %156 = arith.mulf %155, %155 : vector<8x32xf32>
    %cst_96 = arith.constant dense<0.000000e+00> : vector<8xf32>
    %157 = vector.multi_reduction <add>, %156, %cst_96 [1] : vector<8x32xf32> to vector<8xf32>
    %158 = vector.shape_cast %157 : vector<8xf32> to vector<8x1xf32>
    %cst_97 = arith.constant 3.200000e+01 : f32
    %159 = vector.broadcast %cst_97 : f32 to vector<8x1xf32>
    %160 = arith.divf %158, %159 : vector<8x1xf32>
    %161 = vector.broadcast %153 : vector<8x1xf32> to vector<8x32xf32>
    %162 = arith.subf %145, %161 : vector<8x32xf32>
    %cst_98 = arith.constant 9.99999974E-6 : f32
    %163 = vector.broadcast %cst_98 : f32 to vector<8x1xf32>
    %164 = arith.addf %160, %163 : vector<8x1xf32>
    %165 = math.rsqrt %164 : vector<8x1xf32>
    %166 = vector.broadcast %165 : vector<8x1xf32> to vector<8x32xf32>
    %167 = arith.mulf %162, %166 : vector<8x32xf32>
    %168 = vector.broadcast %147 : vector<1x32xf32> to vector<8x32xf32>
    %169 = arith.mulf %167, %168 : vector<8x32xf32>
    %170 = vector.broadcast %149 : vector<1x32xf32> to vector<8x32xf32>
    %171 = arith.addf %169, %170 : vector<8x32xf32>
    %c1_99 = arith.constant 1 : index
    %c0_100 = arith.constant 0 : index
    %c0_101 = arith.constant 0 : index
    %172 = vector.load %arg11[%c1_99, %c0_100, %c0_101] : memref<2x32x128xf32, #tpu.memory_space<vmem>>, vector<1x32x128xf32>
    %173 = vector.shape_cast %172 : vector<1x32x128xf32> to vector<32x128xf32>
    %cst_102 = arith.constant dense<0.000000e+00> : vector<8x128xf32>
    %174 = tpu.matmul %171, %173, %cst_102 {dimension_numbers = #tpu.dot_dimension_numbers<[1], [0], [0], [1], [0, 0, 1, 1], [], []>} : vector<8x32xf32>, vector<32x128xf32>, vector<8x128xf32> -> vector<8x128xf32>
    %c1_103 = arith.constant 1 : index
    %c0_104 = arith.constant 0 : index
    %c0_105 = arith.constant 0 : index
    %175 = vector.load %arg12[%c1_103, %c0_104, %c0_105] : memref<2x1x128xf32, #tpu.memory_space<vmem>>, vector<1x1x128xf32>
    %176 = vector.shape_cast %175 : vector<1x1x128xf32> to vector<1x128xf32>
    %177 = vector.broadcast %176 : vector<1x128xf32> to vector<8x128xf32>
    %178 = arith.addf %174, %177 : vector<8x128xf32>
    %cst_106 = arith.constant 0.000000e+00 : f32
    %179 = vector.broadcast %cst_106 : f32 to vector<8x128xf32>
    %180 = arith.maximumf %178, %179 : vector<8x128xf32>
    %c1_107 = arith.constant 1 : index
    %c0_108 = arith.constant 0 : index
    %c0_109 = arith.constant 0 : index
    %181 = vector.load %arg13[%c1_107, %c0_108, %c0_109] : memref<2x128x32xf32, #tpu.memory_space<vmem>>, vector<1x128x32xf32>
    %182 = vector.shape_cast %181 : vector<1x128x32xf32> to vector<128x32xf32>
    %cst_110 = arith.constant dense<0.000000e+00> : vector<8x32xf32>
    %183 = tpu.matmul %180, %182, %cst_110 {dimension_numbers = #tpu.dot_dimension_numbers<[1], [0], [0], [1], [0, 0, 1, 1], [], []>} : vector<8x128xf32>, vector<128x32xf32>, vector<8x32xf32> -> vector<8x32xf32>
    %c1_111 = arith.constant 1 : index
    %c0_112 = arith.constant 0 : index
    %c0_113 = arith.constant 0 : index
    %184 = vector.load %arg14[%c1_111, %c0_112, %c0_113] : memref<2x1x32xf32, #tpu.memory_space<vmem>>, vector<1x1x32xf32>
    %185 = vector.shape_cast %184 : vector<1x1x32xf32> to vector<1x32xf32>
    %186 = vector.broadcast %185 : vector<1x32xf32> to vector<8x32xf32>
    %187 = arith.addf %183, %186 : vector<8x32xf32>
    %188 = arith.addf %171, %187 : vector<8x32xf32>
    %c1_114 = arith.constant 1 : index
    %c0_115 = arith.constant 0 : index
    %c0_116 = arith.constant 0 : index
    %189 = vector.load %arg15[%c1_114, %c0_115, %c0_116] : memref<2x1x32xf32, #tpu.memory_space<vmem>>, vector<1x1x32xf32>
    %190 = vector.shape_cast %189 : vector<1x1x32xf32> to vector<1x32xf32>
    %c1_117 = arith.constant 1 : index
    %c0_118 = arith.constant 0 : index
    %c0_119 = arith.constant 0 : index
    %191 = vector.load %arg16[%c1_117, %c0_118, %c0_119] : memref<2x1x32xf32, #tpu.memory_space<vmem>>, vector<1x1x32xf32>
    %192 = vector.shape_cast %191 : vector<1x1x32xf32> to vector<1x32xf32>
    %cst_120 = arith.constant dense<0.000000e+00> : vector<8xf32>
    %193 = vector.multi_reduction <add>, %188, %cst_120 [1] : vector<8x32xf32> to vector<8xf32>
    %194 = vector.shape_cast %193 : vector<8xf32> to vector<8x1xf32>
    %cst_121 = arith.constant 3.200000e+01 : f32
    %195 = vector.broadcast %cst_121 : f32 to vector<8x1xf32>
    %196 = arith.divf %194, %195 : vector<8x1xf32>
    %197 = vector.broadcast %196 : vector<8x1xf32> to vector<8x32xf32>
    %198 = arith.subf %188, %197 : vector<8x32xf32>
    %199 = arith.mulf %198, %198 : vector<8x32xf32>
    %cst_122 = arith.constant dense<0.000000e+00> : vector<8xf32>
    %200 = vector.multi_reduction <add>, %199, %cst_122 [1] : vector<8x32xf32> to vector<8xf32>
    %201 = vector.shape_cast %200 : vector<8xf32> to vector<8x1xf32>
    %cst_123 = arith.constant 3.200000e+01 : f32
    %202 = vector.broadcast %cst_123 : f32 to vector<8x1xf32>
    %203 = arith.divf %201, %202 : vector<8x1xf32>
    %204 = vector.broadcast %196 : vector<8x1xf32> to vector<8x32xf32>
    %205 = arith.subf %188, %204 : vector<8x32xf32>
    %cst_124 = arith.constant 9.99999974E-6 : f32
    %206 = vector.broadcast %cst_124 : f32 to vector<8x1xf32>
    %207 = arith.addf %203, %206 : vector<8x1xf32>
    %208 = math.rsqrt %207 : vector<8x1xf32>
    %209 = vector.broadcast %208 : vector<8x1xf32> to vector<8x32xf32>
    %210 = arith.mulf %205, %209 : vector<8x32xf32>
    %211 = vector.broadcast %190 : vector<1x32xf32> to vector<8x32xf32>
    %212 = arith.mulf %210, %211 : vector<8x32xf32>
    %213 = vector.broadcast %192 : vector<1x32xf32> to vector<8x32xf32>
    %214 = arith.addf %212, %213 : vector<8x32xf32>
    %c0_125 = arith.constant 0 : index
    %c0_126 = arith.constant 0 : index
    %215 = vector.load %arg17[%c0_125, %c0_126] : memref<32x128xf32, #tpu.memory_space<vmem>>, vector<32x128xf32>
    %cst_127 = arith.constant dense<0.000000e+00> : vector<8x128xf32>
    %216 = tpu.matmul %214, %215, %cst_127 {dimension_numbers = #tpu.dot_dimension_numbers<[1], [0], [0], [1], [0, 0, 1, 1], [], []>} : vector<8x32xf32>, vector<32x128xf32>, vector<8x128xf32> -> vector<8x128xf32>
    %c0_128 = arith.constant 0 : index
    %c0_129 = arith.constant 0 : index
    %217 = vector.load %arg18[%c0_128, %c0_129] : memref<1x128xf32, #tpu.memory_space<vmem>>, vector<1x128xf32>
    %218 = vector.broadcast %217 : vector<1x128xf32> to vector<8x128xf32>
    %219 = arith.addf %216, %218 : vector<8x128xf32>
    %c0_130 = arith.constant 0 : index
    %c0_131 = arith.constant 0 : index
    %c0_132 = arith.constant 0 : index
    %220 = vector.load %arg19[%c0_130, %c0_131, %c0_132] : memref<1x8x128xf32, #tpu.memory_space<vmem>>, vector<1x8x128xf32>
    %221 = vector.shape_cast %220 : vector<1x8x128xf32> to vector<8x128xf32>
    %222 = vector.shape_cast %219 : vector<8x128xf32> to vector<1x8x128xf32>
    tpu.vector_store %arg19[%c0_130, %c0_131, %c0_132], %222 {strides = array<i32>} : memref<1x8x128xf32, #tpu.memory_space<vmem>>, vector<1x8x128xf32>,
    return
  }
  func.func @transform_0(%arg0: i32) -> (i32, i32, i32) {
    %c0_i32 = arith.constant 0 : i32
    %c0_i32_0 = arith.constant 0 : i32
    %c0_i32_1 = arith.constant 0 : i32
    return %arg0, %c0_i32, %c0_i32_0 : i32, i32, i32
  }
  func.func @transform_1(%arg0: i32) -> (i32, i32) {
    %c0_i32 = arith.constant 0 : i32
    %c0_i32_0 = arith.constant 0 : i32
    %c0_i32_1 = arith.constant 0 : i32
    return %c0_i32, %c0_i32_0 : i32, i32
  }
  func.func @transform_2(%arg0: i32) -> (i32, i32) {
    %c0_i32 = arith.constant 0 : i32
    %c0_i32_0 = arith.constant 0 : i32
    %c0_i32_1 = arith.constant 0 : i32
    return %c0_i32, %c0_i32_0 : i32, i32
  }
  func.func @transform_3(%arg0: i32) -> (i32, i32) {
    %c0_i32 = arith.constant 0 : i32
    %c0_i32_0 = arith.constant 0 : i32
    %c0_i32_1 = arith.constant 0 : i32
    return %c0_i32, %c0_i32_0 : i32, i32
  }
  func.func @transform_4(%arg0: i32) -> (i32, i32, i32, i32) {
    %c0_i32 = arith.constant 0 : i32
    %c0_i32_0 = arith.constant 0 : i32
    %c0_i32_1 = arith.constant 0 : i32
    %c0_i32_2 = arith.constant 0 : i32
    %c0_i32_3 = arith.constant 0 : i32
    return %c0_i32, %c0_i32_0, %c0_i32_1, %c0_i32_2 : i32, i32, i32, i32
  }
  func.func @transform_5(%arg0: i32) -> (i32, i32, i32, i32) {
    %c0_i32 = arith.constant 0 : i32
    %c0_i32_0 = arith.constant 0 : i32
    %c0_i32_1 = arith.constant 0 : i32
    %c0_i32_2 = arith.constant 0 : i32
    %c0_i32_3 = arith.constant 0 : i32
    return %c0_i32, %c0_i32_0, %c0_i32_1, %c0_i32_2 : i32, i32, i32, i32
  }
  func.func @transform_6(%arg0: i32) -> (i32, i32, i32, i32) {
    %c0_i32 = arith.constant 0 : i32
    %c0_i32_0 = arith.constant 0 : i32
    %c0_i32_1 = arith.constant 0 : i32
    %c0_i32_2 = arith.constant 0 : i32
    %c0_i32_3 = arith.constant 0 : i32
    return %c0_i32, %c0_i32_0, %c0_i32_1, %c0_i32_2 : i32, i32, i32, i32
  }
  func.func @transform_7(%arg0: i32) -> (i32, i32, i32) {
    %c0_i32 = arith.constant 0 : i32
    %c0_i32_0 = arith.constant 0 : i32
    %c0_i32_1 = arith.constant 0 : i32
    %c0_i32_2 = arith.constant 0 : i32
    return %c0_i32, %c0_i32_0, %c0_i32_1 : i32, i32, i32
  }
  func.func @transform_8(%arg0: i32) -> (i32, i32, i32) {
    %c0_i32 = arith.constant 0 : i32
    %c0_i32_0 = arith.constant 0 : i32
    %c0_i32_1 = arith.constant 0 : i32
    %c0_i32_2 = arith.constant 0 : i32
    return %c0_i32, %c0_i32_0, %c0_i32_1 : i32, i32, i32
  }
  func.func @transform_9(%arg0: i32) -> (i32, i32, i32) {
    %c0_i32 = arith.constant 0 : i32
    %c0_i32_0 = arith.constant 0 : i32
    %c0_i32_1 = arith.constant 0 : i32
    %c0_i32_2 = arith.constant 0 : i32
    return %c0_i32, %c0_i32_0, %c0_i32_1 : i32, i32, i32
  }
  func.func @transform_10(%arg0: i32) -> (i32, i32, i32) {
    %c0_i32 = arith.constant 0 : i32
    %c0_i32_0 = arith.constant 0 : i32
    %c0_i32_1 = arith.constant 0 : i32
    %c0_i32_2 = arith.constant 0 : i32
    return %c0_i32, %c0_i32_0, %c0_i32_1 : i32, i32, i32
  }
  func.func @transform_11(%arg0: i32) -> (i32, i32, i32) {
    %c0_i32 = arith.constant 0 : i32
    %c0_i32_0 = arith.constant 0 : i32
    %c0_i32_1 = arith.constant 0 : i32
    %c0_i32_2 = arith.constant 0 : i32
    return %c0_i32, %c0_i32_0, %c0_i32_1 : i32, i32, i32
  }
  func.func @transform_12(%arg0: i32) -> (i32, i32, i32) {
    %c0_i32 = arith.constant 0 : i32
    %c0_i32_0 = arith.constant 0 : i32
    %c0_i32_1 = arith.constant 0 : i32
    %c0_i32_2 = arith.constant 0 : i32
    return %c0_i32, %c0_i32_0, %c0_i32_1 : i32, i32, i32
  }
  func.func @transform_13(%arg0: i32) -> (i32, i32, i32) {
    %c0_i32 = arith.constant 0 : i32
    %c0_i32_0 = arith.constant 0 : i32
    %c0_i32_1 = arith.constant 0 : i32
    %c0_i32_2 = arith.constant 0 : i32
    return %c0_i32, %c0_i32_0, %c0_i32_1 : i32, i32, i32
  }
  func.func @transform_14(%arg0: i32) -> (i32, i32, i32) {
    %c0_i32 = arith.constant 0 : i32
    %c0_i32_0 = arith.constant 0 : i32
    %c0_i32_1 = arith.constant 0 : i32
    %c0_i32_2 = arith.constant 0 : i32
    return %c0_i32, %c0_i32_0, %c0_i32_1 : i32, i32, i32
  }
  func.func @transform_15(%arg0: i32) -> (i32, i32, i32) {
    %c0_i32 = arith.constant 0 : i32
    %c0_i32_0 = arith.constant 0 : i32
    %c0_i32_1 = arith.constant 0 : i32
    %c0_i32_2 = arith.constant 0 : i32
    return %c0_i32, %c0_i32_0, %c0_i32_1 : i32, i32, i32
  }
  func.func @transform_16(%arg0: i32) -> (i32, i32) {
    %c0_i32 = arith.constant 0 : i32
    %c0_i32_0 = arith.constant 0 : i32
    %c0_i32_1 = arith.constant 0 : i32
    return %c0_i32, %c0_i32_0 : i32, i32
  }
  func.func @transform_17(%arg0: i32) -> (i32, i32) {
    %c0_i32 = arith.constant 0 : i32
    %c0_i32_0 = arith.constant 0 : i32
    %c0_i32_1 = arith.constant 0 : i32
    return %c0_i32, %c0_i32_0 : i32, i32
  }
  func.func @transform_18(%arg0: i32) -> (i32, i32, i32) {
    %c0_i32 = arith.constant 0 : i32
    %c0_i32_0 = arith.constant 0 : i32
    %c0_i32_1 = arith.constant 0 : i32
    return %arg0, %c0_i32, %c0_i32_0 : i32, i32, i32
  }
}

</mosaic_0001>

<llo_original>
// kernel: tpu_custom_call.1
$region0: #{tpu_custom_call.1}
  #allocation0 [shape = 'u32[]', space=smem, size = 0x4, offset = 0x4, fixed_abs, tag = 'smem constant byte address 0x4 - core index']
  #allocation1 [shape = 'u32[72,128]{1,0:T(1,128)}', space=vmem, size = 0x9000, scoped, tag = 'internal scratch']
  %s0 = inlined_call_operand.vmem [shape: f32[2,8,8], index: 0, kind: input, shape index: {}]
  %s1 = inlined_call_operand.vmem [shape: f32[8,32], index: 1, kind: input, shape index: {}]
  %s2 = inlined_call_operand.vmem [shape: f32[1,32], index: 2, kind: input, shape index: {}]
  %s3 = inlined_call_operand.vmem [shape: f32[8,32], index: 3, kind: input, shape index: {}]
  %s4 = inlined_call_operand.vmem [shape: f32[2,24,32,4], index: 4, kind: input, shape index: {}]
  %s5 = inlined_call_operand.vmem [shape: f32[2,24,1,4], index: 5, kind: input, shape index: {}]
  %s6 = inlined_call_operand.vmem [shape: f32[2,8,4,32], index: 6, kind: input, shape index: {}]
  %s7 = inlined_call_operand.vmem [shape: f32[2,1,32], index: 7, kind: input, shape index: {}]
  %s8 = inlined_call_operand.vmem [shape: f32[2,1,32], index: 8, kind: input, shape index: {}]
  %s9 = inlined_call_operand.vmem [shape: f32[2,1,32], index: 9, kind: input, shape index: {}]
  %s10 = inlined_call_operand.vmem [shape: f32[2,32,128], index: 10, kind: input, shape index: {}]
  %s11 = inlined_call_operand.vmem [shape: f32[2,1,128], index: 11, kind: input, shape index: {}]
  %s12 = inlined_call_operand.vmem [shape: f32[2,128,32], index: 12, kind: input, shape index: {}]
  %s13 = inlined_call_operand.vmem [shape: f32[2,1,32], index: 13, kind: input, shape index: {}]
  %s14 = inlined_call_operand.vmem [shape: f32[2,1,32], index: 14, kind: input, shape index: {}]
  %s15 = inlined_call_operand.vmem [shape: f32[2,1,32], index: 15, kind: input, shape index: {}]
  %s16 = inlined_call_operand.vmem [shape: f32[32,128], index: 16, kind: input, shape index: {}]
  %s17 = inlined_call_operand.vmem [shape: f32[1,128], index: 17, kind: input, shape index: {}]
  %s18 = inlined_call_operand.hbm [shape: f32[2,8,128], index: 18, kind: output, shape index: {}]
  %s19 = sld [smem:[#allocation0]]
  $region105: #{tpu_custom_call.1} parent=0
    _
  %s21 = ssub.s32 1, %s19
  %s22 = scalar_select 0, %s21, %s19
  $region1: #{tpu_custom_call.1} parent=0
    #allocation2 [shape = 'u8[8192]{0}', space=vmem, size = 0x2000, scoped, tag = 'output window, operand 0']
    #allocation3 [shape = 's32[2]{0}', space=sflag, size = 0x8, scoped, tag = 'scoped memory for tpu_custom_call.1']
    %23 = vsyncpa [#allocation3], 0
    %s24 = scalar_lea.sflag [#allocation3], 1
    %25 = vsyncpa %s24, 0
    loop: start=0, step=1, limit=4
    $region2: #{tpu_custom_call.1} parent=1 // loop_pre_header
      _
    $region3: #{tpu_custom_call.1} parent=1 // loop_header
      %s27 = sphi 0, %s31
      %p28 = scmp.ge.s32.totalorder %s27, 4
      %s37 = sphi 0, %s39
      %s40 = sphi 0, %s37
      %s41 = sphi 0, %s40
      %s57 = sphi 0, %s41
      %s61 = sphi 0, %s61
      %s63 = sphi 0, %s61
      %s64 = sphi 0, %s63
      %s78 = sphi 0, %s64
      %s82 = sphi 0, %s82
      %s84 = sphi 0, %s82
      %s85 = sphi 0, %s84
      %s99 = sphi 0, %s85
      %s103 = sphi 0, %s103
      %s105 = sphi 0, %s103
      %s106 = sphi 0, %s105
      %s120 = sphi 0, %s106
      %s124 = sphi 0, %s124
      %s126 = sphi 0, %s124
      %s127 = sphi 0, %s126
      %s141 = sphi 0, %s127
      %s145 = sphi 0, %s145
      %s147 = sphi 0, %s145
      %s148 = sphi 0, %s147
      %s162 = sphi 0, %s148
      %s166 = sphi 0, %s166
      %s168 = sphi 0, %s166
      %s169 = sphi 0, %s168
      %s183 = sphi 0, %s169
      %s187 = sphi 0, %s187
      %s189 = sphi 0, %s187
      %s190 = sphi 0, %s189
      %s204 = sphi 0, %s190
      %s208 = sphi 0, %s208
      %s210 = sphi 0, %s208
      %s211 = sphi 0, %s210
      %s225 = sphi 0, %s211
      %s229 = sphi 0, %s229
      %s231 = sphi 0, %s229
      %s232 = sphi 0, %s231
      %s246 = sphi 0, %s232
      %s250 = sphi 0, %s250
      %s252 = sphi 0, %s250
      %s253 = sphi 0, %s252
      %s267 = sphi 0, %s253
      %s271 = sphi 0, %s271
      %s273 = sphi 0, %s271
      %s274 = sphi 0, %s273
      %s288 = sphi 0, %s274
      %s292 = sphi 0, %s292
      %s294 = sphi 0, %s292
      %s295 = sphi 0, %s294
      %s309 = sphi 0, %s295
      %s313 = sphi 0, %s313
      %s315 = sphi 0, %s313
      %s316 = sphi 0, %s315
      %s330 = sphi 0, %s316
      %s334 = sphi 0, %s334
      %s336 = sphi 0, %s334
      %s337 = sphi 0, %s336
      %s351 = sphi 0, %s337
      %s355 = sphi 0, %s355
      %s357 = sphi 0, %s355
      %s358 = sphi 0, %s357
      %s372 = sphi 0, %s358
      %s376 = sphi 0, %s376
      %s378 = sphi 0, %s376
      %s379 = sphi 0, %s378
      %s393 = sphi 0, %s379
      %s397 = sphi 0, %s397
      %s399 = sphi 0, %s397
      %s400 = sphi 0, %s399
      %s414 = sphi 0, %s400
      %s420 = sphi 0, %s422
      %s423 = sphi 0, %s420
      %s424 = sphi 0, %s423
      %s440 = sphi 0, %s424
    $region4: #{tpu_custom_call.1} parent=1 // loop_header_branch
      %30 = sbr.rel (%p28) target = $region8
    $region5: #{tpu_custom_call.1} parent=1 // loop_body
      %s32 = ssub.s32 %s27, 1
      %s33 = ssub.s32 %s27, 2
      %s34 = sadd.s32 %s27, 1
      %s35 = ssub.s32 %s27, %s34
      %p36 = scmp.eq.s32.totalorder %s35, 0
      %s38 = sadd.s32 %s37, 1
      %s39 = scalar_select %p36, %s37, %s38
      %p42 = pneg %p36
      %p43 = scmp.eq.s32.totalorder %s27, 1
      %p44 = por %p42, %p43
      %p45 = scmp.ne.s32.totalorder %s37, %s40
      %p46 = scmp.eq.s32.totalorder %s27, 0
      %p47 = por %p45, %p46
      %p48 = scmp.ne.s32.totalorder %s37, %s40
      %p49 = scmp.eq.s32.totalorder %s32, 1
      %p50 = por %p48, %p49
      %p51 = scmp.ne.s32.totalorder %s40, %s41
      %p52 = scmp.eq.s32.totalorder %s32, 0
      %p53 = por %p51, %p52
      %p54 = scmp.ne.s32.totalorder %s40, %s41
      %p55 = scmp.eq.s32.totalorder %s33, 1
      %p56 = por %p54, %p55
      %p58 = scmp.ne.s32.totalorder %s41, %s57
      %p59 = scmp.eq.s32.totalorder %s33, 0
      %p60 = por %p58, %p59
      %s62 = sadd.s32 %s61, 1
      %p65 = scmp.eq.s32.totalorder %s27, 1
      %p66 = scmp.ne.s32.totalorder %s61, %s63
      %p67 = scmp.eq.s32.totalorder %s27, 0
      %p68 = por %p66, %p67
      %p69 = scmp.ne.s32.totalorder %s61, %s63
      %p70 = scmp.eq.s32.totalorder %s32, 1
      %p71 = por %p69, %p70
      %p72 = scmp.ne.s32.totalorder %s63, %s64
      %p73 = scmp.eq.s32.totalorder %s32, 0
      %p74 = por %p72, %p73
      %p75 = scmp.ne.s32.totalorder %s63, %s64
      %p76 = scmp.eq.s32.totalorder %s33, 1
      %p77 = por %p75, %p76
      %p79 = scmp.ne.s32.totalorder %s64, %s78
      %p80 = scmp.eq.s32.totalorder %s33, 0
      %p81 = por %p79, %p80
      %s83 = sadd.s32 %s82, 1
      %p86 = scmp.eq.s32.totalorder %s27, 1
      %p87 = scmp.ne.s32.totalorder %s82, %s84
      %p88 = scmp.eq.s32.totalorder %s27, 0
      %p89 = por %p87, %p88
      %p90 = scmp.ne.s32.totalorder %s82, %s84
      %p91 = scmp.eq.s32.totalorder %s32, 1
      %p92 = por %p90, %p91
      %p93 = scmp.ne.s32.totalorder %s84, %s85
      %p94 = scmp.eq.s32.totalorder %s32, 0
      %p95 = por %p93, %p94
      %p96 = scmp.ne.s32.totalorder %s84, %s85
      %p97 = scmp.eq.s32.totalorder %s33, 1
      %p98 = por %p96, %p97
      %p100 = scmp.ne.s32.totalorder %s85, %s99
      %p101 = scmp.eq.s32.totalorder %s33, 0
      %p102 = por %p100, %p101
      %s104 = sadd.s32 %s103, 1
      %p107 = scmp.eq.s32.totalorder %s27, 1
      %p108 = scmp.ne.s32.totalorder %s103, %s105
      %p109 = scmp.eq.s32.totalorder %s27, 0
      %p110 = por %p108, %p109
      %p111 = scmp.ne.s32.totalorder %s103, %s105
      %p112 = scmp.eq.s32.totalorder %s32, 1
      %p113 = por %p111, %p112
      %p114 = scmp.ne.s32.totalorder %s105, %s106
      %p115 = scmp.eq.s32.totalorder %s32, 0
      %p116 = por %p114, %p115
      %p117 = scmp.ne.s32.totalorder %s105, %s106
      %p118 = scmp.eq.s32.totalorder %s33, 1
      %p119 = por %p117, %p118
      %p121 = scmp.ne.s32.totalorder %s106, %s120
      %p122 = scmp.eq.s32.totalorder %s33, 0
      %p123 = por %p121, %p122
      %s125 = sadd.s32 %s124, 1
      %p128 = scmp.eq.s32.totalorder %s27, 1
      %p129 = scmp.ne.s32.totalorder %s124, %s126
      %p130 = scmp.eq.s32.totalorder %s27, 0
      %p131 = por %p129, %p130
      %p132 = scmp.ne.s32.totalorder %s124, %s126
      %p133 = scmp.eq.s32.totalorder %s32, 1
      %p134 = por %p132, %p133
      %p135 = scmp.ne.s32.totalorder %s126, %s127
      %p136 = scmp.eq.s32.totalorder %s32, 0
      %p137 = por %p135, %p136
      %p138 = scmp.ne.s32.totalorder %s126, %s127
      %p139 = scmp.eq.s32.totalorder %s33, 1
      %p140 = por %p138, %p139
      %p142 = scmp.ne.s32.totalorder %s127, %s141
      %p143 = scmp.eq.s32.totalorder %s33, 0
      %p144 = por %p142, %p143
      %s146 = sadd.s32 %s145, 1
      %p149 = scmp.eq.s32.totalorder %s27, 1
      %p150 = scmp.ne.s32.totalorder %s145, %s147
      %p151 = scmp.eq.s32.totalorder %s27, 0
      %p152 = por %p150, %p151
      %p153 = scmp.ne.s32.totalorder %s145, %s147
      %p154 = scmp.eq.s32.totalorder %s32, 1
      %p155 = por %p153, %p154
      %p156 = scmp.ne.s32.totalorder %s147, %s148
      %p157 = scmp.eq.s32.totalorder %s32, 0
      %p158 = por %p156, %p157
      %p159 = scmp.ne.s32.totalorder %s147, %s148
      %p160 = scmp.eq.s32.totalorder %s33, 1
      %p161 = por %p159, %p160
      %p163 = scmp.ne.s32.totalorder %s148, %s162
      %p164 = scmp.eq.s32.totalorder %s33, 0
      %p165 = por %p163, %p164
      %s167 = sadd.s32 %s166, 1
      %p170 = scmp.eq.s32.totalorder %s27, 1
      %p171 = scmp.ne.s32.totalorder %s166, %s168
      %p172 = scmp.eq.s32.totalorder %s27, 0
      %p173 = por %p171, %p172
      %p174 = scmp.ne.s32.totalorder %s166, %s168
      %p175 = scmp.eq.s32.totalorder %s32, 1
      %p176 = por %p174, %p175
      %p177 = scmp.ne.s32.totalorder %s168, %s169
      %p178 = scmp.eq.s32.totalorder %s32, 0
      %p179 = por %p177, %p178
      %p180 = scmp.ne.s32.totalorder %s168, %s169
      %p181 = scmp.eq.s32.totalorder %s33, 1
      %p182 = por %p180, %p181
      %p184 = scmp.ne.s32.totalorder %s169, %s183
      %p185 = scmp.eq.s32.totalorder %s33, 0
      %p186 = por %p184, %p185
      %s188 = sadd.s32 %s187, 1
      %p191 = scmp.eq.s32.totalorder %s27, 1
      %p192 = scmp.ne.s32.totalorder %s187, %s189
      %p193 = scmp.eq.s32.totalorder %s27, 0
      %p194 = por %p192, %p193
      %p195 = scmp.ne.s32.totalorder %s187, %s189
      %p196 = scmp.eq.s32.totalorder %s32, 1
      %p197 = por %p195, %p196
      %p198 = scmp.ne.s32.totalorder %s189, %s190
      %p199 = scmp.eq.s32.totalorder %s32, 0
      %p200 = por %p198, %p199
      %p201 = scmp.ne.s32.totalorder %s189, %s190
      %p202 = scmp.eq.s32.totalorder %s33, 1
      %p203 = por %p201, %p202
      %p205 = scmp.ne.s32.totalorder %s190, %s204
      %p206 = scmp.eq.s32.totalorder %s33, 0
      %p207 = por %p205, %p206
      %s209 = sadd.s32 %s208, 1
      %p212 = scmp.eq.s32.totalorder %s27, 1
      %p213 = scmp.ne.s32.totalorder %s208, %s210
      %p214 = scmp.eq.s32.totalorder %s27, 0
      %p215 = por %p213, %p214
      %p216 = scmp.ne.s32.totalorder %s208, %s210
      %p217 = scmp.eq.s32.totalorder %s32, 1
      %p218 = por %p216, %p217
      %p219 = scmp.ne.s32.totalorder %s210, %s211
      %p220 = scmp.eq.s32.totalorder %s32, 0
      %p221 = por %p219, %p220
      %p222 = scmp.ne.s32.totalorder %s210, %s211
      %p223 = scmp.eq.s32.totalorder %s33, 1
      %p224 = por %p222, %p223
      %p226 = scmp.ne.s32.totalorder %s211, %s225
      %p227 = scmp.eq.s32.totalorder %s33, 0
      %p228 = por %p226, %p227
      %s230 = sadd.s32 %s229, 1
      %p233 = scmp.eq.s32.totalorder %s27, 1
      %p234 = scmp.ne.s32.totalorder %s229, %s231
      %p235 = scmp.eq.s32.totalorder %s27, 0
      %p236 = por %p234, %p235
      %p237 = scmp.ne.s32.totalorder %s229, %s231
      %p238 = scmp.eq.s32.totalorder %s32, 1
      %p239 = por %p237, %p238
      %p240 = scmp.ne.s32.totalorder %s231, %s232
      %p241 = scmp.eq.s32.totalorder %s32, 0
      %p242 = por %p240, %p241
      %p243 = scmp.ne.s32.totalorder %s231, %s232
      %p244 = scmp.eq.s32.totalorder %s33, 1
      %p245 = por %p243, %p244
      %p247 = scmp.ne.s32.totalorder %s232, %s246
      %p248 = scmp.eq.s32.totalorder %s33, 0
      %p249 = por %p247, %p248
      %s251 = sadd.s32 %s250, 1
      %p254 = scmp.eq.s32.totalorder %s27, 1
      %p255 = scmp.ne.s32.totalorder %s250, %s252
      %p256 = scmp.eq.s32.totalorder %s27, 0
      %p257 = por %p255, %p256
      %p258 = scmp.ne.s32.totalorder %s250, %s252
      %p259 = scmp.eq.s32.totalorder %s32, 1
      %p260 = por %p258, %p259
      %p261 = scmp.ne.s32.totalorder %s252, %s253
      %p262 = scmp.eq.s32.totalorder %s32, 0
      %p263 = por %p261, %p262
      %p264 = scmp.ne.s32.totalorder %s252, %s253
      %p265 = scmp.eq.s32.totalorder %s33, 1
      %p266 = por %p264, %p265
      %p268 = scmp.ne.s32.totalorder %s253, %s267
      %p269 = scmp.eq.s32.totalorder %s33, 0
      %p270 = por %p268, %p269
      %s272 = sadd.s32 %s271, 1
      %p275 = scmp.eq.s32.totalorder %s27, 1
      %p276 = scmp.ne.s32.totalorder %s271, %s273
      %p277 = scmp.eq.s32.totalorder %s27, 0
      %p278 = por %p276, %p277
      %p279 = scmp.ne.s32.totalorder %s271, %s273
      %p280 = scmp.eq.s32.totalorder %s32, 1
      %p281 = por %p279, %p280
      %p282 = scmp.ne.s32.totalorder %s273, %s274
      %p283 = scmp.eq.s32.totalorder %s32, 0
      %p284 = por %p282, %p283
      %p285 = scmp.ne.s32.totalorder %s273, %s274
      %p286 = scmp.eq.s32.totalorder %s33, 1
      %p287 = por %p285, %p286
      %p289 = scmp.ne.s32.totalorder %s274, %s288
      %p290 = scmp.eq.s32.totalorder %s33, 0
      %p291 = por %p289, %p290
      %s293 = sadd.s32 %s292, 1
      %p296 = scmp.eq.s32.totalorder %s27, 1
      %p297 = scmp.ne.s32.totalorder %s292, %s294
      %p298 = scmp.eq.s32.totalorder %s27, 0
      %p299 = por %p297, %p298
      %p300 = scmp.ne.s32.totalorder %s292, %s294
      %p301 = scmp.eq.s32.totalorder %s32, 1
      %p302 = por %p300, %p301
      %p303 = scmp.ne.s32.totalorder %s294, %s295
      %p304 = scmp.eq.s32.totalorder %s32, 0
      %p305 = por %p303, %p304
      %p306 = scmp.ne.s32.totalorder %s294, %s295
      %p307 = scmp.eq.s32.totalorder %s33, 1
      %p308 = por %p306, %p307
      %p310 = scmp.ne.s32.totalorder %s295, %s309
      %p311 = scmp.eq.s32.totalorder %s33, 0
      %p312 = por %p310, %p311
      %s314 = sadd.s32 %s313, 1
      %p317 = scmp.eq.s32.totalorder %s27, 1
      %p318 = scmp.ne.s32.totalorder %s313, %s315
      %p319 = scmp.eq.s32.totalorder %s27, 0
      %p320 = por %p318, %p319
      %p321 = scmp.ne.s32.totalorder %s313, %s315
      %p322 = scmp.eq.s32.totalorder %s32, 1
      %p323 = por %p321, %p322
      %p324 = scmp.ne.s32.totalorder %s315, %s316
      %p325 = scmp.eq.s32.totalorder %s32, 0
      %p326 = por %p324, %p325
      %p327 = scmp.ne.s32.totalorder %s315, %s316
      %p328 = scmp.eq.s32.totalorder %s33, 1
      %p329 = por %p327, %p328
      %p331 = scmp.ne.s32.totalorder %s316, %s330
      %p332 = scmp.eq.s32.totalorder %s33, 0
      %p333 = por %p331, %p332
      %s335 = sadd.s32 %s334, 1
      %p338 = scmp.eq.s32.totalorder %s27, 1
      %p339 = scmp.ne.s32.totalorder %s334, %s336
      %p340 = scmp.eq.s32.totalorder %s27, 0
      %p341 = por %p339, %p340
      %p342 = scmp.ne.s32.totalorder %s334, %s336
      %p343 = scmp.eq.s32.totalorder %s32, 1
      %p344 = por %p342, %p343
      %p345 = scmp.ne.s32.totalorder %s336, %s337
      %p346 = scmp.eq.s32.totalorder %s32, 0
      %p347 = por %p345, %p346
      %p348 = scmp.ne.s32.totalorder %s336, %s337
      %p349 = scmp.eq.s32.totalorder %s33, 1
      %p350 = por %p348, %p349
      %p352 = scmp.ne.s32.totalorder %s337, %s351
      %p353 = scmp.eq.s32.totalorder %s33, 0
      %p354 = por %p352, %p353
      %s356 = sadd.s32 %s355, 1
      %p359 = scmp.eq.s32.totalorder %s27, 1
      %p360 = scmp.ne.s32.totalorder %s355, %s357
      %p361 = scmp.eq.s32.totalorder %s27, 0
      %p362 = por %p360, %p361
      %p363 = scmp.ne.s32.totalorder %s355, %s357
      %p364 = scmp.eq.s32.totalorder %s32, 1
      %p365 = por %p363, %p364
      %p366 = scmp.ne.s32.totalorder %s357, %s358
      %p367 = scmp.eq.s32.totalorder %s32, 0
      %p368 = por %p366, %p367
      %p369 = scmp.ne.s32.totalorder %s357, %s358
      %p370 = scmp.eq.s32.totalorder %s33, 1
      %p371 = por %p369, %p370
      %p373 = scmp.ne.s32.totalorder %s358, %s372
      %p374 = scmp.eq.s32.totalorder %s33, 0
      %p375 = por %p373, %p374
      %s377 = sadd.s32 %s376, 1
      %p380 = scmp.eq.s32.totalorder %s27, 1
      %p381 = scmp.ne.s32.totalorder %s376, %s378
      %p382 = scmp.eq.s32.totalorder %s27, 0
      %p383 = por %p381, %p382
      %p384 = scmp.ne.s32.totalorder %s376, %s378
      %p385 = scmp.eq.s32.totalorder %s32, 1
      %p386 = por %p384, %p385
      %p387 = scmp.ne.s32.totalorder %s378, %s379
      %p388 = scmp.eq.s32.totalorder %s32, 0
      %p389 = por %p387, %p388
      %p390 = scmp.ne.s32.totalorder %s378, %s379
      %p391 = scmp.eq.s32.totalorder %s33, 1
      %p392 = por %p390, %p391
      %p394 = scmp.ne.s32.totalorder %s379, %s393
      %p395 = scmp.eq.s32.totalorder %s33, 0
      %p396 = por %p394, %p395
      %s398 = sadd.s32 %s397, 1
      %p401 = scmp.eq.s32.totalorder %s27, 1
      %p402 = scmp.ne.s32.totalorder %s397, %s399
      %p403 = scmp.eq.s32.totalorder %s27, 0
      %p404 = por %p402, %p403
      %p405 = scmp.ne.s32.totalorder %s397, %s399
      %p406 = scmp.eq.s32.totalorder %s32, 1
      %p407 = por %p405, %p406
      %p408 = scmp.ne.s32.totalorder %s399, %s400
      %p409 = scmp.eq.s32.totalorder %s32, 0
      %p410 = por %p408, %p409
      %p411 = scmp.ne.s32.totalorder %s399, %s400
      %p412 = scmp.eq.s32.totalorder %s33, 1
      %p413 = por %p411, %p412
      %p415 = scmp.ne.s32.totalorder %s400, %s414
      %p416 = scmp.eq.s32.totalorder %s33, 0
      %p417 = por %p415, %p416
      %s418 = ssub.s32 %s27, %s34
      %p419 = scmp.eq.s32.totalorder %s418, 0
      %s421 = sadd.s32 %s420, 1
      %s422 = scalar_select %p419, %s420, %s421
      %p425 = pneg %p419
      %p426 = scmp.eq.s32.totalorder %s27, 1
      %p427 = por %p425, %p426
      %p428 = scmp.ne.s32.totalorder %s420, %s423
      %p429 = scmp.eq.s32.totalorder %s27, 0
      %p430 = por %p428, %p429
      %p431 = scmp.ne.s32.totalorder %s420, %s423
      %p432 = scmp.eq.s32.totalorder %s32, 1
      %p433 = por %p431, %p432
      %p434 = scmp.ne.s32.totalorder %s423, %s424
      %p435 = scmp.eq.s32.totalorder %s32, 0
      %p436 = por %p434, %p435
      %p437 = scmp.ne.s32.totalorder %s423, %s424
      %p438 = scmp.eq.s32.totalorder %s33, 1
      %p439 = por %p437, %p438
      %p441 = scmp.ne.s32.totalorder %s424, %s440
      %p442 = scmp.eq.s32.totalorder %s33, 0
      %p443 = por %p441, %p442
      %p444 = scmp.le.s32.totalorder 1, %s27
      %p445 = scmp.lt.s32.totalorder %s27, 3
      %p446 = pnand %p444, %p445
      %p447 = pneg %p446
      // Predicated region
      $region9: #{tpu_custom_call.1} parent=5 // pred_check
        _
      $region10: #{tpu_custom_call.1} parent=5 // pred_check_branch
        %449 = sbr.rel (%p446) target = $region12
      $region11: #{tpu_custom_call.1} parent=5 // pred_region
        %s450 = ssub.s32 %s27, 1
        // Predicated region
        $region13: #{tpu_custom_call.1} parent=11 // pred_check
          %p451 = pneg %p74
        $region14: #{tpu_custom_call.1} parent=11 // pred_check_branch
          %453 = sbr.rel (%p451) target = $region16
        $region15: #{tpu_custom_call.1} parent=11 // pred_region
          _
        $region16: #{tpu_custom_call.1} parent=11 // pred_fallthru
          _
        // Predicated region
        $region17: #{tpu_custom_call.1} parent=11 // pred_check
          %p454 = pneg %p95
        $region18: #{tpu_custom_call.1} parent=11 // pred_check_branch
          %456 = sbr.rel (%p454) target = $region20
        $region19: #{tpu_custom_call.1} parent=11 // pred_region
          _
        $region20: #{tpu_custom_call.1} parent=11 // pred_fallthru
          _
        // Predicated region
        $region21: #{tpu_custom_call.1} parent=11 // pred_check
          %p457 = pneg %p116
        $region22: #{tpu_custom_call.1} parent=11 // pred_check_branch
          %459 = sbr.rel (%p457) target = $region24
        $region23: #{tpu_custom_call.1} parent=11 // pred_region
          _
        $region24: #{tpu_custom_call.1} parent=11 // pred_fallthru
          _
        // Predicated region
        $region25: #{tpu_custom_call.1} parent=11 // pred_check
          %p460 = pneg %p137
        $region26: #{tpu_custom_call.1} parent=11 // pred_check_branch
          %462 = sbr.rel (%p460) target = $region28
        $region27: #{tpu_custom_call.1} parent=11 // pred_region
          _
        $region28: #{tpu_custom_call.1} parent=11 // pred_fallthru
          _
        // Predicated region
        $region29: #{tpu_custom_call.1} parent=11 // pred_check
          %p463 = pneg %p158
        $region30: #{tpu_custom_call.1} parent=11 // pred_check_branch
          %465 = sbr.rel (%p463) target = $region32
        $region31: #{tpu_custom_call.1} parent=11 // pred_region
          _
        $region32: #{tpu_custom_call.1} parent=11 // pred_fallthru
          _
        // Predicated region
        $region33: #{tpu_custom_call.1} parent=11 // pred_check
          %p466 = pneg %p179
        $region34: #{tpu_custom_call.1} parent=11 // pred_check_branch
          %468 = sbr.rel (%p466) target = $region36
        $region35: #{tpu_custom_call.1} parent=11 // pred_region
          _
        $region36: #{tpu_custom_call.1} parent=11 // pred_fallthru
          _
        // Predicated region
        $region37: #{tpu_custom_call.1} parent=11 // pred_check
          %p469 = pneg %p200
        $region38: #{tpu_custom_call.1} parent=11 // pred_check_branch
          %471 = sbr.rel (%p469) target = $region40
        $region39: #{tpu_custom_call.1} parent=11 // pred_region
          _
        $region40: #{tpu_custom_call.1} parent=11 // pred_fallthru
          _
        // Predicated region
        $region41: #{tpu_custom_call.1} parent=11 // pred_check
          %p472 = pneg %p221
        $region42: #{tpu_custom_call.1} parent=11 // pred_check_branch
          %474 = sbr.rel (%p472) target = $region44
        $region43: #{tpu_custom_call.1} parent=11 // pred_region
          _
        $region44: #{tpu_custom_call.1} parent=11 // pred_fallthru
          _
        // Predicated region
        $region45: #{tpu_custom_call.1} parent=11 // pred_check
          %p475 = pneg %p242
        $region46: #{tpu_custom_call.1} parent=11 // pred_check_branch
          %477 = sbr.rel (%p475) target = $region48
        $region47: #{tpu_custom_call.1} parent=11 // pred_region
          _
        $region48: #{tpu_custom_call.1} parent=11 // pred_fallthru
          _
        // Predicated region
        $region49: #{tpu_custom_call.1} parent=11 // pred_check
          %p478 = pneg %p263
        $region50: #{tpu_custom_call.1} parent=11 // pred_check_branch
          %480 = sbr.rel (%p478) target = $region52
        $region51: #{tpu_custom_call.1} parent=11 // pred_region
          _
        $region52: #{tpu_custom_call.1} parent=11 // pred_fallthru
          _
        // Predicated region
        $region53: #{tpu_custom_call.1} parent=11 // pred_check
          %p481 = pneg %p284
        $region54: #{tpu_custom_call.1} parent=11 // pred_check_branch
          %483 = sbr.rel (%p481) target = $region56
        $region55: #{tpu_custom_call.1} parent=11 // pred_region
          _
        $region56: #{tpu_custom_call.1} parent=11 // pred_fallthru
          _
        // Predicated region
        $region57: #{tpu_custom_call.1} parent=11 // pred_check
          %p484 = pneg %p305
        $region58: #{tpu_custom_call.1} parent=11 // pred_check_branch
          %486 = sbr.rel (%p484) target = $region60
        $region59: #{tpu_custom_call.1} parent=11 // pred_region
          _
        $region60: #{tpu_custom_call.1} parent=11 // pred_fallthru
          _
        // Predicated region
        $region61: #{tpu_custom_call.1} parent=11 // pred_check
          %p487 = pneg %p326
        $region62: #{tpu_custom_call.1} parent=11 // pred_check_branch
          %489 = sbr.rel (%p487) target = $region64
        $region63: #{tpu_custom_call.1} parent=11 // pred_region
          _
        $region64: #{tpu_custom_call.1} parent=11 // pred_fallthru
          _
        // Predicated region
        $region65: #{tpu_custom_call.1} parent=11 // pred_check
          %p490 = pneg %p347
        $region66: #{tpu_custom_call.1} parent=11 // pred_check_branch
          %492 = sbr.rel (%p490) target = $region68
        $region67: #{tpu_custom_call.1} parent=11 // pred_region
          _
        $region68: #{tpu_custom_call.1} parent=11 // pred_fallthru
          _
        // Predicated region
        $region69: #{tpu_custom_call.1} parent=11 // pred_check
          %p493 = pneg %p368
        $region70: #{tpu_custom_call.1} parent=11 // pred_check_branch
          %495 = sbr.rel (%p493) target = $region72
        $region71: #{tpu_custom_call.1} parent=11 // pred_region
          _
        $region72: #{tpu_custom_call.1} parent=11 // pred_fallthru
          _
        // Predicated region
        $region73: #{tpu_custom_call.1} parent=11 // pred_check
          %p496 = pneg %p389
        $region74: #{tpu_custom_call.1} parent=11 // pred_check_branch
          %498 = sbr.rel (%p496) target = $region76
        $region75: #{tpu_custom_call.1} parent=11 // pred_region
          _
        $region76: #{tpu_custom_call.1} parent=11 // pred_fallthru
          _
        // Predicated region
        $region77: #{tpu_custom_call.1} parent=11 // pred_check
          %p499 = pneg %p410
        $region78: #{tpu_custom_call.1} parent=11 // pred_check_branch
          %501 = sbr.rel (%p499) target = $region80
        $region79: #{tpu_custom_call.1} parent=11 // pred_region
          _
        $region80: #{tpu_custom_call.1} parent=11 // pred_fallthru
          _
      $region12: #{tpu_custom_call.1} parent=5 // pred_fallthru
        _
      %p502 = scmp.lt.s32.totalorder %s27, 2
      // Predicated region
      $region81: #{tpu_custom_call.1} parent=5 // pred_check
        %p503 = pneg %p502
      $region82: #{tpu_custom_call.1} parent=5 // pred_check_branch
        %505 = sbr.rel (%p503) target = $region84
      $region83: #{tpu_custom_call.1} parent=5 // pred_region
        // Predicated region
        $region85: #{tpu_custom_call.1} parent=83 // pred_check
          %p506 = pneg %p47
        $region86: #{tpu_custom_call.1} parent=83 // pred_check_branch
          %508 = sbr.rel (%p506) target = $region88
        $region87: #{tpu_custom_call.1} parent=83 // pred_region
          %p509 = scmp.lt.s32.totalorder %s27, 1
          %s510 = scalar_select %p509, %s27, 1
          %s511 = smul.addr %s510, 8
          %s512 = scalar_lea.vmem %s0, %s511
        $region88: #{tpu_custom_call.1} parent=83 // pred_fallthru
          _
      $region84: #{tpu_custom_call.1} parent=5 // pred_fallthru
        _
      %p513 = scmp.le.s32.totalorder 1, %s27
      %p514 = scmp.lt.s32.totalorder %s27, 3
      %p515 = pnand %p513, %p514
      %p516 = pneg %p515
      // Predicated region
      $region89: #{tpu_custom_call.1} parent=5 // pred_check
        _
      $region90: #{tpu_custom_call.1} parent=5 // pred_check_branch
        %518 = sbr.rel (%p515) target = $region92
      $region91: #{tpu_custom_call.1} parent=5 // pred_region
        %s519 = ssub.s32 %s27, 1
        %p520 = scmp.lt.s32.totalorder %s32, 1
        %s521 = scalar_select %p520, %s32, 1
        %s522 = smul.addr %s521, 8
        %s523 = scalar_lea.vmem %s0, %s522
        %p524 = pneg %p53
        %p525 = pneg %p50
        %p526 = pneg %p74
        %p527 = pneg %p71
        %p528 = pneg %p95
        %p529 = pneg %p92
        %p530 = pneg %p116
        %p531 = pneg %p113
        %p532 = pneg %p137
        %p533 = pneg %p134
        %p534 = pneg %p158
        %p535 = pneg %p155
        %p536 = pneg %p179
        %p537 = pneg %p176
        %p538 = pneg %p200
        %p539 = pneg %p197
        %p540 = pneg %p221
        %p541 = pneg %p218
        %p542 = pneg %p242
        %p543 = pneg %p239
        %p544 = pneg %p263
        %p545 = pneg %p260
        %p546 = pneg %p284
        %p547 = pneg %p281
        %p548 = pneg %p305
        %p549 = pneg %p302
        %p550 = pneg %p326
        %p551 = pneg %p323
        %p552 = pneg %p347
        %p553 = pneg %p344
        %p554 = pneg %p368
        %p555 = pneg %p365
        %p556 = pneg %p389
        %p557 = pneg %p386
        %p558 = pneg %p410
        %p559 = pneg %p407
        %p560 = pneg %p436
        %p561 = pneg %p433
        %s562 = sand.u32 %s423, 1
        %s563 = scalar_lea.sflag [#allocation3], %s562
        %s564 = sand.u32 %s423, 1
        %s565 = smul.addr %s564, 8
        %s566 = scalar_lea.vmem [#allocation2], %s565
        %p567 = scmp.lt.s32.totalorder %s32, 1
        %s568 = scalar_select %p567, %s32, 1
        %s569 = smul.addr %s568, 8
        %s570 = scalar_lea.vmem %s0, %s569
        %v571 = vld [vmem:[%s570] sm:$0xff]
        %v572 = vld [vmem:[%s1] sm:$0xff]
        %v573 = vld [vmem:[%s2] sm:$0x1]
        %v575 = vperm.slane %v573, 0
        %vm577 = vcmask 64512
        %v579 = vsel %vm577, %v571, 0
        %581 = vmatpush.msra.mxu0 0.0
        %582 = vmatpush.msra.mxu0 0.0
        %583 = vmatpush.msra.mxu0 0.0
        %584 = vmatpush.msra.mxu0 0.0
        %585 = vmatpush.msra.mxu0 0.0
        %586 = vmatpush.msra.mxu0 0.0
        %587 = vmatpush.msra.mxu0 0.0
        %588 = vmatpush.msra.mxu0 0.0
        %589 = vmatpush.msra.mxu0 0.0
        %590 = vmatpush.msra.mxu0 0.0
        %591 = vmatpush.msra.mxu0 0.0
        %592 = vmatpush.msra.mxu0 0.0
        %593 = vmatpush.msra.mxu0 0.0
        %594 = vmatpush.msra.mxu0 0.0
        %595 = vmatpush.msra.mxu0 0.0
        %596 = vmatpush.msra.mxu0 %v572
        %597 = vmatmul.f32.gmra.mxu0 %v579
        %v598 = vpop.f32.mrf.mxu0
        %v599 = vadd.f32 %v575, %v598
        %600 = vdwg.mxu0
        %v601 = vld [vmem:[%s3] sm:$0xff]
        %v602 = vadd.f32 %v599, %v601
        %v603 = vld [vmem:[%s4] sm:$0xff]
        %v604 = vld [vmem:[%s4 + $0x8] sm:$0xff]
        %v605 = vld [vmem:[%s4 + $0x10] sm:$0xff]
        %v606 = vld [vmem:[%s4 + $0x18] sm:$0xff]
        %v607 = vld [vmem:[%s4 + $0x20] sm:$0xff]
        %v608 = vld [vmem:[%s4 + $0x28] sm:$0xff]
        %v609 = vld [vmem:[%s4 + $0x30] sm:$0xff]
        %v610 = vld [vmem:[%s4 + $0x38] sm:$0xff]
        %v611 = vld [vmem:[%s4 + $0x40] sm:$0xff]
        %v612 = vld [vmem:[%s4 + $0x48] sm:$0xff]
        %v613 = vld [vmem:[%s4 + $0x50] sm:$0xff]
        %v614 = vld [vmem:[%s4 + $0x58] sm:$0xff]
        %v615 = vld [vmem:[%s4 + $0x60] sm:$0xff]
        %v616 = vld [vmem:[%s4 + $0x68] sm:$0xff]
        %v617 = vld [vmem:[%s4 + $0x70] sm:$0xff]
        %v618 = vld [vmem:[%s4 + $0x78] sm:$0xff]
        %v619 = vld [vmem:[%s4 + $0x80] sm:$0xff]
        %v620 = vld [vmem:[%s4 + $0x88] sm:$0xff]
        %v621 = vld [vmem:[%s4 + $0x90] sm:$0xff]
        %v622 = vld [vmem:[%s4 + $0x98] sm:$0xff]
        %v623 = vld [vmem:[%s4 + $0xa0] sm:$0xff]
        %v624 = vld [vmem:[%s4 + $0xa8] sm:$0xff]
        %v625 = vld [vmem:[%s4 + $0xb0] sm:$0xff]
        %v626 = vld [vmem:[%s4 + $0xb8] sm:$0xff]
        %v627 = vld [vmem:[%s4 + $0xc0] sm:$0xff]
        %v628 = vld [vmem:[%s4 + $0xc8] sm:$0xff]
        %v629 = vld [vmem:[%s4 + $0xd0] sm:$0xff]
        %v630 = vld [vmem:[%s4 + $0xd8] sm:$0xff]
        %v631 = vld [vmem:[%s4 + $0xe0] sm:$0xff]
        %v632 = vld [vmem:[%s4 + $0xe8] sm:$0xff]
        %v633 = vld [vmem:[%s4 + $0xf0] sm:$0xff]
        %v634 = vld [vmem:[%s4 + $0xf8] sm:$0xff]
        %v635 = vld [vmem:[%s4 + $0x100] sm:$0xff]
        %v636 = vld [vmem:[%s4 + $0x108] sm:$0xff]
        %v637 = vld [vmem:[%s4 + $0x110] sm:$0xff]
        %v638 = vld [vmem:[%s4 + $0x118] sm:$0xff]
        %v639 = vld [vmem:[%s4 + $0x120] sm:$0xff]
        %v640 = vld [vmem:[%s4 + $0x128] sm:$0xff]
        %v641 = vld [vmem:[%s4 + $0x130] sm:$0xff]
        %v642 = vld [vmem:[%s4 + $0x138] sm:$0xff]
        %v643 = vld [vmem:[%s4 + $0x140] sm:$0xff]
        %v644 = vld [vmem:[%s4 + $0x148] sm:$0xff]
        %v645 = vld [vmem:[%s4 + $0x150] sm:$0xff]
        %v646 = vld [vmem:[%s4 + $0x158] sm:$0xff]
        %v647 = vld [vmem:[%s4 + $0x160] sm:$0xff]
        %v648 = vld [vmem:[%s4 + $0x168] sm:$0xff]
        %v649 = vld [vmem:[%s4 + $0x170] sm:$0xff]
        %v650 = vld [vmem:[%s4 + $0x178] sm:$0xff]
        %v651 = vld [vmem:[%s4 + $0x180] sm:$0xff]
        %v652 = vld [vmem:[%s4 + $0x188] sm:$0xff]
        %v653 = vld [vmem:[%s4 + $0x190] sm:$0xff]
        %v654 = vld [vmem:[%s4 + $0x198] sm:$0xff]
        %v655 = vld [vmem:[%s4 + $0x1a0] sm:$0xff]
        %v656 = vld [vmem:[%s4 + $0x1a8] sm:$0xff]
        %v657 = vld [vmem:[%s4 + $0x1b0] sm:$0xff]
        %v658 = vld [vmem:[%s4 + $0x1b8] sm:$0xff]
        %v659 = vld [vmem:[%s4 + $0x1c0] sm:$0xff]
        %v660 = vld [vmem:[%s4 + $0x1c8] sm:$0xff]
        %v661 = vld [vmem:[%s4 + $0x1d0] sm:$0xff]
        %v662 = vld [vmem:[%s4 + $0x1d8] sm:$0xff]
        %v663 = vld [vmem:[%s4 + $0x1e0] sm:$0xff]
        %v664 = vld [vmem:[%s4 + $0x1e8] sm:$0xff]
        %v665 = vld [vmem:[%s4 + $0x1f0] sm:$0xff]
        %v666 = vld [vmem:[%s4 + $0x1f8] sm:$0xff]
        %v667 = vld [vmem:[%s4 + $0x200] sm:$0xff]
        %v668 = vld [vmem:[%s4 + $0x208] sm:$0xff]
        %v669 = vld [vmem:[%s4 + $0x210] sm:$0xff]
        %v670 = vld [vmem:[%s4 + $0x218] sm:$0xff]
        %v671 = vld [vmem:[%s4 + $0x220] sm:$0xff]
        %v672 = vld [vmem:[%s4 + $0x228] sm:$0xff]
        %v673 = vld [vmem:[%s4 + $0x230] sm:$0xff]
        %v674 = vld [vmem:[%s4 + $0x238] sm:$0xff]
        %v675 = vld [vmem:[%s4 + $0x240] sm:$0xff]
        %v676 = vld [vmem:[%s4 + $0x248] sm:$0xff]
        %v677 = vld [vmem:[%s4 + $0x250] sm:$0xff]
        %v678 = vld [vmem:[%s4 + $0x258] sm:$0xff]
        %v679 = vld [vmem:[%s4 + $0x260] sm:$0xff]
        %v680 = vld [vmem:[%s4 + $0x268] sm:$0xff]
        %v681 = vld [vmem:[%s4 + $0x270] sm:$0xff]
        %v682 = vld [vmem:[%s4 + $0x278] sm:$0xff]
        %v683 = vld [vmem:[%s4 + $0x280] sm:$0xff]
        %v684 = vld [vmem:[%s4 + $0x288] sm:$0xff]
        %v685 = vld [vmem:[%s4 + $0x290] sm:$0xff]
        %v686 = vld [vmem:[%s4 + $0x298] sm:$0xff]
        %v687 = vld [vmem:[%s4 + $0x2a0] sm:$0xff]
        %v688 = vld [vmem:[%s4 + $0x2a8] sm:$0xff]
        %v689 = vld [vmem:[%s4 + $0x2b0] sm:$0xff]
        %v690 = vld [vmem:[%s4 + $0x2b8] sm:$0xff]
        %v691 = vld [vmem:[%s4 + $0x2c0] sm:$0xff]
        %v692 = vld [vmem:[%s4 + $0x2c8] sm:$0xff]
        %v693 = vld [vmem:[%s4 + $0x2d0] sm:$0xff]
        %v694 = vld [vmem:[%s4 + $0x2d8] sm:$0xff]
        %v695 = vld [vmem:[%s4 + $0x2e0] sm:$0xff]
        %v696 = vld [vmem:[%s4 + $0x2e8] sm:$0xff]
        %v697 = vld [vmem:[%s4 + $0x2f0] sm:$0xff]
        %v698 = vld [vmem:[%s4 + $0x2f8] sm:$0xff]
        %v699 = vld [vmem:[%s5] sm:$0x1]
        %v700 = vld [vmem:[%s5 + $0x1] sm:$0x1]
        %v701 = vld [vmem:[%s5 + $0x2] sm:$0x1]
        %v702 = vld [vmem:[%s5 + $0x3] sm:$0x1]
        %v703 = vld [vmem:[%s5 + $0x4] sm:$0x1]
        %v704 = vld [vmem:[%s5 + $0x5] sm:$0x1]
        %v705 = vld [vmem:[%s5 + $0x6] sm:$0x1]
        %v706 = vld [vmem:[%s5 + $0x7] sm:$0x1]
        %v707 = vld [vmem:[%s5 + $0x8] sm:$0x1]
        %v708 = vld [vmem:[%s5 + $0x9] sm:$0x1]
        %v709 = vld [vmem:[%s5 + $0xa] sm:$0x1]
        %v710 = vld [vmem:[%s5 + $0xb] sm:$0x1]
        %v711 = vld [vmem:[%s5 + $0xc] sm:$0x1]
        %v712 = vld [vmem:[%s5 + $0xd] sm:$0x1]
        %v713 = vld [vmem:[%s5 + $0xe] sm:$0x1]
        %v714 = vld [vmem:[%s5 + $0xf] sm:$0x1]
        %v715 = vld [vmem:[%s5 + $0x10] sm:$0x1]
        %v716 = vld [vmem:[%s5 + $0x11] sm:$0x1]
        %v717 = vld [vmem:[%s5 + $0x12] sm:$0x1]
        %v718 = vld [vmem:[%s5 + $0x13] sm:$0x1]
        %v719 = vld [vmem:[%s5 + $0x14] sm:$0x1]
        %v720 = vld [vmem:[%s5 + $0x15] sm:$0x1]
        %v721 = vld [vmem:[%s5 + $0x16] sm:$0x1]
        %v722 = vld [vmem:[%s5 + $0x17] sm:$0x1]
        %v747 = vperm.slane %v699, 0
        %v748 = vperm.slane %v700, 0
        %v749 = vperm.slane %v701, 0
        %v750 = vperm.slane %v702, 0
        %v751 = vperm.slane %v703, 0
        %v752 = vperm.slane %v704, 0
        %v753 = vperm.slane %v705, 0
        %v754 = vperm.slane %v706, 0
        %v755 = vperm.slane %v707, 0
        %v756 = vperm.slane %v708, 0
        %v757 = vperm.slane %v709, 0
        %v758 = vperm.slane %v710, 0
        %v759 = vperm.slane %v711, 0
        %v760 = vperm.slane %v712, 0
        %v761 = vperm.slane %v713, 0
        %v762 = vperm.slane %v714, 0
        %v763 = vperm.slane %v715, 0
        %v764 = vperm.slane %v716, 0
        %v765 = vperm.slane %v717, 0
        %v766 = vperm.slane %v718, 0
        %v767 = vperm.slane %v719, 0
        %v768 = vperm.slane %v720, 0
        %v769 = vperm.slane %v721, 0
        %v770 = vperm.slane %v722, 0
        %vm795 = vcmask 261120
        %v797 = vsel %vm795, %v602, 0
        %799 = vmatpush.msra.mxu0 0.0
        %800 = vmatpush.msra.mxu0 0.0
        %801 = vmatpush.msra.mxu0 0.0
        %802 = vmatpush.msra.mxu0 0.0
        %803 = vmatpush.msra.mxu0 0.0
        %804 = vmatpush.msra.mxu0 0.0
        %805 = vmatpush.msra.mxu0 0.0
        %806 = vmatpush.msra.mxu0 0.0
        %807 = vmatpush.msra.mxu0 0.0
        %808 = vmatpush.msra.mxu0 0.0
        %809 = vmatpush.msra.mxu0 0.0
        %810 = vmatpush.msra.mxu0 0.0
        %811 = vmatpush.msra.mxu0 %v606
        %812 = vmatpush.msra.mxu0 %v605
        %813 = vmatpush.msra.mxu0 %v604
        %814 = vmatpush.msra.mxu0 %v603
        %815 = vmatmul.f32.gmra.mxu0 %v797
        %v816 = vpop.f32.mrf.mxu0
        %v817 = vadd.f32 %v747, %v816
        %818 = vdwg.mxu0
        %819 = vmatpush.msra.mxu0 0.0
        %820 = vmatpush.msra.mxu0 0.0
        %821 = vmatpush.msra.mxu0 0.0
        %822 = vmatpush.msra.mxu0 0.0
        %823 = vmatpush.msra.mxu0 0.0
        %824 = vmatpush.msra.mxu0 0.0
        %825 = vmatpush.msra.mxu0 0.0
        %826 = vmatpush.msra.mxu0 0.0
        %827 = vmatpush.msra.mxu0 0.0
        %828 = vmatpush.msra.mxu0 0.0
        %829 = vmatpush.msra.mxu0 0.0
        %830 = vmatpush.msra.mxu0 0.0
        %831 = vmatpush.msra.mxu0 %v610
        %832 = vmatpush.msra.mxu0 %v609
        %833 = vmatpush.msra.mxu0 %v608
        %834 = vmatpush.msra.mxu0 %v607
        %835 = vmatmul.f32.gmra.mxu0 %v797
        %v836 = vpop.f32.mrf.mxu0
        %v837 = vadd.f32 %v748, %v836
        %838 = vdwg.mxu0
        %839 = vmatpush.msra.mxu0 0.0
        %840 = vmatpush.msra.mxu0 0.0
        %841 = vmatpush.msra.mxu0 0.0
        %842 = vmatpush.msra.mxu0 0.0
        %843 = vmatpush.msra.mxu0 0.0
        %844 = vmatpush.msra.mxu0 0.0
        %845 = vmatpush.msra.mxu0 0.0
        %846 = vmatpush.msra.mxu0 0.0
        %847 = vmatpush.msra.mxu0 0.0
        %848 = vmatpush.msra.mxu0 0.0
        %849 = vmatpush.msra.mxu0 0.0
        %850 = vmatpush.msra.mxu0 0.0
        %851 = vmatpush.msra.mxu0 %v614
        %852 = vmatpush.msra.mxu0 %v613
        %853 = vmatpush.msra.mxu0 %v612
        %854 = vmatpush.msra.mxu0 %v611
        %855 = vmatmul.f32.gmra.mxu0 %v797
        %v856 = vpop.f32.mrf.mxu0
        %v857 = vadd.f32 %v749, %v856
        %858 = vdwg.mxu0
        %859 = vmatpush.msra.mxu0 0.0
        %860 = vmatpush.msra.mxu0 0.0
        %861 = vmatpush.msra.mxu0 0.0
        %862 = vmatpush.msra.mxu0 0.0
        %863 = vmatpush.msra.mxu0 0.0
        %864 = vmatpush.msra.mxu0 0.0
        %865 = vmatpush.msra.mxu0 0.0
        %866 = vmatpush.msra.mxu0 0.0
        %867 = vmatpush.msra.mxu0 0.0
        %868 = vmatpush.msra.mxu0 0.0
        %869 = vmatpush.msra.mxu0 0.0
        %870 = vmatpush.msra.mxu0 0.0
        %871 = vmatpush.msra.mxu0 %v618
        %872 = vmatpush.msra.mxu0 %v617
        %873 = vmatpush.msra.mxu0 %v616
        %874 = vmatpush.msra.mxu0 %v615
        %875 = vmatmul.f32.gmra.mxu0 %v797
        %v876 = vpop.f32.mrf.mxu0
        %v877 = vadd.f32 %v750, %v876
        %878 = vdwg.mxu0
        %879 = vmatpush.msra.mxu0 0.0
        %880 = vmatpush.msra.mxu0 0.0
        %881 = vmatpush.msra.mxu0 0.0
        %882 = vmatpush.msra.mxu0 0.0
        %883 = vmatpush.msra.mxu0 0.0
        %884 = vmatpush.msra.mxu0 0.0
        %885 = vmatpush.msra.mxu0 0.0
        %886 = vmatpush.msra.mxu0 0.0
        %887 = vmatpush.msra.mxu0 0.0
        %888 = vmatpush.msra.mxu0 0.0
        %889 = vmatpush.msra.mxu0 0.0
        %890 = vmatpush.msra.mxu0 0.0
        %891 = vmatpush.msra.mxu0 %v622
        %892 = vmatpush.msra.mxu0 %v621
        %893 = vmatpush.msra.mxu0 %v620
        %894 = vmatpush.msra.mxu0 %v619
        %895 = vmatmul.f32.gmra.mxu0 %v797
        %v896 = vpop.f32.mrf.mxu0
        %v897 = vadd.f32 %v751, %v896
        %898 = vdwg.mxu0
        %899 = vmatpush.msra.mxu0 0.0
        %900 = vmatpush.msra.mxu0 0.0
        %901 = vmatpush.msra.mxu0 0.0
        %902 = vmatpush.msra.mxu0 0.0
        %903 = vmatpush.msra.mxu0 0.0
        %904 = vmatpush.msra.mxu0 0.0
        %905 = vmatpush.msra.mxu0 0.0
        %906 = vmatpush.msra.mxu0 0.0
        %907 = vmatpush.msra.mxu0 0.0
        %908 = vmatpush.msra.mxu0 0.0
        %909 = vmatpush.msra.mxu0 0.0
        %910 = vmatpush.msra.mxu0 0.0
        %911 = vmatpush.msra.mxu0 %v626
        %912 = vmatpush.msra.mxu0 %v625
        %913 = vmatpush.msra.mxu0 %v624
        %914 = vmatpush.msra.mxu0 %v623
        %915 = vmatmul.f32.gmra.mxu0 %v797
        %v916 = vpop.f32.mrf.mxu0
        %v917 = vadd.f32 %v752, %v916
        %918 = vdwg.mxu0
        %919 = vmatpush.msra.mxu0 0.0
        %920 = vmatpush.msra.mxu0 0.0
        %921 = vmatpush.msra.mxu0 0.0
        %922 = vmatpush.msra.mxu0 0.0
        %923 = vmatpush.msra.mxu0 0.0
        %924 = vmatpush.msra.mxu0 0.0
        %925 = vmatpush.msra.mxu0 0.0
        %926 = vmatpush.msra.mxu0 0.0
        %927 = vmatpush.msra.mxu0 0.0
        %928 = vmatpush.msra.mxu0 0.0
        %929 = vmatpush.msra.mxu0 0.0
        %930 = vmatpush.msra.mxu0 0.0
        %931 = vmatpush.msra.mxu0 %v630
        %932 = vmatpush.msra.mxu0 %v629
        %933 = vmatpush.msra.mxu0 %v628
        %934 = vmatpush.msra.mxu0 %v627
        %935 = vmatmul.f32.gmra.mxu0 %v797
        %v936 = vpop.f32.mrf.mxu0
        %v937 = vadd.f32 %v753, %v936
        %938 = vdwg.mxu0
        %939 = vmatpush.msra.mxu0 0.0
        %940 = vmatpush.msra.mxu0 0.0
        %941 = vmatpush.msra.mxu0 0.0
        %942 = vmatpush.msra.mxu0 0.0
        %943 = vmatpush.msra.mxu0 0.0
        %944 = vmatpush.msra.mxu0 0.0
        %945 = vmatpush.msra.mxu0 0.0
        %946 = vmatpush.msra.mxu0 0.0
        %947 = vmatpush.msra.mxu0 0.0
        %948 = vmatpush.msra.mxu0 0.0
        %949 = vmatpush.msra.mxu0 0.0
        %950 = vmatpush.msra.mxu0 0.0
        %951 = vmatpush.msra.mxu0 %v634
        %952 = vmatpush.msra.mxu0 %v633
        %953 = vmatpush.msra.mxu0 %v632
        %954 = vmatpush.msra.mxu0 %v631
        %955 = vmatmul.f32.gmra.mxu0 %v797
        %v956 = vpop.f32.mrf.mxu0
        %v957 = vadd.f32 %v754, %v956
        %958 = vdwg.mxu0
        %959 = vmatpush.msra.mxu0 0.0
        %960 = vmatpush.msra.mxu0 0.0
        %961 = vmatpush.msra.mxu0 0.0
        %962 = vmatpush.msra.mxu0 0.0
        %963 = vmatpush.msra.mxu0 0.0
        %964 = vmatpush.msra.mxu0 0.0
        %965 = vmatpush.msra.mxu0 0.0
        %966 = vmatpush.msra.mxu0 0.0
        %967 = vmatpush.msra.mxu0 0.0
        %968 = vmatpush.msra.mxu0 0.0
        %969 = vmatpush.msra.mxu0 0.0
        %970 = vmatpush.msra.mxu0 0.0
        %971 = vmatpush.msra.mxu0 %v638
        %972 = vmatpush.msra.mxu0 %v637
        %973 = vmatpush.msra.mxu0 %v636
        %974 = vmatpush.msra.mxu0 %v635
        %975 = vmatmul.f32.gmra.mxu0 %v797
        %v976 = vpop.f32.mrf.mxu0
        %v977 = vadd.f32 %v755, %v976
        %978 = vdwg.mxu0
        %979 = vmatpush.msra.mxu0 0.0
        %980 = vmatpush.msra.mxu0 0.0
        %981 = vmatpush.msra.mxu0 0.0
        %982 = vmatpush.msra.mxu0 0.0
        %983 = vmatpush.msra.mxu0 0.0
        %984 = vmatpush.msra.mxu0 0.0
        %985 = vmatpush.msra.mxu0 0.0
        %986 = vmatpush.msra.mxu0 0.0
        %987 = vmatpush.msra.mxu0 0.0
        %988 = vmatpush.msra.mxu0 0.0
        %989 = vmatpush.msra.mxu0 0.0
        %990 = vmatpush.msra.mxu0 0.0
        %991 = vmatpush.msra.mxu0 %v642
        %992 = vmatpush.msra.mxu0 %v641
        %993 = vmatpush.msra.mxu0 %v640
        %994 = vmatpush.msra.mxu0 %v639
        %995 = vmatmul.f32.gmra.mxu0 %v797
        %v996 = vpop.f32.mrf.mxu0
        %v997 = vadd.f32 %v756, %v996
        %998 = vdwg.mxu0
        %999 = vmatpush.msra.mxu0 0.0
        %1000 = vmatpush.msra.mxu0 0.0
        %1001 = vmatpush.msra.mxu0 0.0
        %1002 = vmatpush.msra.mxu0 0.0
        %1003 = vmatpush.msra.mxu0 0.0
        %1004 = vmatpush.msra.mxu0 0.0
        %1005 = vmatpush.msra.mxu0 0.0
        %1006 = vmatpush.msra.mxu0 0.0
        %1007 = vmatpush.msra.mxu0 0.0
        %1008 = vmatpush.msra.mxu0 0.0
        %1009 = vmatpush.msra.mxu0 0.0
        %1010 = vmatpush.msra.mxu0 0.0
        %1011 = vmatpush.msra.mxu0 %v646
        %1012 = vmatpush.msra.mxu0 %v645
        %1013 = vmatpush.msra.mxu0 %v644
        %1014 = vmatpush.msra.mxu0 %v643
        %1015 = vmatmul.f32.gmra.mxu0 %v797
        %v1016 = vpop.f32.mrf.mxu0
        %v1017 = vadd.f32 %v757, %v1016
        %1018 = vdwg.mxu0
        %1019 = vmatpush.msra.mxu0 0.0
        %1020 = vmatpush.msra.mxu0 0.0
        %1021 = vmatpush.msra.mxu0 0.0
        %1022 = vmatpush.msra.mxu0 0.0
        %1023 = vmatpush.msra.mxu0 0.0
        %1024 = vmatpush.msra.mxu0 0.0
        %1025 = vmatpush.msra.mxu0 0.0
        %1026 = vmatpush.msra.mxu0 0.0
        %1027 = vmatpush.msra.mxu0 0.0
        %1028 = vmatpush.msra.mxu0 0.0
        %1029 = vmatpush.msra.mxu0 0.0
        %1030 = vmatpush.msra.mxu0 0.0
        %1031 = vmatpush.msra.mxu0 %v650
        %1032 = vmatpush.msra.mxu0 %v649
        %1033 = vmatpush.msra.mxu0 %v648
        %1034 = vmatpush.msra.mxu0 %v647
        %1035 = vmatmul.f32.gmra.mxu0 %v797
        %v1036 = vpop.f32.mrf.mxu0
        %v1037 = vadd.f32 %v758, %v1036
        %1038 = vdwg.mxu0
        %1039 = vmatpush.msra.mxu0 0.0
        %1040 = vmatpush.msra.mxu0 0.0
        %1041 = vmatpush.msra.mxu0 0.0
        %1042 = vmatpush.msra.mxu0 0.0
        %1043 = vmatpush.msra.mxu0 0.0
        %1044 = vmatpush.msra.mxu0 0.0
        %1045 = vmatpush.msra.mxu0 0.0
        %1046 = vmatpush.msra.mxu0 0.0
        %1047 = vmatpush.msra.mxu0 0.0
        %1048 = vmatpush.msra.mxu0 0.0
        %1049 = vmatpush.msra.mxu0 0.0
        %1050 = vmatpush.msra.mxu0 0.0
        %1051 = vmatpush.msra.mxu0 %v654
        %1052 = vmatpush.msra.mxu0 %v653
        %1053 = vmatpush.msra.mxu0 %v652
        %1054 = vmatpush.msra.mxu0 %v651
        %1055 = vmatmul.f32.gmra.mxu0 %v797
        %v1056 = vpop.f32.mrf.mxu0
        %v1057 = vadd.f32 %v759, %v1056
        %1058 = vdwg.mxu0
        %1059 = vmatpush.msra.mxu0 0.0
        %1060 = vmatpush.msra.mxu0 0.0
        %1061 = vmatpush.msra.mxu0 0.0
        %1062 = vmatpush.msra.mxu0 0.0
        %1063 = vmatpush.msra.mxu0 0.0
        %1064 = vmatpush.msra.mxu0 0.0
        %1065 = vmatpush.msra.mxu0 0.0
        %1066 = vmatpush.msra.mxu0 0.0
        %1067 = vmatpush.msra.mxu0 0.0
        %1068 = vmatpush.msra.mxu0 0.0
        %1069 = vmatpush.msra.mxu0 0.0
        %1070 = vmatpush.msra.mxu0 0.0
        %1071 = vmatpush.msra.mxu0 %v658
        %1072 = vmatpush.msra.mxu0 %v657
        %1073 = vmatpush.msra.mxu0 %v656
        %1074 = vmatpush.msra.mxu0 %v655
        %1075 = vmatmul.f32.gmra.mxu0 %v797
        %v1076 = vpop.f32.mrf.mxu0
        %v1077 = vadd.f32 %v760, %v1076
        %1078 = vdwg.mxu0
        %1079 = vmatpush.msra.mxu0 0.0
        %1080 = vmatpush.msra.mxu0 0.0
        %1081 = vmatpush.msra.mxu0 0.0
        %1082 = vmatpush.msra.mxu0 0.0
        %1083 = vmatpush.msra.mxu0 0.0
        %1084 = vmatpush.msra.mxu0 0.0
        %1085 = vmatpush.msra.mxu0 0.0
        %1086 = vmatpush.msra.mxu0 0.0
        %1087 = vmatpush.msra.mxu0 0.0
        %1088 = vmatpush.msra.mxu0 0.0
        %1089 = vmatpush.msra.mxu0 0.0
        %1090 = vmatpush.msra.mxu0 0.0
        %1091 = vmatpush.msra.mxu0 %v662
        %1092 = vmatpush.msra.mxu0 %v661
        %1093 = vmatpush.msra.mxu0 %v660
        %1094 = vmatpush.msra.mxu0 %v659
        %1095 = vmatmul.f32.gmra.mxu0 %v797
        %v1096 = vpop.f32.mrf.mxu0
        %v1097 = vadd.f32 %v761, %v1096
        %1098 = vdwg.mxu0
        %1099 = vmatpush.msra.mxu0 0.0
        %1100 = vmatpush.msra.mxu0 0.0
        %1101 = vmatpush.msra.mxu0 0.0
        %1102 = vmatpush.msra.mxu0 0.0
        %1103 = vmatpush.msra.mxu0 0.0
        %1104 = vmatpush.msra.mxu0 0.0
        %1105 = vmatpush.msra.mxu0 0.0
        %1106 = vmatpush.msra.mxu0 0.0
        %1107 = vmatpush.msra.mxu0 0.0
        %1108 = vmatpush.msra.mxu0 0.0
        %1109 = vmatpush.msra.mxu0 0.0
        %1110 = vmatpush.msra.mxu0 0.0
        %1111 = vmatpush.msra.mxu0 %v666
        %1112 = vmatpush.msra.mxu0 %v665
        %1113 = vmatpush.msra.mxu0 %v664
        %1114 = vmatpush.msra.mxu0 %v663
        %1115 = vmatmul.f32.gmra.mxu0 %v797
        %v1116 = vpop.f32.mrf.mxu0
        %v1117 = vadd.f32 %v762, %v1116
        %1118 = vdwg.mxu0
        %1119 = vmatpush.msra.mxu0 0.0
        %1120 = vmatpush.msra.mxu0 0.0
        %1121 = vmatpush.msra.mxu0 0.0
        %1122 = vmatpush.msra.mxu0 0.0
        %1123 = vmatpush.msra.mxu0 0.0
        %1124 = vmatpush.msra.mxu0 0.0
        %1125 = vmatpush.msra.mxu0 0.0
        %1126 = vmatpush.msra.mxu0 0.0
        %1127 = vmatpush.msra.mxu0 0.0
        %1128 = vmatpush.msra.mxu0 0.0
        %1129 = vmatpush.msra.mxu0 0.0
        %1130 = vmatpush.msra.mxu0 0.0
        %1131 = vmatpush.msra.mxu0 %v670
        %1132 = vmatpush.msra.mxu0 %v669
        %1133 = vmatpush.msra.mxu0 %v668
        %1134 = vmatpush.msra.mxu0 %v667
        %1135 = vmatmul.f32.gmra.mxu0 %v797
        %v1136 = vpop.f32.mrf.mxu0
        %v1137 = vadd.f32 %v763, %v1136
        %1138 = vdwg.mxu0
        %1139 = vmatpush.msra.mxu0 0.0
        %1140 = vmatpush.msra.mxu0 0.0
        %1141 = vmatpush.msra.mxu0 0.0
        %1142 = vmatpush.msra.mxu0 0.0
        %1143 = vmatpush.msra.mxu0 0.0
        %1144 = vmatpush.msra.mxu0 0.0
        %1145 = vmatpush.msra.mxu0 0.0
        %1146 = vmatpush.msra.mxu0 0.0
        %1147 = vmatpush.msra.mxu0 0.0
        %1148 = vmatpush.msra.mxu0 0.0
        %1149 = vmatpush.msra.mxu0 0.0
        %1150 = vmatpush.msra.mxu0 0.0
        %1151 = vmatpush.msra.mxu0 %v674
        %1152 = vmatpush.msra.mxu0 %v673
        %1153 = vmatpush.msra.mxu0 %v672
        %1154 = vmatpush.msra.mxu0 %v671
        %1155 = vmatmul.f32.gmra.mxu0 %v797
        %v1156 = vpop.f32.mrf.mxu0
        %v1157 = vadd.f32 %v764, %v1156
        %1158 = vdwg.mxu0
        %1159 = vmatpush.msra.mxu0 0.0
        %1160 = vmatpush.msra.mxu0 0.0
        %1161 = vmatpush.msra.mxu0 0.0
        %1162 = vmatpush.msra.mxu0 0.0
        %1163 = vmatpush.msra.mxu0 0.0
        %1164 = vmatpush.msra.mxu0 0.0
        %1165 = vmatpush.msra.mxu0 0.0
        %1166 = vmatpush.msra.mxu0 0.0
        %1167 = vmatpush.msra.mxu0 0.0
        %1168 = vmatpush.msra.mxu0 0.0
        %1169 = vmatpush.msra.mxu0 0.0
        %1170 = vmatpush.msra.mxu0 0.0
        %1171 = vmatpush.msra.mxu0 %v678
        %1172 = vmatpush.msra.mxu0 %v677
        %1173 = vmatpush.msra.mxu0 %v676
        %1174 = vmatpush.msra.mxu0 %v675
        %1175 = vmatmul.f32.gmra.mxu0 %v797
        %v1176 = vpop.f32.mrf.mxu0
        %v1177 = vadd.f32 %v765, %v1176
        %1178 = vdwg.mxu0
        %1179 = vmatpush.msra.mxu0 0.0
        %1180 = vmatpush.msra.mxu0 0.0
        %1181 = vmatpush.msra.mxu0 0.0
        %1182 = vmatpush.msra.mxu0 0.0
        %1183 = vmatpush.msra.mxu0 0.0
        %1184 = vmatpush.msra.mxu0 0.0
        %1185 = vmatpush.msra.mxu0 0.0
        %1186 = vmatpush.msra.mxu0 0.0
        %1187 = vmatpush.msra.mxu0 0.0
        %1188 = vmatpush.msra.mxu0 0.0
        %1189 = vmatpush.msra.mxu0 0.0
        %1190 = vmatpush.msra.mxu0 0.0
        %1191 = vmatpush.msra.mxu0 %v682
        %1192 = vmatpush.msra.mxu0 %v681
        %1193 = vmatpush.msra.mxu0 %v680
        %1194 = vmatpush.msra.mxu0 %v679
        %1195 = vmatmul.f32.gmra.mxu0 %v797
        %v1196 = vpop.f32.mrf.mxu0
        %v1197 = vadd.f32 %v766, %v1196
        %1198 = vdwg.mxu0
        %1199 = vmatpush.msra.mxu0 0.0
        %1200 = vmatpush.msra.mxu0 0.0
        %1201 = vmatpush.msra.mxu0 0.0
        %1202 = vmatpush.msra.mxu0 0.0
        %1203 = vmatpush.msra.mxu0 0.0
        %1204 = vmatpush.msra.mxu0 0.0
        %1205 = vmatpush.msra.mxu0 0.0
        %1206 = vmatpush.msra.mxu0 0.0
        %1207 = vmatpush.msra.mxu0 0.0
        %1208 = vmatpush.msra.mxu0 0.0
        %1209 = vmatpush.msra.mxu0 0.0
        %1210 = vmatpush.msra.mxu0 0.0
        %1211 = vmatpush.msra.mxu0 %v686
        %1212 = vmatpush.msra.mxu0 %v685
        %1213 = vmatpush.msra.mxu0 %v684
        %1214 = vmatpush.msra.mxu0 %v683
        %1215 = vmatmul.f32.gmra.mxu0 %v797
        %v1216 = vpop.f32.mrf.mxu0
        %v1217 = vadd.f32 %v767, %v1216
        %1218 = vdwg.mxu0
        %1219 = vmatpush.msra.mxu0 0.0
        %1220 = vmatpush.msra.mxu0 0.0
        %1221 = vmatpush.msra.mxu0 0.0
        %1222 = vmatpush.msra.mxu0 0.0
        %1223 = vmatpush.msra.mxu0 0.0
        %1224 = vmatpush.msra.mxu0 0.0
        %1225 = vmatpush.msra.mxu0 0.0
        %1226 = vmatpush.msra.mxu0 0.0
        %1227 = vmatpush.msra.mxu0 0.0
        %1228 = vmatpush.msra.mxu0 0.0
        %1229 = vmatpush.msra.mxu0 0.0
        %1230 = vmatpush.msra.mxu0 0.0
        %1231 = vmatpush.msra.mxu0 %v690
        %1232 = vmatpush.msra.mxu0 %v689
        %1233 = vmatpush.msra.mxu0 %v688
        %1234 = vmatpush.msra.mxu0 %v687
        %1235 = vmatmul.f32.gmra.mxu0 %v797
        %v1236 = vpop.f32.mrf.mxu0
        %v1237 = vadd.f32 %v768, %v1236
        %1238 = vdwg.mxu0
        %1239 = vmatpush.msra.mxu0 0.0
        %1240 = vmatpush.msra.mxu0 0.0
        %1241 = vmatpush.msra.mxu0 0.0
        %1242 = vmatpush.msra.mxu0 0.0
        %1243 = vmatpush.msra.mxu0 0.0
        %1244 = vmatpush.msra.mxu0 0.0
        %1245 = vmatpush.msra.mxu0 0.0
        %1246 = vmatpush.msra.mxu0 0.0
        %1247 = vmatpush.msra.mxu0 0.0
        %1248 = vmatpush.msra.mxu0 0.0
        %1249 = vmatpush.msra.mxu0 0.0
        %1250 = vmatpush.msra.mxu0 0.0
        %1251 = vmatpush.msra.mxu0 %v694
        %1252 = vmatpush.msra.mxu0 %v693
        %1253 = vmatpush.msra.mxu0 %v692
        %1254 = vmatpush.msra.mxu0 %v691
        %1255 = vmatmul.f32.gmra.mxu0 %v797
        %v1256 = vpop.f32.mrf.mxu0
        %v1257 = vadd.f32 %v769, %v1256
        %1258 = vdwg.mxu0
        %1259 = vmatpush.msra.mxu0 0.0
        %1260 = vmatpush.msra.mxu0 0.0
        %1261 = vmatpush.msra.mxu0 0.0
        %1262 = vmatpush.msra.mxu0 0.0
        %1263 = vmatpush.msra.mxu0 0.0
        %1264 = vmatpush.msra.mxu0 0.0
        %1265 = vmatpush.msra.mxu0 0.0
        %1266 = vmatpush.msra.mxu0 0.0
        %1267 = vmatpush.msra.mxu0 0.0
        %1268 = vmatpush.msra.mxu0 0.0
        %1269 = vmatpush.msra.mxu0 0.0
        %1270 = vmatpush.msra.mxu0 0.0
        %1271 = vmatpush.msra.mxu0 %v698
        %1272 = vmatpush.msra.mxu0 %v697
        %1273 = vmatpush.msra.mxu0 %v696
        %1274 = vmatpush.msra.mxu0 %v695
        %1275 = vmatmul.f32.gmra.mxu0 %v797
        %v1276 = vpop.f32.mrf.mxu0
        %v1277 = vadd.f32 %v770, %v1276
        %1278 = vdwg.mxu0
        %vm1279 = vcmask 31744
        %v1281 = vsel %vm1279, %v817, 0
        %v1284 = vsel %vm1279, %v977, 0
        %1286 = vmatpush.xpose.msra.mxu0 0.0
        %1287 = vmatpush.xpose.msra.mxu0 0.0
        %1288 = vmatpush.xpose.msra.mxu0 0.0
        %1289 = vmatpush.xpose.msra.mxu0 0.0
        %1290 = vmatpush.xpose.msra.mxu0 0.0
        %1291 = vmatpush.xpose.msra.mxu0 0.0
        %1292 = vmatpush.xpose.msra.mxu0 0.0
        %1293 = vmatpush.xpose.msra.mxu0 0.0
        %1294 = vmatpush.xpose.msra.mxu0 0.0
        %1295 = vmatpush.xpose.msra.mxu0 0.0
        %1296 = vmatpush.xpose.msra.mxu0 0.0
        %1297 = vmatpush.xpose.msra.mxu0 0.0
        %1298 = vmatpush.xpose.msra.mxu0 0.0
        %1299 = vmatpush.xpose.msra.mxu0 0.0
        %1300 = vmatpush.xpose.msra.mxu0 0.0
        %1301 = vmatpush.xpose.msra.mxu0 %v1284
        %1302 = vmatmul.f32.gmra.mxu0 %v1281
        %v1303 = vpop.f32.mrf.mxu0
        %v1304 = vadd.f32 0.0, %v1303
        %1305 = vdwg.mxu0
        %v1307 = vsel %vm1279, %v837, 0
        %v1310 = vsel %vm1279, %v997, 0
        %1312 = vmatpush.xpose.msra.mxu0 0.0
        %1313 = vmatpush.xpose.msra.mxu0 0.0
        %1314 = vmatpush.xpose.msra.mxu0 0.0
        %1315 = vmatpush.xpose.msra.mxu0 0.0
        %1316 = vmatpush.xpose.msra.mxu0 0.0
        %1317 = vmatpush.xpose.msra.mxu0 0.0
        %1318 = vmatpush.xpose.msra.mxu0 0.0
        %1319 = vmatpush.xpose.msra.mxu0 0.0
        %1320 = vmatpush.xpose.msra.mxu0 0.0
        %1321 = vmatpush.xpose.msra.mxu0 0.0
        %1322 = vmatpush.xpose.msra.mxu0 0.0
        %1323 = vmatpush.xpose.msra.mxu0 0.0
        %1324 = vmatpush.xpose.msra.mxu0 0.0
        %1325 = vmatpush.xpose.msra.mxu0 0.0
        %1326 = vmatpush.xpose.msra.mxu0 0.0
        %1327 = vmatpush.xpose.msra.mxu0 %v1310
        %1328 = vmatmul.f32.gmra.mxu0 %v1307
        %v1329 = vpop.f32.mrf.mxu0
        %v1330 = vadd.f32 0.0, %v1329
        %1331 = vdwg.mxu0
        %v1333 = vsel %vm1279, %v857, 0
        %v1336 = vsel %vm1279, %v1017, 0
        %1338 = vmatpush.xpose.msra.mxu0 0.0
        %1339 = vmatpush.xpose.msra.mxu0 0.0
        %1340 = vmatpush.xpose.msra.mxu0 0.0
        %1341 = vmatpush.xpose.msra.mxu0 0.0
        %1342 = vmatpush.xpose.msra.mxu0 0.0
        %1343 = vmatpush.xpose.msra.mxu0 0.0
        %1344 = vmatpush.xpose.msra.mxu0 0.0
        %1345 = vmatpush.xpose.msra.mxu0 0.0
        %1346 = vmatpush.xpose.msra.mxu0 0.0
        %1347 = vmatpush.xpose.msra.mxu0 0.0
        %1348 = vmatpush.xpose.msra.mxu0 0.0
        %1349 = vmatpush.xpose.msra.mxu0 0.0
        %1350 = vmatpush.xpose.msra.mxu0 0.0
        %1351 = vmatpush.xpose.msra.mxu0 0.0
        %1352 = vmatpush.xpose.msra.mxu0 0.0
        %1353 = vmatpush.xpose.msra.mxu0 %v1336
        %1354 = vmatmul.f32.gmra.mxu0 %v1333
        %v1355 = vpop.f32.mrf.mxu0
        %v1356 = vadd.f32 0.0, %v1355
        %1357 = vdwg.mxu0
        %v1359 = vsel %vm1279, %v877, 0
        %v1362 = vsel %vm1279, %v1037, 0
        %1364 = vmatpush.xpose.msra.mxu0 0.0
        %1365 = vmatpush.xpose.msra.mxu0 0.0
        %1366 = vmatpush.xpose.msra.mxu0 0.0
        %1367 = vmatpush.xpose.msra.mxu0 0.0
        %1368 = vmatpush.xpose.msra.mxu0 0.0
        %1369 = vmatpush.xpose.msra.mxu0 0.0
        %1370 = vmatpush.xpose.msra.mxu0 0.0
        %1371 = vmatpush.xpose.msra.mxu0 0.0
        %1372 = vmatpush.xpose.msra.mxu0 0.0
        %1373 = vmatpush.xpose.msra.mxu0 0.0
        %1374 = vmatpush.xpose.msra.mxu0 0.0
        %1375 = vmatpush.xpose.msra.mxu0 0.0
        %1376 = vmatpush.xpose.msra.mxu0 0.0
        %1377 = vmatpush.xpose.msra.mxu0 0.0
        %1378 = vmatpush.xpose.msra.mxu0 0.0
        %1379 = vmatpush.xpose.msra.mxu0 %v1362
        %1380 = vmatmul.f32.gmra.mxu0 %v1359
        %v1381 = vpop.f32.mrf.mxu0
        %v1382 = vadd.f32 0.0, %v1381
        %1383 = vdwg.mxu0
        %v1385 = vsel %vm1279, %v897, 0
        %v1388 = vsel %vm1279, %v1057, 0
        %1390 = vmatpush.xpose.msra.mxu0 0.0
        %1391 = vmatpush.xpose.msra.mxu0 0.0
        %1392 = vmatpush.xpose.msra.mxu0 0.0
        %1393 = vmatpush.xpose.msra.mxu0 0.0
        %1394 = vmatpush.xpose.msra.mxu0 0.0
        %1395 = vmatpush.xpose.msra.mxu0 0.0
        %1396 = vmatpush.xpose.msra.mxu0 0.0
        %1397 = vmatpush.xpose.msra.mxu0 0.0
        %1398 = vmatpush.xpose.msra.mxu0 0.0
        %1399 = vmatpush.xpose.msra.mxu0 0.0
        %1400 = vmatpush.xpose.msra.mxu0 0.0
        %1401 = vmatpush.xpose.msra.mxu0 0.0
        %1402 = vmatpush.xpose.msra.mxu0 0.0
        %1403 = vmatpush.xpose.msra.mxu0 0.0
        %1404 = vmatpush.xpose.msra.mxu0 0.0
        %1405 = vmatpush.xpose.msra.mxu0 %v1388
        %1406 = vmatmul.f32.gmra.mxu0 %v1385
        %v1407 = vpop.f32.mrf.mxu0
        %v1408 = vadd.f32 0.0, %v1407
        %1409 = vdwg.mxu0
        %v1411 = vsel %vm1279, %v917, 0
        %v1414 = vsel %vm1279, %v1077, 0
        %1416 = vmatpush.xpose.msra.mxu0 0.0
        %1417 = vmatpush.xpose.msra.mxu0 0.0
        %1418 = vmatpush.xpose.msra.mxu0 0.0
        %1419 = vmatpush.xpose.msra.mxu0 0.0
        %1420 = vmatpush.xpose.msra.mxu0 0.0
        %1421 = vmatpush.xpose.msra.mxu0 0.0
        %1422 = vmatpush.xpose.msra.mxu0 0.0
        %1423 = vmatpush.xpose.msra.mxu0 0.0
        %1424 = vmatpush.xpose.msra.mxu0 0.0
        %1425 = vmatpush.xpose.msra.mxu0 0.0
        %1426 = vmatpush.xpose.msra.mxu0 0.0
        %1427 = vmatpush.xpose.msra.mxu0 0.0
        %1428 = vmatpush.xpose.msra.mxu0 0.0
        %1429 = vmatpush.xpose.msra.mxu0 0.0
        %1430 = vmatpush.xpose.msra.mxu0 0.0
        %1431 = vmatpush.xpose.msra.mxu0 %v1414
        %1432 = vmatmul.f32.gmra.mxu0 %v1411
        %v1433 = vpop.f32.mrf.mxu0
        %v1434 = vadd.f32 0.0, %v1433
        %1435 = vdwg.mxu0
        %v1437 = vsel %vm1279, %v937, 0
        %v1440 = vsel %vm1279, %v1097, 0
        %1442 = vmatpush.xpose.msra.mxu0 0.0
        %1443 = vmatpush.xpose.msra.mxu0 0.0
        %1444 = vmatpush.xpose.msra.mxu0 0.0
        %1445 = vmatpush.xpose.msra.mxu0 0.0
        %1446 = vmatpush.xpose.msra.mxu0 0.0
        %1447 = vmatpush.xpose.msra.mxu0 0.0
        %1448 = vmatpush.xpose.msra.mxu0 0.0
        %1449 = vmatpush.xpose.msra.mxu0 0.0
        %1450 = vmatpush.xpose.msra.mxu0 0.0
        %1451 = vmatpush.xpose.msra.mxu0 0.0
        %1452 = vmatpush.xpose.msra.mxu0 0.0
        %1453 = vmatpush.xpose.msra.mxu0 0.0
        %1454 = vmatpush.xpose.msra.mxu0 0.0
        %1455 = vmatpush.xpose.msra.mxu0 0.0
        %1456 = vmatpush.xpose.msra.mxu0 0.0
        %1457 = vmatpush.xpose.msra.mxu0 %v1440
        %1458 = vmatmul.f32.gmra.mxu0 %v1437
        %v1459 = vpop.f32.mrf.mxu0
        %v1460 = vadd.f32 0.0, %v1459
        %1461 = vdwg.mxu0
        %v1463 = vsel %vm1279, %v957, 0
        %v1466 = vsel %vm1279, %v1117, 0
        %1468 = vmatpush.xpose.msra.mxu0 0.0
        %1469 = vmatpush.xpose.msra.mxu0 0.0
        %1470 = vmatpush.xpose.msra.mxu0 0.0
        %1471 = vmatpush.xpose.msra.mxu0 0.0
        %1472 = vmatpush.xpose.msra.mxu0 0.0
        %1473 = vmatpush.xpose.msra.mxu0 0.0
        %1474 = vmatpush.xpose.msra.mxu0 0.0
        %1475 = vmatpush.xpose.msra.mxu0 0.0
        %1476 = vmatpush.xpose.msra.mxu0 0.0
        %1477 = vmatpush.xpose.msra.mxu0 0.0
        %1478 = vmatpush.xpose.msra.mxu0 0.0
        %1479 = vmatpush.xpose.msra.mxu0 0.0
        %1480 = vmatpush.xpose.msra.mxu0 0.0
        %1481 = vmatpush.xpose.msra.mxu0 0.0
        %1482 = vmatpush.xpose.msra.mxu0 0.0
        %1483 = vmatpush.xpose.msra.mxu0 %v1466
        %1484 = vmatmul.f32.gmra.mxu0 %v1463
        %v1485 = vpop.f32.mrf.mxu0
        %v1486 = vadd.f32 0.0, %v1485
        %1487 = vdwg.mxu0
        %v1488 = vsel %vm577, %v1304, -inf
        %1489 = vmax.xlane.f32.xlu0 %v1488
        %v1490 = vpop.xlane.xlu0 %1489
        %v1491 = vsel %vm577, %v1330, -inf
        %1492 = vmax.xlane.f32.xlu0 %v1491
        %v1493 = vpop.xlane.xlu0 %1492
        %v1494 = vsel %vm577, %v1356, -inf
        %1495 = vmax.xlane.f32.xlu0 %v1494
        %v1496 = vpop.xlane.xlu0 %1495
        %v1497 = vsel %vm577, %v1382, -inf
        %1498 = vmax.xlane.f32.xlu0 %v1497
        %v1499 = vpop.xlane.xlu0 %1498
        %v1500 = vsel %vm577, %v1408, -inf
        %1501 = vmax.xlane.f32.xlu0 %v1500
        %v1502 = vpop.xlane.xlu0 %1501
        %v1503 = vsel %vm577, %v1434, -inf
        %1504 = vmax.xlane.f32.xlu0 %v1503
        %v1505 = vpop.xlane.xlu0 %1504
        %v1506 = vsel %vm577, %v1460, -inf
        %1507 = vmax.xlane.f32.xlu0 %v1506
        %v1508 = vpop.xlane.xlu0 %1507
        %v1509 = vsel %vm577, %v1486, -inf
        %1510 = vmax.xlane.f32.xlu0 %v1509
        %v1511 = vpop.xlane.xlu0 %1510
        %v1512 = vsub.f32 %v1304, %v1490
        %v1513 = vsub.f32 %v1330, %v1493
        %v1514 = vsub.f32 %v1356, %v1496
        %v1515 = vsub.f32 %v1382, %v1499
        %v1516 = vsub.f32 %v1408, %v1502
        %v1517 = vsub.f32 %v1434, %v1505
        %v1518 = vsub.f32 %v1460, %v1508
        %v1519 = vsub.f32 %v1486, %v1511
        %v1520 = vmul.f32 %v1512, 1.442695
        %v1521 = vpow.pop %v1520
        %v1522 = vmul.f32 %v1513, 1.442695
        %v1523 = vpow.pop %v1522
        %v1524 = vmul.f32 %v1514, 1.442695
        %v1525 = vpow.pop %v1524
        %v1526 = vmul.f32 %v1515, 1.442695
        %v1527 = vpow.pop %v1526
        %v1528 = vmul.f32 %v1516, 1.442695
        %v1529 = vpow.pop %v1528
        %v1530 = vmul.f32 %v1517, 1.442695
        %v1531 = vpow.pop %v1530
        %v1532 = vmul.f32 %v1518, 1.442695
        %v1533 = vpow.pop %v1532
        %v1534 = vmul.f32 %v1519, 1.442695
        %v1535 = vpow.pop %v1534
        %v1536 = vsel %vm577, %v1521, 0.0
        %1537 = vadd.xlane.f32.xlu0 %v1536
        %v1538 = vpop.xlane.xlu0 %1537
        %v1539 = vsel %vm577, %v1523, 0.0
        %1540 = vadd.xlane.f32.xlu0 %v1539
        %v1541 = vpop.xlane.xlu0 %1540
        %v1542 = vsel %vm577, %v1525, 0.0
        %1543 = vadd.xlane.f32.xlu0 %v1542
        %v1544 = vpop.xlane.xlu0 %1543
        %v1545 = vsel %vm577, %v1527, 0.0
        %1546 = vadd.xlane.f32.xlu0 %v1545
        %v1547 = vpop.xlane.xlu0 %1546
        %v1548 = vsel %vm577, %v1529, 0.0
        %1549 = vadd.xlane.f32.xlu0 %v1548
        %v1550 = vpop.xlane.xlu0 %1549
        %v1551 = vsel %vm577, %v1531, 0.0
        %1552 = vadd.xlane.f32.xlu0 %v1551
        %v1553 = vpop.xlane.xlu0 %1552
        %v1554 = vsel %vm577, %v1533, 0.0
        %1555 = vadd.xlane.f32.xlu0 %v1554
        %v1556 = vpop.xlane.xlu0 %1555
        %v1557 = vsel %vm577, %v1535, 0.0
        %1558 = vadd.xlane.f32.xlu0 %v1557
        %v1559 = vpop.xlane.xlu0 %1558
        %v1560 = vrcp.pop %v1538
        %v1561 = vmul.f32 %v1538, %v1560
        %v1562 = vsub.f32 1.0, %v1561
        %v1563 = vmul.f32 %v1560, %v1562
        %v1564 = vadd.f32 %v1560, %v1563
        %vm1565 = vweird.f32 %v1538
        %vm1566 = vweird.f32 %v1560
        %vm1567 = vmor %vm1565, %vm1566
        %v1568 = vsel %vm1567, %v1560, %v1564
        %v1569 = vand.u32 2147483647, %v1538
        %vm1570 = vcmp.eq.f32.partialorder %v1569, 8.507059e+37
        %v1571 = vand.u32 %v1538, 2147483648
        %v1572 = vor.u32 1.1754944e-38, %v1571
        %v1573 = vsel %vm1570, %v1572, %v1568
        %v1574 = vrcp.pop %v1541
        %v1575 = vmul.f32 %v1541, %v1574
        %v1576 = vsub.f32 1.0, %v1575
        %v1577 = vmul.f32 %v1574, %v1576
        %v1578 = vadd.f32 %v1574, %v1577
        %vm1579 = vweird.f32 %v1541
        %vm1580 = vweird.f32 %v1574
        %vm1581 = vmor %vm1579, %vm1580
        %v1582 = vsel %vm1581, %v1574, %v1578
        %v1583 = vand.u32 2147483647, %v1541
        %vm1584 = vcmp.eq.f32.partialorder %v1583, 8.507059e+37
        %v1585 = vand.u32 %v1541, 2147483648
        %v1586 = vor.u32 1.1754944e-38, %v1585
        %v1587 = vsel %vm1584, %v1586, %v1582
        %v1588 = vrcp.pop %v1544
        %v1589 = vmul.f32 %v1544, %v1588
        %v1590 = vsub.f32 1.0, %v1589
        %v1591 = vmul.f32 %v1588, %v1590
        %v1592 = vadd.f32 %v1588, %v1591
        %vm1593 = vweird.f32 %v1544
        %vm1594 = vweird.f32 %v1588
        %vm1595 = vmor %vm1593, %vm1594
        %v1596 = vsel %vm1595, %v1588, %v1592
        %v1597 = vand.u32 2147483647, %v1544
        %vm1598 = vcmp.eq.f32.partialorder %v1597, 8.507059e+37
        %v1599 = vand.u32 %v1544, 2147483648
        %v1600 = vor.u32 1.1754944e-38, %v1599
        %v1601 = vsel %vm1598, %v1600, %v1596
        %v1602 = vrcp.pop %v1547
        %v1603 = vmul.f32 %v1547, %v1602
        %v1604 = vsub.f32 1.0, %v1603
        %v1605 = vmul.f32 %v1602, %v1604
        %v1606 = vadd.f32 %v1602, %v1605
        %vm1607 = vweird.f32 %v1547
        %vm1608 = vweird.f32 %v1602
        %vm1609 = vmor %vm1607, %vm1608
        %v1610 = vsel %vm1609, %v1602, %v1606
        %v1611 = vand.u32 2147483647, %v1547
        %vm1612 = vcmp.eq.f32.partialorder %v1611, 8.507059e+37
        %v1613 = vand.u32 %v1547, 2147483648
        %v1614 = vor.u32 1.1754944e-38, %v1613
        %v1615 = vsel %vm1612, %v1614, %v1610
        %v1616 = vrcp.pop %v1550
        %v1617 = vmul.f32 %v1550, %v1616
        %v1618 = vsub.f32 1.0, %v1617
        %v1619 = vmul.f32 %v1616, %v1618
        %v1620 = vadd.f32 %v1616, %v1619
        %vm1621 = vweird.f32 %v1550
        %vm1622 = vweird.f32 %v1616
        %vm1623 = vmor %vm1621, %vm1622
        %v1624 = vsel %vm1623, %v1616, %v1620
        %v1625 = vand.u32 2147483647, %v1550
        %vm1626 = vcmp.eq.f32.partialorder %v1625, 8.507059e+37
        %v1627 = vand.u32 %v1550, 2147483648
        %v1628 = vor.u32 1.1754944e-38, %v1627
        %v1629 = vsel %vm1626, %v1628, %v1624
        %v1630 = vrcp.pop %v1553
        %v1631 = vmul.f32 %v1553, %v1630
        %v1632 = vsub.f32 1.0, %v1631
        %v1633 = vmul.f32 %v1630, %v1632
        %v1634 = vadd.f32 %v1630, %v1633
        %vm1635 = vweird.f32 %v1553
        %vm1636 = vweird.f32 %v1630
        %vm1637 = vmor %vm1635, %vm1636
        %v1638 = vsel %vm1637, %v1630, %v1634
        %v1639 = vand.u32 2147483647, %v1553
        %vm1640 = vcmp.eq.f32.partialorder %v1639, 8.507059e+37
        %v1641 = vand.u32 %v1553, 2147483648
        %v1642 = vor.u32 1.1754944e-38, %v1641
        %v1643 = vsel %vm1640, %v1642, %v1638
        %v1644 = vrcp.pop %v1556
        %v1645 = vmul.f32 %v1556, %v1644
        %v1646 = vsub.f32 1.0, %v1645
        %v1647 = vmul.f32 %v1644, %v1646
        %v1648 = vadd.f32 %v1644, %v1647
        %vm1649 = vweird.f32 %v1556
        %vm1650 = vweird.f32 %v1644
        %vm1651 = vmor %vm1649, %vm1650
        %v1652 = vsel %vm1651, %v1644, %v1648
        %v1653 = vand.u32 2147483647, %v1556
        %vm1654 = vcmp.eq.f32.partialorder %v1653, 8.507059e+37
        %v1655 = vand.u32 %v1556, 2147483648
        %v1656 = vor.u32 1.1754944e-38, %v1655
        %v1657 = vsel %vm1654, %v1656, %v1652
        %v1658 = vrcp.pop %v1559
        %v1659 = vmul.f32 %v1559, %v1658
        %v1660 = vsub.f32 1.0, %v1659
        %v1661 = vmul.f32 %v1658, %v1660
        %v1662 = vadd.f32 %v1658, %v1661
        %vm1663 = vweird.f32 %v1559
        %vm1664 = vweird.f32 %v1658
        %vm1665 = vmor %vm1663, %vm1664
        %v1666 = vsel %vm1665, %v1658, %v1662
        %v1667 = vand.u32 2147483647, %v1559
        %vm1668 = vcmp.eq.f32.partialorder %v1667, 8.507059e+37
        %v1669 = vand.u32 %v1559, 2147483648
        %v1670 = vor.u32 1.1754944e-38, %v1669
        %v1671 = vsel %vm1668, %v1670, %v1666
        %v1672 = vmul.f32 %v1521, %v1573
        %v1673 = vmul.f32 %v1523, %v1587
        %v1674 = vmul.f32 %v1525, %v1601
        %v1675 = vmul.f32 %v1527, %v1615
        %v1676 = vmul.f32 %v1529, %v1629
        %v1677 = vmul.f32 %v1531, %v1643
        %v1678 = vmul.f32 %v1533, %v1657
        %v1679 = vmul.f32 %v1535, %v1671
        %v1681 = vsel %vm577, %v1672, 0
        %1683 = vmatpush.msra.mxu0 0.0
        %1684 = vmatpush.msra.mxu0 0.0
        %1685 = vmatpush.msra.mxu0 0.0
        %1686 = vmatpush.msra.mxu0 0.0
        %1687 = vmatpush.msra.mxu0 0.0
        %1688 = vmatpush.msra.mxu0 0.0
        %1689 = vmatpush.msra.mxu0 0.0
        %1690 = vmatpush.msra.mxu0 0.0
        %1691 = vmatpush.msra.mxu0 0.0
        %1692 = vmatpush.msra.mxu0 0.0
        %1693 = vmatpush.msra.mxu0 0.0
        %1694 = vmatpush.msra.mxu0 0.0
        %1695 = vmatpush.msra.mxu0 0.0
        %1696 = vmatpush.msra.mxu0 0.0
        %1697 = vmatpush.msra.mxu0 0.0
        %1698 = vmatpush.msra.mxu0 %v1137
        %1699 = vmatmul.f32.gmra.mxu0 %v1681
        %v1700 = vpop.f32.mrf.mxu0
        %v1701 = vadd.f32 0.0, %v1700
        %1702 = vdwg.mxu0
        %v1704 = vsel %vm577, %v1673, 0
        %1706 = vmatpush.msra.mxu0 0.0
        %1707 = vmatpush.msra.mxu0 0.0
        %1708 = vmatpush.msra.mxu0 0.0
        %1709 = vmatpush.msra.mxu0 0.0
        %1710 = vmatpush.msra.mxu0 0.0
        %1711 = vmatpush.msra.mxu0 0.0
        %1712 = vmatpush.msra.mxu0 0.0
        %1713 = vmatpush.msra.mxu0 0.0
        %1714 = vmatpush.msra.mxu0 0.0
        %1715 = vmatpush.msra.mxu0 0.0
        %1716 = vmatpush.msra.mxu0 0.0
        %1717 = vmatpush.msra.mxu0 0.0
        %1718 = vmatpush.msra.mxu0 0.0
        %1719 = vmatpush.msra.mxu0 0.0
        %1720 = vmatpush.msra.mxu0 0.0
        %1721 = vmatpush.msra.mxu0 %v1157
        %1722 = vmatmul.f32.gmra.mxu0 %v1704
        %v1723 = vpop.f32.mrf.mxu0
        %v1724 = vadd.f32 0.0, %v1723
        %1725 = vdwg.mxu0
        %v1727 = vsel %vm577, %v1674, 0
        %1729 = vmatpush.msra.mxu0 0.0
        %1730 = vmatpush.msra.mxu0 0.0
        %1731 = vmatpush.msra.mxu0 0.0
        %1732 = vmatpush.msra.mxu0 0.0
        %1733 = vmatpush.msra.mxu0 0.0
        %1734 = vmatpush.msra.mxu0 0.0
        %1735 = vmatpush.msra.mxu0 0.0
        %1736 = vmatpush.msra.mxu0 0.0
        %1737 = vmatpush.msra.mxu0 0.0
        %1738 = vmatpush.msra.mxu0 0.0
        %1739 = vmatpush.msra.mxu0 0.0
        %1740 = vmatpush.msra.mxu0 0.0
        %1741 = vmatpush.msra.mxu0 0.0
        %1742 = vmatpush.msra.mxu0 0.0
        %1743 = vmatpush.msra.mxu0 0.0
        %1744 = vmatpush.msra.mxu0 %v1177
        %1745 = vmatmul.f32.gmra.mxu0 %v1727
        %v1746 = vpop.f32.mrf.mxu0
        %v1747 = vadd.f32 0.0, %v1746
        %1748 = vdwg.mxu0
        %v1750 = vsel %vm577, %v1675, 0
        %1752 = vmatpush.msra.mxu0 0.0
        %1753 = vmatpush.msra.mxu0 0.0
        %1754 = vmatpush.msra.mxu0 0.0
        %1755 = vmatpush.msra.mxu0 0.0
        %1756 = vmatpush.msra.mxu0 0.0
        %1757 = vmatpush.msra.mxu0 0.0
        %1758 = vmatpush.msra.mxu0 0.0
        %1759 = vmatpush.msra.mxu0 0.0
        %1760 = vmatpush.msra.mxu0 0.0
        %1761 = vmatpush.msra.mxu0 0.0
        %1762 = vmatpush.msra.mxu0 0.0
        %1763 = vmatpush.msra.mxu0 0.0
        %1764 = vmatpush.msra.mxu0 0.0
        %1765 = vmatpush.msra.mxu0 0.0
        %1766 = vmatpush.msra.mxu0 0.0
        %1767 = vmatpush.msra.mxu0 %v1197
        %1768 = vmatmul.f32.gmra.mxu0 %v1750
        %v1769 = vpop.f32.mrf.mxu0
        %v1770 = vadd.f32 0.0, %v1769
        %1771 = vdwg.mxu0
        %v1773 = vsel %vm577, %v1676, 0
        %1775 = vmatpush.msra.mxu0 0.0
        %1776 = vmatpush.msra.mxu0 0.0
        %1777 = vmatpush.msra.mxu0 0.0
        %1778 = vmatpush.msra.mxu0 0.0
        %1779 = vmatpush.msra.mxu0 0.0
        %1780 = vmatpush.msra.mxu0 0.0
        %1781 = vmatpush.msra.mxu0 0.0
        %1782 = vmatpush.msra.mxu0 0.0
        %1783 = vmatpush.msra.mxu0 0.0
        %1784 = vmatpush.msra.mxu0 0.0
        %1785 = vmatpush.msra.mxu0 0.0
        %1786 = vmatpush.msra.mxu0 0.0
        %1787 = vmatpush.msra.mxu0 0.0
        %1788 = vmatpush.msra.mxu0 0.0
        %1789 = vmatpush.msra.mxu0 0.0
        %1790 = vmatpush.msra.mxu0 %v1217
        %1791 = vmatmul.f32.gmra.mxu0 %v1773
        %v1792 = vpop.f32.mrf.mxu0
        %v1793 = vadd.f32 0.0, %v1792
        %1794 = vdwg.mxu0
        %v1796 = vsel %vm577, %v1677, 0
        %1798 = vmatpush.msra.mxu0 0.0
        %1799 = vmatpush.msra.mxu0 0.0
        %1800 = vmatpush.msra.mxu0 0.0
        %1801 = vmatpush.msra.mxu0 0.0
        %1802 = vmatpush.msra.mxu0 0.0
        %1803 = vmatpush.msra.mxu0 0.0
        %1804 = vmatpush.msra.mxu0 0.0
        %1805 = vmatpush.msra.mxu0 0.0
        %1806 = vmatpush.msra.mxu0 0.0
        %1807 = vmatpush.msra.mxu0 0.0
        %1808 = vmatpush.msra.mxu0 0.0
        %1809 = vmatpush.msra.mxu0 0.0
        %1810 = vmatpush.msra.mxu0 0.0
        %1811 = vmatpush.msra.mxu0 0.0
        %1812 = vmatpush.msra.mxu0 0.0
        %1813 = vmatpush.msra.mxu0 %v1237
        %1814 = vmatmul.f32.gmra.mxu0 %v1796
        %v1815 = vpop.f32.mrf.mxu0
        %v1816 = vadd.f32 0.0, %v1815
        %1817 = vdwg.mxu0
        %v1819 = vsel %vm577, %v1678, 0
        %1821 = vmatpush.msra.mxu0 0.0
        %1822 = vmatpush.msra.mxu0 0.0
        %1823 = vmatpush.msra.mxu0 0.0
        %1824 = vmatpush.msra.mxu0 0.0
        %1825 = vmatpush.msra.mxu0 0.0
        %1826 = vmatpush.msra.mxu0 0.0
        %1827 = vmatpush.msra.mxu0 0.0
        %1828 = vmatpush.msra.mxu0 0.0
        %1829 = vmatpush.msra.mxu0 0.0
        %1830 = vmatpush.msra.mxu0 0.0
        %1831 = vmatpush.msra.mxu0 0.0
        %1832 = vmatpush.msra.mxu0 0.0
        %1833 = vmatpush.msra.mxu0 0.0
        %1834 = vmatpush.msra.mxu0 0.0
        %1835 = vmatpush.msra.mxu0 0.0
        %1836 = vmatpush.msra.mxu0 %v1257
        %1837 = vmatmul.f32.gmra.mxu0 %v1819
        %v1838 = vpop.f32.mrf.mxu0
        %v1839 = vadd.f32 0.0, %v1838
        %1840 = vdwg.mxu0
        %v1842 = vsel %vm577, %v1679, 0
        %1844 = vmatpush.msra.mxu0 0.0
        %1845 = vmatpush.msra.mxu0 0.0
        %1846 = vmatpush.msra.mxu0 0.0
        %1847 = vmatpush.msra.mxu0 0.0
        %1848 = vmatpush.msra.mxu0 0.0
        %1849 = vmatpush.msra.mxu0 0.0
        %1850 = vmatpush.msra.mxu0 0.0
        %1851 = vmatpush.msra.mxu0 0.0
        %1852 = vmatpush.msra.mxu0 0.0
        %1853 = vmatpush.msra.mxu0 0.0
        %1854 = vmatpush.msra.mxu0 0.0
        %1855 = vmatpush.msra.mxu0 0.0
        %1856 = vmatpush.msra.mxu0 0.0
        %1857 = vmatpush.msra.mxu0 0.0
        %1858 = vmatpush.msra.mxu0 0.0
        %1859 = vmatpush.msra.mxu0 %v1277
        %1860 = vmatmul.f32.gmra.mxu0 %v1842
        %v1861 = vpop.f32.mrf.mxu0
        %v1862 = vadd.f32 0.0, %v1861
        %1863 = vdwg.mxu0
        %v1864 = vld [vmem:[%s6] sm:$0xf]
        %v1865 = vld [vmem:[%s6 + $0x4] sm:$0xf]
        %v1866 = vld [vmem:[%s6 + $0x8] sm:$0xf]
        %v1867 = vld [vmem:[%s6 + $0xc] sm:$0xf]
        %v1868 = vld [vmem:[%s6 + $0x10] sm:$0xf]
        %v1869 = vld [vmem:[%s6 + $0x14] sm:$0xf]
        %v1870 = vld [vmem:[%s6 + $0x18] sm:$0xf]
        %v1871 = vld [vmem:[%s6 + $0x1c] sm:$0xf]
        %v1873 = vsel %vm1279, %v1701, 0
        %vm1875 = vcmask 1043456
        %v1877 = vsel %vm1875, %v1864, 0
        %1879 = vmatpush.msra.mxu0 0.0
        %1880 = vmatpush.msra.mxu0 0.0
        %1881 = vmatpush.msra.mxu0 0.0
        %1882 = vmatpush.msra.mxu0 0.0
        %1883 = vmatpush.msra.mxu0 0.0
        %1884 = vmatpush.msra.mxu0 0.0
        %1885 = vmatpush.msra.mxu0 0.0
        %1886 = vmatpush.msra.mxu0 0.0
        %1887 = vmatpush.msra.mxu0 0.0
        %1888 = vmatpush.msra.mxu0 0.0
        %1889 = vmatpush.msra.mxu0 0.0
        %1890 = vmatpush.msra.mxu0 0.0
        %1891 = vmatpush.msra.mxu0 0.0
        %1892 = vmatpush.msra.mxu0 0.0
        %1893 = vmatpush.msra.mxu0 0.0
        %1894 = vmatpush.msra.mxu0 %v1877
        %1895 = vmatmul.f32.gmra.mxu0 %v1873
        %v1896 = vpop.f32.mrf.mxu0
        %v1897 = vadd.f32 0.0, %v1896
        %1898 = vdwg.mxu0
        %v1900 = vsel %vm1279, %v1724, 0
        %v1903 = vsel %vm1875, %v1865, 0
        %1905 = vmatpush.msra.mxu0 0.0
        %1906 = vmatpush.msra.mxu0 0.0
        %1907 = vmatpush.msra.mxu0 0.0
        %1908 = vmatpush.msra.mxu0 0.0
        %1909 = vmatpush.msra.mxu0 0.0
        %1910 = vmatpush.msra.mxu0 0.0
        %1911 = vmatpush.msra.mxu0 0.0
        %1912 = vmatpush.msra.mxu0 0.0
        %1913 = vmatpush.msra.mxu0 0.0
        %1914 = vmatpush.msra.mxu0 0.0
        %1915 = vmatpush.msra.mxu0 0.0
        %1916 = vmatpush.msra.mxu0 0.0
        %1917 = vmatpush.msra.mxu0 0.0
        %1918 = vmatpush.msra.mxu0 0.0
        %1919 = vmatpush.msra.mxu0 0.0
        %1920 = vmatpush.msra.mxu0 %v1903
        %1921 = vmatmul.f32.gmra.mxu0 %v1900
        %v1922 = vpop.f32.mrf.mxu0
        %v1923 = vadd.f32 0.0, %v1922
        %1924 = vdwg.mxu0
        %v1926 = vsel %vm1279, %v1747, 0
        %v1929 = vsel %vm1875, %v1866, 0
        %1931 = vmatpush.msra.mxu0 0.0
        %1932 = vmatpush.msra.mxu0 0.0
        %1933 = vmatpush.msra.mxu0 0.0
        %1934 = vmatpush.msra.mxu0 0.0
        %1935 = vmatpush.msra.mxu0 0.0
        %1936 = vmatpush.msra.mxu0 0.0
        %1937 = vmatpush.msra.mxu0 0.0
        %1938 = vmatpush.msra.mxu0 0.0
        %1939 = vmatpush.msra.mxu0 0.0
        %1940 = vmatpush.msra.mxu0 0.0
        %1941 = vmatpush.msra.mxu0 0.0
        %1942 = vmatpush.msra.mxu0 0.0
        %1943 = vmatpush.msra.mxu0 0.0
        %1944 = vmatpush.msra.mxu0 0.0
        %1945 = vmatpush.msra.mxu0 0.0
        %1946 = vmatpush.msra.mxu0 %v1929
        %1947 = vmatmul.f32.gmra.mxu0 %v1926
        %v1948 = vpop.f32.mrf.mxu0
        %v1949 = vadd.f32 0.0, %v1948
        %1950 = vdwg.mxu0
        %v1952 = vsel %vm1279, %v1770, 0
        %v1955 = vsel %vm1875, %v1867, 0
        %1957 = vmatpush.msra.mxu0 0.0
        %1958 = vmatpush.msra.mxu0 0.0
        %1959 = vmatpush.msra.mxu0 0.0
        %1960 = vmatpush.msra.mxu0 0.0
        %1961 = vmatpush.msra.mxu0 0.0
        %1962 = vmatpush.msra.mxu0 0.0
        %1963 = vmatpush.msra.mxu0 0.0
        %1964 = vmatpush.msra.mxu0 0.0
        %1965 = vmatpush.msra.mxu0 0.0
        %1966 = vmatpush.msra.mxu0 0.0
        %1967 = vmatpush.msra.mxu0 0.0
        %1968 = vmatpush.msra.mxu0 0.0
        %1969 = vmatpush.msra.mxu0 0.0
        %1970 = vmatpush.msra.mxu0 0.0
        %1971 = vmatpush.msra.mxu0 0.0
        %1972 = vmatpush.msra.mxu0 %v1955
        %1973 = vmatmul.f32.gmra.mxu0 %v1952
        %v1974 = vpop.f32.mrf.mxu0
        %v1975 = vadd.f32 0.0, %v1974
        %1976 = vdwg.mxu0
        %v1978 = vsel %vm1279, %v1793, 0
        %v1981 = vsel %vm1875, %v1868, 0
        %1983 = vmatpush.msra.mxu0 0.0
        %1984 = vmatpush.msra.mxu0 0.0
        %1985 = vmatpush.msra.mxu0 0.0
        %1986 = vmatpush.msra.mxu0 0.0
        %1987 = vmatpush.msra.mxu0 0.0
        %1988 = vmatpush.msra.mxu0 0.0
        %1989 = vmatpush.msra.mxu0 0.0
        %1990 = vmatpush.msra.mxu0 0.0
        %1991 = vmatpush.msra.mxu0 0.0
        %1992 = vmatpush.msra.mxu0 0.0
        %1993 = vmatpush.msra.mxu0 0.0
        %1994 = vmatpush.msra.mxu0 0.0
        %1995 = vmatpush.msra.mxu0 0.0
        %1996 = vmatpush.msra.mxu0 0.0
        %1997 = vmatpush.msra.mxu0 0.0
        %1998 = vmatpush.msra.mxu0 %v1981
        %1999 = vmatmul.f32.gmra.mxu0 %v1978
        %v2000 = vpop.f32.mrf.mxu0
        %v2001 = vadd.f32 0.0, %v2000
        %2002 = vdwg.mxu0
        %v2004 = vsel %vm1279, %v1816, 0
        %v2007 = vsel %vm1875, %v1869, 0
        %2009 = vmatpush.msra.mxu0 0.0
        %2010 = vmatpush.msra.mxu0 0.0
        %2011 = vmatpush.msra.mxu0 0.0
        %2012 = vmatpush.msra.mxu0 0.0
        %2013 = vmatpush.msra.mxu0 0.0
        %2014 = vmatpush.msra.mxu0 0.0
        %2015 = vmatpush.msra.mxu0 0.0
        %2016 = vmatpush.msra.mxu0 0.0
        %2017 = vmatpush.msra.mxu0 0.0
        %2018 = vmatpush.msra.mxu0 0.0
        %2019 = vmatpush.msra.mxu0 0.0
        %2020 = vmatpush.msra.mxu0 0.0
        %2021 = vmatpush.msra.mxu0 0.0
        %2022 = vmatpush.msra.mxu0 0.0
        %2023 = vmatpush.msra.mxu0 0.0
        %2024 = vmatpush.msra.mxu0 %v2007
        %2025 = vmatmul.f32.gmra.mxu0 %v2004
        %v2026 = vpop.f32.mrf.mxu0
        %v2027 = vadd.f32 0.0, %v2026
        %2028 = vdwg.mxu0
        %v2030 = vsel %vm1279, %v1839, 0
        %v2033 = vsel %vm1875, %v1870, 0
        %2035 = vmatpush.msra.mxu0 0.0
        %2036 = vmatpush.msra.mxu0 0.0
        %2037 = vmatpush.msra.mxu0 0.0
        %2038 = vmatpush.msra.mxu0 0.0
        %2039 = vmatpush.msra.mxu0 0.0
        %2040 = vmatpush.msra.mxu0 0.0
        %2041 = vmatpush.msra.mxu0 0.0
        %2042 = vmatpush.msra.mxu0 0.0
        %2043 = vmatpush.msra.mxu0 0.0
        %2044 = vmatpush.msra.mxu0 0.0
        %2045 = vmatpush.msra.mxu0 0.0
        %2046 = vmatpush.msra.mxu0 0.0
        %2047 = vmatpush.msra.mxu0 0.0
        %2048 = vmatpush.msra.mxu0 0.0
        %2049 = vmatpush.msra.mxu0 0.0
        %2050 = vmatpush.msra.mxu0 %v2033
        %2051 = vmatmul.f32.gmra.mxu0 %v2030
        %v2052 = vpop.f32.mrf.mxu0
        %v2053 = vadd.f32 0.0, %v2052
        %2054 = vdwg.mxu0
        %v2056 = vsel %vm1279, %v1862, 0
        %v2059 = vsel %vm1875, %v1871, 0
        %2061 = vmatpush.msra.mxu0 0.0
        %2062 = vmatpush.msra.mxu0 0.0
        %2063 = vmatpush.msra.mxu0 0.0
        %2064 = vmatpush.msra.mxu0 0.0
        %2065 = vmatpush.msra.mxu0 0.0
        %2066 = vmatpush.msra.mxu0 0.0
        %2067 = vmatpush.msra.mxu0 0.0
        %2068 = vmatpush.msra.mxu0 0.0
        %2069 = vmatpush.msra.mxu0 0.0
        %2070 = vmatpush.msra.mxu0 0.0
        %2071 = vmatpush.msra.mxu0 0.0
        %2072 = vmatpush.msra.mxu0 0.0
        %2073 = vmatpush.msra.mxu0 0.0
        %2074 = vmatpush.msra.mxu0 0.0
        %2075 = vmatpush.msra.mxu0 0.0
        %2076 = vmatpush.msra.mxu0 %v2059
        %2077 = vmatmul.f32.gmra.mxu0 %v2056
        %v2078 = vpop.f32.mrf.mxu0
        %v2079 = vadd.f32 0.0, %v2078
        %2080 = vdwg.mxu0
        %v2081 = vsel %vm795, %v1897, 0.0
        %v2082 = vsel %vm795, %v1923, 0.0
        %v2083 = vadd.f32 %v2081, %v2082
        %v2084 = vsel %vm795, %v1949, 0.0
        %v2085 = vadd.f32 %v2083, %v2084
        %v2086 = vsel %vm795, %v1975, 0.0
        %v2087 = vadd.f32 %v2085, %v2086
        %v2088 = vsel %vm795, %v2001, 0.0
        %v2089 = vadd.f32 %v2087, %v2088
        %v2090 = vsel %vm795, %v2027, 0.0
        %v2091 = vadd.f32 %v2089, %v2090
        %v2092 = vsel %vm795, %v2053, 0.0
        %v2093 = vadd.f32 %v2091, %v2092
        %v2094 = vsel %vm795, %v2079, 0.0
        %v2095 = vadd.f32 %v2093, %v2094
        %v2096 = vld [vmem:[%s7] sm:$0x1]
        %v2098 = vperm.slane %v2096, 0
        %v2100 = vadd.f32 %v2095, %v2098
        %v2101 = vadd.f32 %v602, %v2100
        %v2102 = vld [vmem:[%s8] sm:$0x1]
        %v2103 = vld [vmem:[%s9] sm:$0x1]
        %v2104 = vsel %vm795, %v2101, 0.0
        %2105 = vadd.xlane.f32.xlu0 %v2104
        %v2106 = vpop.xlane.xlu0 %2105
        %v2107 = vrcp.pop 32.0
        %v2108 = vmul.f32 32.0, %v2107
        %v2109 = vsub.f32 1.0, %v2108
        %v2110 = vmul.f32 %v2107, %v2109
        %v2111 = vadd.f32 %v2107, %v2110
        %vm2112 = vweird.f32 %v2107
        %v2113 = vsel %vm2112, %v2107, %v2111
        %v2114 = vmul.f32 %v2106, %v2113
        %v2115 = vsub.f32 %v2101, %v2114
        %v2116 = vmul.f32 %v2115, %v2115
        %v2117 = vsel %vm795, %v2116, 0.0
        %2118 = vadd.xlane.f32.xlu0 %v2117
        %v2119 = vpop.xlane.xlu0 %2118
        %v2120 = vmul.f32 %v2119, %v2113
        %v2121 = vadd.f32 %v2120, 1e-05
        %v2122 = vrsqrt.pop %v2121
        %v2123 = vmul.f32 %v2122, %v2121
        %v2124 = vmul.f32 %v2123, %v2122
        %v2125 = vmul.f32 0.5, %v2124
        %v2126 = vsub.f32 1.5, %v2125
        %v2127 = vmul.f32 %v2122, %v2126
        %vm2128 = vweird.f32 %v2121
        %vm2129 = vweird.f32 %v2122
        %vm2130 = vmor %vm2128, %vm2129
        %v2131 = vsel %vm2130, %v2122, %v2127
        %v2132 = vmul.f32 %v2115, %v2131
        %v2134 = vperm.slane %v2102, 0
        %v2136 = vmul.f32 %v2132, %v2134
        %v2138 = vperm.slane %v2103, 0
        %v2140 = vadd.f32 %v2136, %v2138
        %v2141 = vld [vmem:[%s10] sm:$0xff]
        %v2142 = vld [vmem:[%s10 + $0x8] sm:$0xff]
        %v2143 = vld [vmem:[%s10 + $0x10] sm:$0xff]
        %v2144 = vld [vmem:[%s10 + $0x18] sm:$0xff]
        %v2145 = vld [vmem:[%s11] sm:$0x1]
        %v2147 = vperm.slane %v2145, 0
        %v2150 = vsel %vm795, %v2140, 0
        %2152 = vmatpush.msra.mxu0 0.0
        %2153 = vmatpush.msra.mxu0 0.0
        %2154 = vmatpush.msra.mxu0 0.0
        %2155 = vmatpush.msra.mxu0 0.0
        %2156 = vmatpush.msra.mxu0 0.0
        %2157 = vmatpush.msra.mxu0 0.0
        %2158 = vmatpush.msra.mxu0 0.0
        %2159 = vmatpush.msra.mxu0 0.0
        %2160 = vmatpush.msra.mxu0 0.0
        %2161 = vmatpush.msra.mxu0 0.0
        %2162 = vmatpush.msra.mxu0 0.0
        %2163 = vmatpush.msra.mxu0 0.0
        %2164 = vmatpush.msra.mxu0 %v2144
        %2165 = vmatpush.msra.mxu0 %v2143
        %2166 = vmatpush.msra.mxu0 %v2142
        %2167 = vmatpush.msra.mxu0 %v2141
        %2168 = vmatmul.f32.gmra.mxu0 %v2150
        %v2169 = vpop.f32.mrf.mxu0
        %v2170 = vadd.f32 %v2147, %v2169
        %2171 = vdwg.mxu0
        %v2172 = vmax.f32 %v2170, 0.0
        %v2173 = vld [vmem:[%s12] sm:$0xff]
        %v2174 = vld [vmem:[%s12 + $0x8] sm:$0xff]
        %v2175 = vld [vmem:[%s12 + $0x10] sm:$0xff]
        %v2176 = vld [vmem:[%s12 + $0x18] sm:$0xff]
        %v2177 = vld [vmem:[%s12 + $0x20] sm:$0xff]
        %v2178 = vld [vmem:[%s12 + $0x28] sm:$0xff]
        %v2179 = vld [vmem:[%s12 + $0x30] sm:$0xff]
        %v2180 = vld [vmem:[%s12 + $0x38] sm:$0xff]
        %v2181 = vld [vmem:[%s12 + $0x40] sm:$0xff]
        %v2182 = vld [vmem:[%s12 + $0x48] sm:$0xff]
        %v2183 = vld [vmem:[%s12 + $0x50] sm:$0xff]
        %v2184 = vld [vmem:[%s12 + $0x58] sm:$0xff]
        %v2185 = vld [vmem:[%s12 + $0x60] sm:$0xff]
        %v2186 = vld [vmem:[%s12 + $0x68] sm:$0xff]
        %v2187 = vld [vmem:[%s12 + $0x70] sm:$0xff]
        %v2188 = vld [vmem:[%s12 + $0x78] sm:$0xff]
        %v2189 = vld [vmem:[%s13] sm:$0x1]
        %v2191 = vperm.slane %v2189, 0
        %2193 = vmatpush.msra.mxu0 %v2188
        %2194 = vmatpush.msra.mxu0 %v2187
        %2195 = vmatpush.msra.mxu0 %v2186
        %2196 = vmatpush.msra.mxu0 %v2185
        %2197 = vmatpush.msra.mxu0 %v2184
        %2198 = vmatpush.msra.mxu0 %v2183
        %2199 = vmatpush.msra.mxu0 %v2182
        %2200 = vmatpush.msra.mxu0 %v2181
        %2201 = vmatpush.msra.mxu0 %v2180
        %2202 = vmatpush.msra.mxu0 %v2179
        %2203 = vmatpush.msra.mxu0 %v2178
        %2204 = vmatpush.msra.mxu0 %v2177
        %2205 = vmatpush.msra.mxu0 %v2176
        %2206 = vmatpush.msra.mxu0 %v2175
        %2207 = vmatpush.msra.mxu0 %v2174
        %2208 = vmatpush.msra.mxu0 %v2173
        %2209 = vmatmul.f32.gmra.mxu0 %v2172
        %v2210 = vpop.f32.mrf.mxu0
        %v2211 = vadd.f32 %v2191, %v2210
        %2212 = vdwg.mxu0
        %v2213 = vadd.f32 %v2140, %v2211
        %v2214 = vld [vmem:[%s14] sm:$0x1]
        %v2215 = vld [vmem:[%s15] sm:$0x1]
        %v2216 = vsel %vm795, %v2213, 0.0
        %2217 = vadd.xlane.f32.xlu0 %v2216
        %v2218 = vpop.xlane.xlu0 %2217
        %v2219 = vmul.f32 %v2218, %v2113
        %v2220 = vsub.f32 %v2213, %v2219
        %v2221 = vmul.f32 %v2220, %v2220
        %v2222 = vsel %vm795, %v2221, 0.0
        %2223 = vadd.xlane.f32.xlu0 %v2222
        %v2224 = vpop.xlane.xlu0 %2223
        %v2225 = vmul.f32 %v2224, %v2113
        %v2226 = vadd.f32 %v2225, 1e-05
        %v2227 = vrsqrt.pop %v2226
        %v2228 = vmul.f32 %v2227, %v2226
        %v2229 = vmul.f32 %v2228, %v2227
        %v2230 = vmul.f32 0.5, %v2229
        %v2231 = vsub.f32 1.5, %v2230
        %v2232 = vmul.f32 %v2227, %v2231
        %vm2233 = vweird.f32 %v2226
        %vm2234 = vweird.f32 %v2227
        %vm2235 = vmor %vm2233, %vm2234
        %v2236 = vsel %vm2235, %v2227, %v2232
        %v2237 = vmul.f32 %v2220, %v2236
        %v2239 = vperm.slane %v2214, 0
        %v2241 = vmul.f32 %v2237, %v2239
        %v2243 = vperm.slane %v2215, 0
        %v2245 = vadd.f32 %v2241, %v2243
        %s2246 = scalar_lea.vmem %s4, 768
        %v2247 = vld [vmem:[%s2246] sm:$0xff]
        %v2248 = vld [vmem:[%s2246 + $0x8] sm:$0xff]
        %v2249 = vld [vmem:[%s2246 + $0x10] sm:$0xff]
        %v2250 = vld [vmem:[%s2246 + $0x18] sm:$0xff]
        %v2251 = vld [vmem:[%s2246 + $0x20] sm:$0xff]
        %v2252 = vld [vmem:[%s2246 + $0x28] sm:$0xff]
        %v2253 = vld [vmem:[%s2246 + $0x30] sm:$0xff]
        %v2254 = vld [vmem:[%s2246 + $0x38] sm:$0xff]
        %v2255 = vld [vmem:[%s2246 + $0x40] sm:$0xff]
        %v2256 = vld [vmem:[%s2246 + $0x48] sm:$0xff]
        %v2257 = vld [vmem:[%s2246 + $0x50] sm:$0xff]
        %v2258 = vld [vmem:[%s2246 + $0x58] sm:$0xff]
        %v2259 = vld [vmem:[%s2246 + $0x60] sm:$0xff]
        %v2260 = vld [vmem:[%s2246 + $0x68] sm:$0xff]
        %v2261 = vld [vmem:[%s2246 + $0x70] sm:$0xff]
        %v2262 = vld [vmem:[%s2246 + $0x78] sm:$0xff]
        %v2263 = vld [vmem:[%s2246 + $0x80] sm:$0xff]
        %v2264 = vld [vmem:[%s2246 + $0x88] sm:$0xff]
        %v2265 = vld [vmem:[%s2246 + $0x90] sm:$0xff]
        %v2266 = vld [vmem:[%s2246 + $0x98] sm:$0xff]
        %v2267 = vld [vmem:[%s2246 + $0xa0] sm:$0xff]
        %v2268 = vld [vmem:[%s2246 + $0xa8] sm:$0xff]
        %v2269 = vld [vmem:[%s2246 + $0xb0] sm:$0xff]
        %v2270 = vld [vmem:[%s2246 + $0xb8] sm:$0xff]
        %v2271 = vld [vmem:[%s2246 + $0xc0] sm:$0xff]
        %v2272 = vld [vmem:[%s2246 + $0xc8] sm:$0xff]
        %v2273 = vld [vmem:[%s2246 + $0xd0] sm:$0xff]
        %v2274 = vld [vmem:[%s2246 + $0xd8] sm:$0xff]
        %v2275 = vld [vmem:[%s2246 + $0xe0] sm:$0xff]
        %v2276 = vld [vmem:[%s2246 + $0xe8] sm:$0xff]
        %v2277 = vld [vmem:[%s2246 + $0xf0] sm:$0xff]
        %v2278 = vld [vmem:[%s2246 + $0xf8] sm:$0xff]
        %v2279 = vld [vmem:[%s2246 + $0x100] sm:$0xff]
        %v2280 = vld [vmem:[%s2246 + $0x108] sm:$0xff]
        %v2281 = vld [vmem:[%s2246 + $0x110] sm:$0xff]
        %v2282 = vld [vmem:[%s2246 + $0x118] sm:$0xff]
        %v2283 = vld [vmem:[%s2246 + $0x120] sm:$0xff]
        %v2284 = vld [vmem:[%s2246 + $0x128] sm:$0xff]
        %v2285 = vld [vmem:[%s2246 + $0x130] sm:$0xff]
        %v2286 = vld [vmem:[%s2246 + $0x138] sm:$0xff]
        %v2287 = vld [vmem:[%s2246 + $0x140] sm:$0xff]
        %v2288 = vld [vmem:[%s2246 + $0x148] sm:$0xff]
        %v2289 = vld [vmem:[%s2246 + $0x150] sm:$0xff]
        %v2290 = vld [vmem:[%s2246 + $0x158] sm:$0xff]
        %v2291 = vld [vmem:[%s2246 + $0x160] sm:$0xff]
        %v2292 = vld [vmem:[%s2246 + $0x168] sm:$0xff]
        %v2293 = vld [vmem:[%s2246 + $0x170] sm:$0xff]
        %v2294 = vld [vmem:[%s2246 + $0x178] sm:$0xff]
        %v2295 = vld [vmem:[%s2246 + $0x180] sm:$0xff]
        %v2296 = vld [vmem:[%s2246 + $0x188] sm:$0xff]
        %v2297 = vld [vmem:[%s2246 + $0x190] sm:$0xff]
        %v2298 = vld [vmem:[%s2246 + $0x198] sm:$0xff]
        %v2299 = vld [vmem:[%s2246 + $0x1a0] sm:$0xff]
        %v2300 = vld [vmem:[%s2246 + $0x1a8] sm:$0xff]
        %v2301 = vld [vmem:[%s2246 + $0x1b0] sm:$0xff]
        %v2302 = vld [vmem:[%s2246 + $0x1b8] sm:$0xff]
        %v2303 = vld [vmem:[%s2246 + $0x1c0] sm:$0xff]
        %v2304 = vld [vmem:[%s2246 + $0x1c8] sm:$0xff]
        %v2305 = vld [vmem:[%s2246 + $0x1d0] sm:$0xff]
        %v2306 = vld [vmem:[%s2246 + $0x1d8] sm:$0xff]
        %v2307 = vld [vmem:[%s2246 + $0x1e0] sm:$0xff]
        %v2308 = vld [vmem:[%s2246 + $0x1e8] sm:$0xff]
        %v2309 = vld [vmem:[%s2246 + $0x1f0] sm:$0xff]
        %v2310 = vld [vmem:[%s2246 + $0x1f8] sm:$0xff]
        %v2311 = vld [vmem:[%s2246 + $0x200] sm:$0xff]
        %v2312 = vld [vmem:[%s2246 + $0x208] sm:$0xff]
        %v2313 = vld [vmem:[%s2246 + $0x210] sm:$0xff]
        %v2314 = vld [vmem:[%s2246 + $0x218] sm:$0xff]
        %v2315 = vld [vmem:[%s2246 + $0x220] sm:$0xff]
        %v2316 = vld [vmem:[%s2246 + $0x228] sm:$0xff]
        %v2317 = vld [vmem:[%s2246 + $0x230] sm:$0xff]
        %v2318 = vld [vmem:[%s2246 + $0x238] sm:$0xff]
        %v2319 = vld [vmem:[%s2246 + $0x240] sm:$0xff]
        %v2320 = vld [vmem:[%s2246 + $0x248] sm:$0xff]
        %v2321 = vld [vmem:[%s2246 + $0x250] sm:$0xff]
        %v2322 = vld [vmem:[%s2246 + $0x258] sm:$0xff]
        %v2323 = vld [vmem:[%s2246 + $0x260] sm:$0xff]
        %v2324 = vld [vmem:[%s2246 + $0x268] sm:$0xff]
        %v2325 = vld [vmem:[%s2246 + $0x270] sm:$0xff]
        %v2326 = vld [vmem:[%s2246 + $0x278] sm:$0xff]
        %v2327 = vld [vmem:[%s2246 + $0x280] sm:$0xff]
        %v2328 = vld [vmem:[%s2246 + $0x288] sm:$0xff]
        %v2329 = vld [vmem:[%s2246 + $0x290] sm:$0xff]
        %v2330 = vld [vmem:[%s2246 + $0x298] sm:$0xff]
        %v2331 = vld [vmem:[%s2246 + $0x2a0] sm:$0xff]
        %v2332 = vld [vmem:[%s2246 + $0x2a8] sm:$0xff]
        %v2333 = vld [vmem:[%s2246 + $0x2b0] sm:$0xff]
        %v2334 = vld [vmem:[%s2246 + $0x2b8] sm:$0xff]
        %v2335 = vld [vmem:[%s2246 + $0x2c0] sm:$0xff]
        %v2336 = vld [vmem:[%s2246 + $0x2c8] sm:$0xff]
        %v2337 = vld [vmem:[%s2246 + $0x2d0] sm:$0xff]
        %v2338 = vld [vmem:[%s2246 + $0x2d8] sm:$0xff]
        %v2339 = vld [vmem:[%s2246 + $0x2e0] sm:$0xff]
        %v2340 = vld [vmem:[%s2246 + $0x2e8] sm:$0xff]
        %v2341 = vld [vmem:[%s2246 + $0x2f0] sm:$0xff]
        %v2342 = vld [vmem:[%s2246 + $0x2f8] sm:$0xff]
        %s2343 = scalar_lea.vmem %s5, 24
        %v2344 = vld [vmem:[%s2343] sm:$0x1]
        %v2345 = vld [vmem:[%s2343 + $0x1] sm:$0x1]
        %v2346 = vld [vmem:[%s2343 + $0x2] sm:$0x1]
        %v2347 = vld [vmem:[%s2343 + $0x3] sm:$0x1]
        %v2348 = vld [vmem:[%s2343 + $0x4] sm:$0x1]
        %v2349 = vld [vmem:[%s2343 + $0x5] sm:$0x1]
        %v2350 = vld [vmem:[%s2343 + $0x6] sm:$0x1]
        %v2351 = vld [vmem:[%s2343 + $0x7] sm:$0x1]
        %v2352 = vld [vmem:[%s2343 + $0x8] sm:$0x1]
        %v2353 = vld [vmem:[%s2343 + $0x9] sm:$0x1]
        %v2354 = vld [vmem:[%s2343 + $0xa] sm:$0x1]
        %v2355 = vld [vmem:[%s2343 + $0xb] sm:$0x1]
        %v2356 = vld [vmem:[%s2343 + $0xc] sm:$0x1]
        %v2357 = vld [vmem:[%s2343 + $0xd] sm:$0x1]
        %v2358 = vld [vmem:[%s2343 + $0xe] sm:$0x1]
        %v2359 = vld [vmem:[%s2343 + $0xf] sm:$0x1]
        %v2360 = vld [vmem:[%s2343 + $0x10] sm:$0x1]
        %v2361 = vld [vmem:[%s2343 + $0x11] sm:$0x1]
        %v2362 = vld [vmem:[%s2343 + $0x12] sm:$0x1]
        %v2363 = vld [vmem:[%s2343 + $0x13] sm:$0x1]
        %v2364 = vld [vmem:[%s2343 + $0x14] sm:$0x1]
        %v2365 = vld [vmem:[%s2343 + $0x15] sm:$0x1]
        %v2366 = vld [vmem:[%s2343 + $0x16] sm:$0x1]
        %v2367 = vld [vmem:[%s2343 + $0x17] sm:$0x1]
        %v2392 = vperm.slane %v2344, 0
        %v2393 = vperm.slane %v2345, 0
        %v2394 = vperm.slane %v2346, 0
        %v2395 = vperm.slane %v2347, 0
        %v2396 = vperm.slane %v2348, 0
        %v2397 = vperm.slane %v2349, 0
        %v2398 = vperm.slane %v2350, 0
        %v2399 = vperm.slane %v2351, 0
        %v2400 = vperm.slane %v2352, 0
        %v2401 = vperm.slane %v2353, 0
        %v2402 = vperm.slane %v2354, 0
        %v2403 = vperm.slane %v2355, 0
        %v2404 = vperm.slane %v2356, 0
        %v2405 = vperm.slane %v2357, 0
        %v2406 = vperm.slane %v2358, 0
        %v2407 = vperm.slane %v2359, 0
        %v2408 = vperm.slane %v2360, 0
        %v2409 = vperm.slane %v2361, 0
        %v2410 = vperm.slane %v2362, 0
        %v2411 = vperm.slane %v2363, 0
        %v2412 = vperm.slane %v2364, 0
        %v2413 = vperm.slane %v2365, 0
        %v2414 = vperm.slane %v2366, 0
        %v2415 = vperm.slane %v2367, 0
        %v2441 = vsel %vm795, %v2245, 0
        %2443 = vmatpush.msra.mxu0 0.0
        %2444 = vmatpush.msra.mxu0 0.0
        %2445 = vmatpush.msra.mxu0 0.0
        %2446 = vmatpush.msra.mxu0 0.0
        %2447 = vmatpush.msra.mxu0 0.0
        %2448 = vmatpush.msra.mxu0 0.0
        %2449 = vmatpush.msra.mxu0 0.0
        %2450 = vmatpush.msra.mxu0 0.0
        %2451 = vmatpush.msra.mxu0 0.0
        %2452 = vmatpush.msra.mxu0 0.0
        %2453 = vmatpush.msra.mxu0 0.0
        %2454 = vmatpush.msra.mxu0 0.0
        %2455 = vmatpush.msra.mxu0 %v2250
        %2456 = vmatpush.msra.mxu0 %v2249
        %2457 = vmatpush.msra.mxu0 %v2248
        %2458 = vmatpush.msra.mxu0 %v2247
        %2459 = vmatmul.f32.gmra.mxu0 %v2441
        %v2460 = vpop.f32.mrf.mxu0
        %v2461 = vadd.f32 %v2392, %v2460
        %2462 = vdwg.mxu0
        %2463 = vmatpush.msra.mxu0 0.0
        %2464 = vmatpush.msra.mxu0 0.0
        %2465 = vmatpush.msra.mxu0 0.0
        %2466 = vmatpush.msra.mxu0 0.0
        %2467 = vmatpush.msra.mxu0 0.0
        %2468 = vmatpush.msra.mxu0 0.0
        %2469 = vmatpush.msra.mxu0 0.0
        %2470 = vmatpush.msra.mxu0 0.0
        %2471 = vmatpush.msra.mxu0 0.0
        %2472 = vmatpush.msra.mxu0 0.0
        %2473 = vmatpush.msra.mxu0 0.0
        %2474 = vmatpush.msra.mxu0 0.0
        %2475 = vmatpush.msra.mxu0 %v2254
        %2476 = vmatpush.msra.mxu0 %v2253
        %2477 = vmatpush.msra.mxu0 %v2252
        %2478 = vmatpush.msra.mxu0 %v2251
        %2479 = vmatmul.f32.gmra.mxu0 %v2441
        %v2480 = vpop.f32.mrf.mxu0
        %v2481 = vadd.f32 %v2393, %v2480
        %2482 = vdwg.mxu0
        %2483 = vmatpush.msra.mxu0 0.0
        %2484 = vmatpush.msra.mxu0 0.0
        %2485 = vmatpush.msra.mxu0 0.0
        %2486 = vmatpush.msra.mxu0 0.0
        %2487 = vmatpush.msra.mxu0 0.0
        %2488 = vmatpush.msra.mxu0 0.0
        %2489 = vmatpush.msra.mxu0 0.0
        %2490 = vmatpush.msra.mxu0 0.0
        %2491 = vmatpush.msra.mxu0 0.0
        %2492 = vmatpush.msra.mxu0 0.0
        %2493 = vmatpush.msra.mxu0 0.0
        %2494 = vmatpush.msra.mxu0 0.0
        %2495 = vmatpush.msra.mxu0 %v2258
        %2496 = vmatpush.msra.mxu0 %v2257
        %2497 = vmatpush.msra.mxu0 %v2256
        %2498 = vmatpush.msra.mxu0 %v2255
        %2499 = vmatmul.f32.gmra.mxu0 %v2441
        %v2500 = vpop.f32.mrf.mxu0
        %v2501 = vadd.f32 %v2394, %v2500
        %2502 = vdwg.mxu0
        %2503 = vmatpush.msra.mxu0 0.0
        %2504 = vmatpush.msra.mxu0 0.0
        %2505 = vmatpush.msra.mxu0 0.0
        %2506 = vmatpush.msra.mxu0 0.0
        %2507 = vmatpush.msra.mxu0 0.0
        %2508 = vmatpush.msra.mxu0 0.0
        %2509 = vmatpush.msra.mxu0 0.0
        %2510 = vmatpush.msra.mxu0 0.0
        %2511 = vmatpush.msra.mxu0 0.0
        %2512 = vmatpush.msra.mxu0 0.0
        %2513 = vmatpush.msra.mxu0 0.0
        %2514 = vmatpush.msra.mxu0 0.0
        %2515 = vmatpush.msra.mxu0 %v2262
        %2516 = vmatpush.msra.mxu0 %v2261
        %2517 = vmatpush.msra.mxu0 %v2260
        %2518 = vmatpush.msra.mxu0 %v2259
        %2519 = vmatmul.f32.gmra.mxu0 %v2441
        %v2520 = vpop.f32.mrf.mxu0
        %v2521 = vadd.f32 %v2395, %v2520
        %2522 = vdwg.mxu0
        %2523 = vmatpush.msra.mxu0 0.0
        %2524 = vmatpush.msra.mxu0 0.0
        %2525 = vmatpush.msra.mxu0 0.0
        %2526 = vmatpush.msra.mxu0 0.0
        %2527 = vmatpush.msra.mxu0 0.0
        %2528 = vmatpush.msra.mxu0 0.0
        %2529 = vmatpush.msra.mxu0 0.0
        %2530 = vmatpush.msra.mxu0 0.0
        %2531 = vmatpush.msra.mxu0 0.0
        %2532 = vmatpush.msra.mxu0 0.0
        %2533 = vmatpush.msra.mxu0 0.0
        %2534 = vmatpush.msra.mxu0 0.0
        %2535 = vmatpush.msra.mxu0 %v2266
        %2536 = vmatpush.msra.mxu0 %v2265
        %2537 = vmatpush.msra.mxu0 %v2264
        %2538 = vmatpush.msra.mxu0 %v2263
        %2539 = vmatmul.f32.gmra.mxu0 %v2441
        %v2540 = vpop.f32.mrf.mxu0
        %v2541 = vadd.f32 %v2396, %v2540
        %2542 = vdwg.mxu0
        %2543 = vmatpush.msra.mxu0 0.0
        %2544 = vmatpush.msra.mxu0 0.0
        %2545 = vmatpush.msra.mxu0 0.0
        %2546 = vmatpush.msra.mxu0 0.0
        %2547 = vmatpush.msra.mxu0 0.0
        %2548 = vmatpush.msra.mxu0 0.0
        %2549 = vmatpush.msra.mxu0 0.0
        %2550 = vmatpush.msra.mxu0 0.0
        %2551 = vmatpush.msra.mxu0 0.0
        %2552 = vmatpush.msra.mxu0 0.0
        %2553 = vmatpush.msra.mxu0 0.0
        %2554 = vmatpush.msra.mxu0 0.0
        %2555 = vmatpush.msra.mxu0 %v2270
        %2556 = vmatpush.msra.mxu0 %v2269
        %2557 = vmatpush.msra.mxu0 %v2268
        %2558 = vmatpush.msra.mxu0 %v2267
        %2559 = vmatmul.f32.gmra.mxu0 %v2441
        %v2560 = vpop.f32.mrf.mxu0
        %v2561 = vadd.f32 %v2397, %v2560
        %2562 = vdwg.mxu0
        %2563 = vmatpush.msra.mxu0 0.0
        %2564 = vmatpush.msra.mxu0 0.0
        %2565 = vmatpush.msra.mxu0 0.0
        %2566 = vmatpush.msra.mxu0 0.0
        %2567 = vmatpush.msra.mxu0 0.0
        %2568 = vmatpush.msra.mxu0 0.0
        %2569 = vmatpush.msra.mxu0 0.0
        %2570 = vmatpush.msra.mxu0 0.0
        %2571 = vmatpush.msra.mxu0 0.0
        %2572 = vmatpush.msra.mxu0 0.0
        %2573 = vmatpush.msra.mxu0 0.0
        %2574 = vmatpush.msra.mxu0 0.0
        %2575 = vmatpush.msra.mxu0 %v2274
        %2576 = vmatpush.msra.mxu0 %v2273
        %2577 = vmatpush.msra.mxu0 %v2272
        %2578 = vmatpush.msra.mxu0 %v2271
        %2579 = vmatmul.f32.gmra.mxu0 %v2441
        %v2580 = vpop.f32.mrf.mxu0
        %v2581 = vadd.f32 %v2398, %v2580
        %2582 = vdwg.mxu0
        %2583 = vmatpush.msra.mxu0 0.0
        %2584 = vmatpush.msra.mxu0 0.0
        %2585 = vmatpush.msra.mxu0 0.0
        %2586 = vmatpush.msra.mxu0 0.0
        %2587 = vmatpush.msra.mxu0 0.0
        %2588 = vmatpush.msra.mxu0 0.0
        %2589 = vmatpush.msra.mxu0 0.0
        %2590 = vmatpush.msra.mxu0 0.0
        %2591 = vmatpush.msra.mxu0 0.0
        %2592 = vmatpush.msra.mxu0 0.0
        %2593 = vmatpush.msra.mxu0 0.0
        %2594 = vmatpush.msra.mxu0 0.0
        %2595 = vmatpush.msra.mxu0 %v2278
        %2596 = vmatpush.msra.mxu0 %v2277
        %2597 = vmatpush.msra.mxu0 %v2276
        %2598 = vmatpush.msra.mxu0 %v2275
        %2599 = vmatmul.f32.gmra.mxu0 %v2441
        %v2600 = vpop.f32.mrf.mxu0
        %v2601 = vadd.f32 %v2399, %v2600
        %2602 = vdwg.mxu0
        %2603 = vmatpush.msra.mxu0 0.0
        %2604 = vmatpush.msra.mxu0 0.0
        %2605 = vmatpush.msra.mxu0 0.0
        %2606 = vmatpush.msra.mxu0 0.0
        %2607 = vmatpush.msra.mxu0 0.0
        %2608 = vmatpush.msra.mxu0 0.0
        %2609 = vmatpush.msra.mxu0 0.0
        %2610 = vmatpush.msra.mxu0 0.0
        %2611 = vmatpush.msra.mxu0 0.0
        %2612 = vmatpush.msra.mxu0 0.0
        %2613 = vmatpush.msra.mxu0 0.0
        %2614 = vmatpush.msra.mxu0 0.0
        %2615 = vmatpush.msra.mxu0 %v2282
        %2616 = vmatpush.msra.mxu0 %v2281
        %2617 = vmatpush.msra.mxu0 %v2280
        %2618 = vmatpush.msra.mxu0 %v2279
        %2619 = vmatmul.f32.gmra.mxu0 %v2441
        %v2620 = vpop.f32.mrf.mxu0
        %v2621 = vadd.f32 %v2400, %v2620
        %2622 = vdwg.mxu0
        %2623 = vmatpush.msra.mxu0 0.0
        %2624 = vmatpush.msra.mxu0 0.0
        %2625 = vmatpush.msra.mxu0 0.0
        %2626 = vmatpush.msra.mxu0 0.0
        %2627 = vmatpush.msra.mxu0 0.0
        %2628 = vmatpush.msra.mxu0 0.0
        %2629 = vmatpush.msra.mxu0 0.0
        %2630 = vmatpush.msra.mxu0 0.0
        %2631 = vmatpush.msra.mxu0 0.0
        %2632 = vmatpush.msra.mxu0 0.0
        %2633 = vmatpush.msra.mxu0 0.0
        %2634 = vmatpush.msra.mxu0 0.0
        %2635 = vmatpush.msra.mxu0 %v2286
        %2636 = vmatpush.msra.mxu0 %v2285
        %2637 = vmatpush.msra.mxu0 %v2284
        %2638 = vmatpush.msra.mxu0 %v2283
        %2639 = vmatmul.f32.gmra.mxu0 %v2441
        %v2640 = vpop.f32.mrf.mxu0
        %v2641 = vadd.f32 %v2401, %v2640
        %2642 = vdwg.mxu0
        %2643 = vmatpush.msra.mxu0 0.0
        %2644 = vmatpush.msra.mxu0 0.0
        %2645 = vmatpush.msra.mxu0 0.0
        %2646 = vmatpush.msra.mxu0 0.0
        %2647 = vmatpush.msra.mxu0 0.0
        %2648 = vmatpush.msra.mxu0 0.0
        %2649 = vmatpush.msra.mxu0 0.0
        %2650 = vmatpush.msra.mxu0 0.0
        %2651 = vmatpush.msra.mxu0 0.0
        %2652 = vmatpush.msra.mxu0 0.0
        %2653 = vmatpush.msra.mxu0 0.0
        %2654 = vmatpush.msra.mxu0 0.0
        %2655 = vmatpush.msra.mxu0 %v2290
        %2656 = vmatpush.msra.mxu0 %v2289
        %2657 = vmatpush.msra.mxu0 %v2288
        %2658 = vmatpush.msra.mxu0 %v2287
        %2659 = vmatmul.f32.gmra.mxu0 %v2441
        %v2660 = vpop.f32.mrf.mxu0
        %v2661 = vadd.f32 %v2402, %v2660
        %2662 = vdwg.mxu0
        %2663 = vmatpush.msra.mxu0 0.0
        %2664 = vmatpush.msra.mxu0 0.0
        %2665 = vmatpush.msra.mxu0 0.0
        %2666 = vmatpush.msra.mxu0 0.0
        %2667 = vmatpush.msra.mxu0 0.0
        %2668 = vmatpush.msra.mxu0 0.0
        %2669 = vmatpush.msra.mxu0 0.0
        %2670 = vmatpush.msra.mxu0 0.0
        %2671 = vmatpush.msra.mxu0 0.0
        %2672 = vmatpush.msra.mxu0 0.0
        %2673 = vmatpush.msra.mxu0 0.0
        %2674 = vmatpush.msra.mxu0 0.0
        %2675 = vmatpush.msra.mxu0 %v2294
        %2676 = vmatpush.msra.mxu0 %v2293
        %2677 = vmatpush.msra.mxu0 %v2292
        %2678 = vmatpush.msra.mxu0 %v2291
        %2679 = vmatmul.f32.gmra.mxu0 %v2441
        %v2680 = vpop.f32.mrf.mxu0
        %v2681 = vadd.f32 %v2403, %v2680
        %2682 = vdwg.mxu0
        %2683 = vmatpush.msra.mxu0 0.0
        %2684 = vmatpush.msra.mxu0 0.0
        %2685 = vmatpush.msra.mxu0 0.0
        %2686 = vmatpush.msra.mxu0 0.0
        %2687 = vmatpush.msra.mxu0 0.0
        %2688 = vmatpush.msra.mxu0 0.0
        %2689 = vmatpush.msra.mxu0 0.0
        %2690 = vmatpush.msra.mxu0 0.0
        %2691 = vmatpush.msra.mxu0 0.0
        %2692 = vmatpush.msra.mxu0 0.0
        %2693 = vmatpush.msra.mxu0 0.0
        %2694 = vmatpush.msra.mxu0 0.0
        %2695 = vmatpush.msra.mxu0 %v2298
        %2696 = vmatpush.msra.mxu0 %v2297
        %2697 = vmatpush.msra.mxu0 %v2296
        %2698 = vmatpush.msra.mxu0 %v2295
        %2699 = vmatmul.f32.gmra.mxu0 %v2441
        %v2700 = vpop.f32.mrf.mxu0
        %v2701 = vadd.f32 %v2404, %v2700
        %2702 = vdwg.mxu0
        %2703 = vmatpush.msra.mxu0 0.0
        %2704 = vmatpush.msra.mxu0 0.0
        %2705 = vmatpush.msra.mxu0 0.0
        %2706 = vmatpush.msra.mxu0 0.0
        %2707 = vmatpush.msra.mxu0 0.0
        %2708 = vmatpush.msra.mxu0 0.0
        %2709 = vmatpush.msra.mxu0 0.0
        %2710 = vmatpush.msra.mxu0 0.0
        %2711 = vmatpush.msra.mxu0 0.0
        %2712 = vmatpush.msra.mxu0 0.0
        %2713 = vmatpush.msra.mxu0 0.0
        %2714 = vmatpush.msra.mxu0 0.0
        %2715 = vmatpush.msra.mxu0 %v2302
        %2716 = vmatpush.msra.mxu0 %v2301
        %2717 = vmatpush.msra.mxu0 %v2300
        %2718 = vmatpush.msra.mxu0 %v2299
        %2719 = vmatmul.f32.gmra.mxu0 %v2441
        %v2720 = vpop.f32.mrf.mxu0
        %v2721 = vadd.f32 %v2405, %v2720
        %2722 = vdwg.mxu0
        %2723 = vmatpush.msra.mxu0 0.0
        %2724 = vmatpush.msra.mxu0 0.0
        %2725 = vmatpush.msra.mxu0 0.0
        %2726 = vmatpush.msra.mxu0 0.0
        %2727 = vmatpush.msra.mxu0 0.0
        %2728 = vmatpush.msra.mxu0 0.0
        %2729 = vmatpush.msra.mxu0 0.0
        %2730 = vmatpush.msra.mxu0 0.0
        %2731 = vmatpush.msra.mxu0 0.0
        %2732 = vmatpush.msra.mxu0 0.0
        %2733 = vmatpush.msra.mxu0 0.0
        %2734 = vmatpush.msra.mxu0 0.0
        %2735 = vmatpush.msra.mxu0 %v2306
        %2736 = vmatpush.msra.mxu0 %v2305
        %2737 = vmatpush.msra.mxu0 %v2304
        %2738 = vmatpush.msra.mxu0 %v2303
        %2739 = vmatmul.f32.gmra.mxu0 %v2441
        %v2740 = vpop.f32.mrf.mxu0
        %v2741 = vadd.f32 %v2406, %v2740
        %2742 = vdwg.mxu0
        %2743 = vmatpush.msra.mxu0 0.0
        %2744 = vmatpush.msra.mxu0 0.0
        %2745 = vmatpush.msra.mxu0 0.0
        %2746 = vmatpush.msra.mxu0 0.0
        %2747 = vmatpush.msra.mxu0 0.0
        %2748 = vmatpush.msra.mxu0 0.0
        %2749 = vmatpush.msra.mxu0 0.0
        %2750 = vmatpush.msra.mxu0 0.0
        %2751 = vmatpush.msra.mxu0 0.0
        %2752 = vmatpush.msra.mxu0 0.0
        %2753 = vmatpush.msra.mxu0 0.0
        %2754 = vmatpush.msra.mxu0 0.0
        %2755 = vmatpush.msra.mxu0 %v2310
        %2756 = vmatpush.msra.mxu0 %v2309
        %2757 = vmatpush.msra.mxu0 %v2308
        %2758 = vmatpush.msra.mxu0 %v2307
        %2759 = vmatmul.f32.gmra.mxu0 %v2441
        %v2760 = vpop.f32.mrf.mxu0
        %v2761 = vadd.f32 %v2407, %v2760
        %2762 = vdwg.mxu0
        %2763 = vmatpush.msra.mxu0 0.0
        %2764 = vmatpush.msra.mxu0 0.0
        %2765 = vmatpush.msra.mxu0 0.0
        %2766 = vmatpush.msra.mxu0 0.0
        %2767 = vmatpush.msra.mxu0 0.0
        %2768 = vmatpush.msra.mxu0 0.0
        %2769 = vmatpush.msra.mxu0 0.0
        %2770 = vmatpush.msra.mxu0 0.0
        %2771 = vmatpush.msra.mxu0 0.0
        %2772 = vmatpush.msra.mxu0 0.0
        %2773 = vmatpush.msra.mxu0 0.0
        %2774 = vmatpush.msra.mxu0 0.0
        %2775 = vmatpush.msra.mxu0 %v2314
        %2776 = vmatpush.msra.mxu0 %v2313
        %2777 = vmatpush.msra.mxu0 %v2312
        %2778 = vmatpush.msra.mxu0 %v2311
        %2779 = vmatmul.f32.gmra.mxu0 %v2441
        %v2780 = vpop.f32.mrf.mxu0
        %v2781 = vadd.f32 %v2408, %v2780
        %2782 = vdwg.mxu0
        %2783 = vmatpush.msra.mxu0 0.0
        %2784 = vmatpush.msra.mxu0 0.0
        %2785 = vmatpush.msra.mxu0 0.0
        %2786 = vmatpush.msra.mxu0 0.0
        %2787 = vmatpush.msra.mxu0 0.0
        %2788 = vmatpush.msra.mxu0 0.0
        %2789 = vmatpush.msra.mxu0 0.0
        %2790 = vmatpush.msra.mxu0 0.0
        %2791 = vmatpush.msra.mxu0 0.0
        %2792 = vmatpush.msra.mxu0 0.0
        %2793 = vmatpush.msra.mxu0 0.0
        %2794 = vmatpush.msra.mxu0 0.0
        %2795 = vmatpush.msra.mxu0 %v2318
        %2796 = vmatpush.msra.mxu0 %v2317
        %2797 = vmatpush.msra.mxu0 %v2316
        %2798 = vmatpush.msra.mxu0 %v2315
        %2799 = vmatmul.f32.gmra.mxu0 %v2441
        %v2800 = vpop.f32.mrf.mxu0
        %v2801 = vadd.f32 %v2409, %v2800
        %2802 = vdwg.mxu0
        %2803 = vmatpush.msra.mxu0 0.0
        %2804 = vmatpush.msra.mxu0 0.0
        %2805 = vmatpush.msra.mxu0 0.0
        %2806 = vmatpush.msra.mxu0 0.0
        %2807 = vmatpush.msra.mxu0 0.0
        %2808 = vmatpush.msra.mxu0 0.0
        %2809 = vmatpush.msra.mxu0 0.0
        %2810 = vmatpush.msra.mxu0 0.0
        %2811 = vmatpush.msra.mxu0 0.0
        %2812 = vmatpush.msra.mxu0 0.0
        %2813 = vmatpush.msra.mxu0 0.0
        %2814 = vmatpush.msra.mxu0 0.0
        %2815 = vmatpush.msra.mxu0 %v2322
        %2816 = vmatpush.msra.mxu0 %v2321
        %2817 = vmatpush.msra.mxu0 %v2320
        %2818 = vmatpush.msra.mxu0 %v2319
        %2819 = vmatmul.f32.gmra.mxu0 %v2441
        %v2820 = vpop.f32.mrf.mxu0
        %v2821 = vadd.f32 %v2410, %v2820
        %2822 = vdwg.mxu0
        %2823 = vmatpush.msra.mxu0 0.0
        %2824 = vmatpush.msra.mxu0 0.0
        %2825 = vmatpush.msra.mxu0 0.0
        %2826 = vmatpush.msra.mxu0 0.0
        %2827 = vmatpush.msra.mxu0 0.0
        %2828 = vmatpush.msra.mxu0 0.0
        %2829 = vmatpush.msra.mxu0 0.0
        %2830 = vmatpush.msra.mxu0 0.0
        %2831 = vmatpush.msra.mxu0 0.0
        %2832 = vmatpush.msra.mxu0 0.0
        %2833 = vmatpush.msra.mxu0 0.0
        %2834 = vmatpush.msra.mxu0 0.0
        %2835 = vmatpush.msra.mxu0 %v2326
        %2836 = vmatpush.msra.mxu0 %v2325
        %2837 = vmatpush.msra.mxu0 %v2324
        %2838 = vmatpush.msra.mxu0 %v2323
        %2839 = vmatmul.f32.gmra.mxu0 %v2441
        %v2840 = vpop.f32.mrf.mxu0
        %v2841 = vadd.f32 %v2411, %v2840
        %2842 = vdwg.mxu0
        %2843 = vmatpush.msra.mxu0 0.0
        %2844 = vmatpush.msra.mxu0 0.0
        %2845 = vmatpush.msra.mxu0 0.0
        %2846 = vmatpush.msra.mxu0 0.0
        %2847 = vmatpush.msra.mxu0 0.0
        %2848 = vmatpush.msra.mxu0 0.0
        %2849 = vmatpush.msra.mxu0 0.0
        %2850 = vmatpush.msra.mxu0 0.0
        %2851 = vmatpush.msra.mxu0 0.0
        %2852 = vmatpush.msra.mxu0 0.0
        %2853 = vmatpush.msra.mxu0 0.0
        %2854 = vmatpush.msra.mxu0 0.0
        %2855 = vmatpush.msra.mxu0 %v2330
        %2856 = vmatpush.msra.mxu0 %v2329
        %2857 = vmatpush.msra.mxu0 %v2328
        %2858 = vmatpush.msra.mxu0 %v2327
        %2859 = vmatmul.f32.gmra.mxu0 %v2441
        %v2860 = vpop.f32.mrf.mxu0
        %v2861 = vadd.f32 %v2412, %v2860
        %2862 = vdwg.mxu0
        %2863 = vmatpush.msra.mxu0 0.0
        %2864 = vmatpush.msra.mxu0 0.0
        %2865 = vmatpush.msra.mxu0 0.0
        %2866 = vmatpush.msra.mxu0 0.0
        %2867 = vmatpush.msra.mxu0 0.0
        %2868 = vmatpush.msra.mxu0 0.0
        %2869 = vmatpush.msra.mxu0 0.0
        %2870 = vmatpush.msra.mxu0 0.0
        %2871 = vmatpush.msra.mxu0 0.0
        %2872 = vmatpush.msra.mxu0 0.0
        %2873 = vmatpush.msra.mxu0 0.0
        %2874 = vmatpush.msra.mxu0 0.0
        %2875 = vmatpush.msra.mxu0 %v2334
        %2876 = vmatpush.msra.mxu0 %v2333
        %2877 = vmatpush.msra.mxu0 %v2332
        %2878 = vmatpush.msra.mxu0 %v2331
        %2879 = vmatmul.f32.gmra.mxu0 %v2441
        %v2880 = vpop.f32.mrf.mxu0
        %v2881 = vadd.f32 %v2413, %v2880
        %2882 = vdwg.mxu0
        %2883 = vmatpush.msra.mxu0 0.0
        %2884 = vmatpush.msra.mxu0 0.0
        %2885 = vmatpush.msra.mxu0 0.0
        %2886 = vmatpush.msra.mxu0 0.0
        %2887 = vmatpush.msra.mxu0 0.0
        %2888 = vmatpush.msra.mxu0 0.0
        %2889 = vmatpush.msra.mxu0 0.0
        %2890 = vmatpush.msra.mxu0 0.0
        %2891 = vmatpush.msra.mxu0 0.0
        %2892 = vmatpush.msra.mxu0 0.0
        %2893 = vmatpush.msra.mxu0 0.0
        %2894 = vmatpush.msra.mxu0 0.0
        %2895 = vmatpush.msra.mxu0 %v2338
        %2896 = vmatpush.msra.mxu0 %v2337
        %2897 = vmatpush.msra.mxu0 %v2336
        %2898 = vmatpush.msra.mxu0 %v2335
        %2899 = vmatmul.f32.gmra.mxu0 %v2441
        %v2900 = vpop.f32.mrf.mxu0
        %v2901 = vadd.f32 %v2414, %v2900
        %2902 = vdwg.mxu0
        %2903 = vmatpush.msra.mxu0 0.0
        %2904 = vmatpush.msra.mxu0 0.0
        %2905 = vmatpush.msra.mxu0 0.0
        %2906 = vmatpush.msra.mxu0 0.0
        %2907 = vmatpush.msra.mxu0 0.0
        %2908 = vmatpush.msra.mxu0 0.0
        %2909 = vmatpush.msra.mxu0 0.0
        %2910 = vmatpush.msra.mxu0 0.0
        %2911 = vmatpush.msra.mxu0 0.0
        %2912 = vmatpush.msra.mxu0 0.0
        %2913 = vmatpush.msra.mxu0 0.0
        %2914 = vmatpush.msra.mxu0 0.0
        %2915 = vmatpush.msra.mxu0 %v2342
        %2916 = vmatpush.msra.mxu0 %v2341
        %2917 = vmatpush.msra.mxu0 %v2340
        %2918 = vmatpush.msra.mxu0 %v2339
        %2919 = vmatmul.f32.gmra.mxu0 %v2441
        %v2920 = vpop.f32.mrf.mxu0
        %v2921 = vadd.f32 %v2415, %v2920
        %2922 = vdwg.mxu0
        %v2924 = vsel %vm1279, %v2461, 0
        %v2927 = vsel %vm1279, %v2621, 0
        %2929 = vmatpush.xpose.msra.mxu0 0.0
        %2930 = vmatpush.xpose.msra.mxu0 0.0
        %2931 = vmatpush.xpose.msra.mxu0 0.0
        %2932 = vmatpush.xpose.msra.mxu0 0.0
        %2933 = vmatpush.xpose.msra.mxu0 0.0
        %2934 = vmatpush.xpose.msra.mxu0 0.0
        %2935 = vmatpush.xpose.msra.mxu0 0.0
        %2936 = vmatpush.xpose.msra.mxu0 0.0
        %2937 = vmatpush.xpose.msra.mxu0 0.0
        %2938 = vmatpush.xpose.msra.mxu0 0.0
        %2939 = vmatpush.xpose.msra.mxu0 0.0
        %2940 = vmatpush.xpose.msra.mxu0 0.0
        %2941 = vmatpush.xpose.msra.mxu0 0.0
        %2942 = vmatpush.xpose.msra.mxu0 0.0
        %2943 = vmatpush.xpose.msra.mxu0 0.0
        %2944 = vmatpush.xpose.msra.mxu0 %v2927
        %2945 = vmatmul.f32.gmra.mxu0 %v2924
        %v2946 = vpop.f32.mrf.mxu0
        %v2947 = vadd.f32 0.0, %v2946
        %2948 = vdwg.mxu0
        %v2950 = vsel %vm1279, %v2481, 0
        %v2953 = vsel %vm1279, %v2641, 0
        %2955 = vmatpush.xpose.msra.mxu0 0.0
        %2956 = vmatpush.xpose.msra.mxu0 0.0
        %2957 = vmatpush.xpose.msra.mxu0 0.0
        %2958 = vmatpush.xpose.msra.mxu0 0.0
        %2959 = vmatpush.xpose.msra.mxu0 0.0
        %2960 = vmatpush.xpose.msra.mxu0 0.0
        %2961 = vmatpush.xpose.msra.mxu0 0.0
        %2962 = vmatpush.xpose.msra.mxu0 0.0
        %2963 = vmatpush.xpose.msra.mxu0 0.0
        %2964 = vmatpush.xpose.msra.mxu0 0.0
        %2965 = vmatpush.xpose.msra.mxu0 0.0
        %2966 = vmatpush.xpose.msra.mxu0 0.0
        %2967 = vmatpush.xpose.msra.mxu0 0.0
        %2968 = vmatpush.xpose.msra.mxu0 0.0
        %2969 = vmatpush.xpose.msra.mxu0 0.0
        %2970 = vmatpush.xpose.msra.mxu0 %v2953
        %2971 = vmatmul.f32.gmra.mxu0 %v2950
        %v2972 = vpop.f32.mrf.mxu0
        %v2973 = vadd.f32 0.0, %v2972
        %2974 = vdwg.mxu0
        %v2976 = vsel %vm1279, %v2501, 0
        %v2979 = vsel %vm1279, %v2661, 0
        %2981 = vmatpush.xpose.msra.mxu0 0.0
        %2982 = vmatpush.xpose.msra.mxu0 0.0
        %2983 = vmatpush.xpose.msra.mxu0 0.0
        %2984 = vmatpush.xpose.msra.mxu0 0.0
        %2985 = vmatpush.xpose.msra.mxu0 0.0
        %2986 = vmatpush.xpose.msra.mxu0 0.0
        %2987 = vmatpush.xpose.msra.mxu0 0.0
        %2988 = vmatpush.xpose.msra.mxu0 0.0
        %2989 = vmatpush.xpose.msra.mxu0 0.0
        %2990 = vmatpush.xpose.msra.mxu0 0.0
        %2991 = vmatpush.xpose.msra.mxu0 0.0
        %2992 = vmatpush.xpose.msra.mxu0 0.0
        %2993 = vmatpush.xpose.msra.mxu0 0.0
        %2994 = vmatpush.xpose.msra.mxu0 0.0
        %2995 = vmatpush.xpose.msra.mxu0 0.0
        %2996 = vmatpush.xpose.msra.mxu0 %v2979
        %2997 = vmatmul.f32.gmra.mxu0 %v2976
        %v2998 = vpop.f32.mrf.mxu0
        %v2999 = vadd.f32 0.0, %v2998
        %3000 = vdwg.mxu0
        %v3002 = vsel %vm1279, %v2521, 0
        %v3005 = vsel %vm1279, %v2681, 0
        %3007 = vmatpush.xpose.msra.mxu0 0.0
        %3008 = vmatpush.xpose.msra.mxu0 0.0
        %3009 = vmatpush.xpose.msra.mxu0 0.0
        %3010 = vmatpush.xpose.msra.mxu0 0.0
        %3011 = vmatpush.xpose.msra.mxu0 0.0
        %3012 = vmatpush.xpose.msra.mxu0 0.0
        %3013 = vmatpush.xpose.msra.mxu0 0.0
        %3014 = vmatpush.xpose.msra.mxu0 0.0
        %3015 = vmatpush.xpose.msra.mxu0 0.0
        %3016 = vmatpush.xpose.msra.mxu0 0.0
        %3017 = vmatpush.xpose.msra.mxu0 0.0
        %3018 = vmatpush.xpose.msra.mxu0 0.0
        %3019 = vmatpush.xpose.msra.mxu0 0.0
        %3020 = vmatpush.xpose.msra.mxu0 0.0
        %3021 = vmatpush.xpose.msra.mxu0 0.0
        %3022 = vmatpush.xpose.msra.mxu0 %v3005
        %3023 = vmatmul.f32.gmra.mxu0 %v3002
        %v3024 = vpop.f32.mrf.mxu0
        %v3025 = vadd.f32 0.0, %v3024
        %3026 = vdwg.mxu0
        %v3028 = vsel %vm1279, %v2541, 0
        %v3031 = vsel %vm1279, %v2701, 0
        %3033 = vmatpush.xpose.msra.mxu0 0.0
        %3034 = vmatpush.xpose.msra.mxu0 0.0
        %3035 = vmatpush.xpose.msra.mxu0 0.0
        %3036 = vmatpush.xpose.msra.mxu0 0.0
        %3037 = vmatpush.xpose.msra.mxu0 0.0
        %3038 = vmatpush.xpose.msra.mxu0 0.0
        %3039 = vmatpush.xpose.msra.mxu0 0.0
        %3040 = vmatpush.xpose.msra.mxu0 0.0
        %3041 = vmatpush.xpose.msra.mxu0 0.0
        %3042 = vmatpush.xpose.msra.mxu0 0.0
        %3043 = vmatpush.xpose.msra.mxu0 0.0
        %3044 = vmatpush.xpose.msra.mxu0 0.0
        %3045 = vmatpush.xpose.msra.mxu0 0.0
        %3046 = vmatpush.xpose.msra.mxu0 0.0
        %3047 = vmatpush.xpose.msra.mxu0 0.0
        %3048 = vmatpush.xpose.msra.mxu0 %v3031
        %3049 = vmatmul.f32.gmra.mxu0 %v3028
        %v3050 = vpop.f32.mrf.mxu0
        %v3051 = vadd.f32 0.0, %v3050
        %3052 = vdwg.mxu0
        %v3054 = vsel %vm1279, %v2561, 0
        %v3057 = vsel %vm1279, %v2721, 0
        %3059 = vmatpush.xpose.msra.mxu0 0.0
        %3060 = vmatpush.xpose.msra.mxu0 0.0
        %3061 = vmatpush.xpose.msra.mxu0 0.0
        %3062 = vmatpush.xpose.msra.mxu0 0.0
        %3063 = vmatpush.xpose.msra.mxu0 0.0
        %3064 = vmatpush.xpose.msra.mxu0 0.0
        %3065 = vmatpush.xpose.msra.mxu0 0.0
        %3066 = vmatpush.xpose.msra.mxu0 0.0
        %3067 = vmatpush.xpose.msra.mxu0 0.0
        %3068 = vmatpush.xpose.msra.mxu0 0.0
        %3069 = vmatpush.xpose.msra.mxu0 0.0
        %3070 = vmatpush.xpose.msra.mxu0 0.0
        %3071 = vmatpush.xpose.msra.mxu0 0.0
        %3072 = vmatpush.xpose.msra.mxu0 0.0
        %3073 = vmatpush.xpose.msra.mxu0 0.0
        %3074 = vmatpush.xpose.msra.mxu0 %v3057
        %3075 = vmatmul.f32.gmra.mxu0 %v3054
        %v3076 = vpop.f32.mrf.mxu0
        %v3077 = vadd.f32 0.0, %v3076
        %3078 = vdwg.mxu0
        %v3080 = vsel %vm1279, %v2581, 0
        %v3083 = vsel %vm1279, %v2741, 0
        %3085 = vmatpush.xpose.msra.mxu0 0.0
        %3086 = vmatpush.xpose.msra.mxu0 0.0
        %3087 = vmatpush.xpose.msra.mxu0 0.0
        %3088 = vmatpush.xpose.msra.mxu0 0.0
        %3089 = vmatpush.xpose.msra.mxu0 0.0
        %3090 = vmatpush.xpose.msra.mxu0 0.0
        %3091 = vmatpush.xpose.msra.mxu0 0.0
        %3092 = vmatpush.xpose.msra.mxu0 0.0
        %3093 = vmatpush.xpose.msra.mxu0 0.0
        %3094 = vmatpush.xpose.msra.mxu0 0.0
        %3095 = vmatpush.xpose.msra.mxu0 0.0
        %3096 = vmatpush.xpose.msra.mxu0 0.0
        %3097 = vmatpush.xpose.msra.mxu0 0.0
        %3098 = vmatpush.xpose.msra.mxu0 0.0
        %3099 = vmatpush.xpose.msra.mxu0 0.0
        %3100 = vmatpush.xpose.msra.mxu0 %v3083
        %3101 = vmatmul.f32.gmra.mxu0 %v3080
        %v3102 = vpop.f32.mrf.mxu0
        %v3103 = vadd.f32 0.0, %v3102
        %3104 = vdwg.mxu0
        %v3106 = vsel %vm1279, %v2601, 0
        %v3109 = vsel %vm1279, %v2761, 0
        %3111 = vmatpush.xpose.msra.mxu0 0.0
        %3112 = vmatpush.xpose.msra.mxu0 0.0
        %3113 = vmatpush.xpose.msra.mxu0 0.0
        %3114 = vmatpush.xpose.msra.mxu0 0.0
        %3115 = vmatpush.xpose.msra.mxu0 0.0
        %3116 = vmatpush.xpose.msra.mxu0 0.0
        %3117 = vmatpush.xpose.msra.mxu0 0.0
        %3118 = vmatpush.xpose.msra.mxu0 0.0
        %3119 = vmatpush.xpose.msra.mxu0 0.0
        %3120 = vmatpush.xpose.msra.mxu0 0.0
        %3121 = vmatpush.xpose.msra.mxu0 0.0
        %3122 = vmatpush.xpose.msra.mxu0 0.0
        %3123 = vmatpush.xpose.msra.mxu0 0.0
        %3124 = vmatpush.xpose.msra.mxu0 0.0
        %3125 = vmatpush.xpose.msra.mxu0 0.0
        %3126 = vmatpush.xpose.msra.mxu0 %v3109
        %3127 = vmatmul.f32.gmra.mxu0 %v3106
        %v3128 = vpop.f32.mrf.mxu0
        %v3129 = vadd.f32 0.0, %v3128
        %3130 = vdwg.mxu0
        %v3131 = vsel %vm577, %v2947, -inf
        %3132 = vmax.xlane.f32.xlu0 %v3131
        %v3133 = vpop.xlane.xlu0 %3132
        %v3134 = vsel %vm577, %v2973, -inf
        %3135 = vmax.xlane.f32.xlu0 %v3134
        %v3136 = vpop.xlane.xlu0 %3135
        %v3137 = vsel %vm577, %v2999, -inf
        %3138 = vmax.xlane.f32.xlu0 %v3137
        %v3139 = vpop.xlane.xlu0 %3138
        %v3140 = vsel %vm577, %v3025, -inf
        %3141 = vmax.xlane.f32.xlu0 %v3140
        %v3142 = vpop.xlane.xlu0 %3141
        %v3143 = vsel %vm577, %v3051, -inf
        %3144 = vmax.xlane.f32.xlu0 %v3143
        %v3145 = vpop.xlane.xlu0 %3144
        %v3146 = vsel %vm577, %v3077, -inf
        %3147 = vmax.xlane.f32.xlu0 %v3146
        %v3148 = vpop.xlane.xlu0 %3147
        %v3149 = vsel %vm577, %v3103, -inf
        %3150 = vmax.xlane.f32.xlu0 %v3149
        %v3151 = vpop.xlane.xlu0 %3150
        %v3152 = vsel %vm577, %v3129, -inf
        %3153 = vmax.xlane.f32.xlu0 %v3152
        %v3154 = vpop.xlane.xlu0 %3153
        %v3155 = vsub.f32 %v2947, %v3133
        %v3156 = vsub.f32 %v2973, %v3136
        %v3157 = vsub.f32 %v2999, %v3139
        %v3158 = vsub.f32 %v3025, %v3142
        %v3159 = vsub.f32 %v3051, %v3145
        %v3160 = vsub.f32 %v3077, %v3148
        %v3161 = vsub.f32 %v3103, %v3151
        %v3162 = vsub.f32 %v3129, %v3154
        %v3163 = vmul.f32 %v3155, 1.442695
        %v3164 = vpow.pop %v3163
        %v3165 = vmul.f32 %v3156, 1.442695
        %v3166 = vpow.pop %v3165
        %v3167 = vmul.f32 %v3157, 1.442695
        %v3168 = vpow.pop %v3167
        %v3169 = vmul.f32 %v3158, 1.442695
        %v3170 = vpow.pop %v3169
        %v3171 = vmul.f32 %v3159, 1.442695
        %v3172 = vpow.pop %v3171
        %v3173 = vmul.f32 %v3160, 1.442695
        %v3174 = vpow.pop %v3173
        %v3175 = vmul.f32 %v3161, 1.442695
        %v3176 = vpow.pop %v3175
        %v3177 = vmul.f32 %v3162, 1.442695
        %v3178 = vpow.pop %v3177
        %v3179 = vsel %vm577, %v3164, 0.0
        %3180 = vadd.xlane.f32.xlu0 %v3179
        %v3181 = vpop.xlane.xlu0 %3180
        %v3182 = vsel %vm577, %v3166, 0.0
        %3183 = vadd.xlane.f32.xlu0 %v3182
        %v3184 = vpop.xlane.xlu0 %3183
        %v3185 = vsel %vm577, %v3168, 0.0
        %3186 = vadd.xlane.f32.xlu0 %v3185
        %v3187 = vpop.xlane.xlu0 %3186
        %v3188 = vsel %vm577, %v3170, 0.0
        %3189 = vadd.xlane.f32.xlu0 %v3188
        %v3190 = vpop.xlane.xlu0 %3189
        %v3191 = vsel %vm577, %v3172, 0.0
        %3192 = vadd.xlane.f32.xlu0 %v3191
        %v3193 = vpop.xlane.xlu0 %3192
        %v3194 = vsel %vm577, %v3174, 0.0
        %3195 = vadd.xlane.f32.xlu0 %v3194
        %v3196 = vpop.xlane.xlu0 %3195
        %v3197 = vsel %vm577, %v3176, 0.0
        %3198 = vadd.xlane.f32.xlu0 %v3197
        %v3199 = vpop.xlane.xlu0 %3198
        %v3200 = vsel %vm577, %v3178, 0.0
        %3201 = vadd.xlane.f32.xlu0 %v3200
        %v3202 = vpop.xlane.xlu0 %3201
        %v3203 = vrcp.pop %v3181
        %v3204 = vmul.f32 %v3181, %v3203
        %v3205 = vsub.f32 1.0, %v3204
        %v3206 = vmul.f32 %v3203, %v3205
        %v3207 = vadd.f32 %v3203, %v3206
        %vm3208 = vweird.f32 %v3181
        %vm3209 = vweird.f32 %v3203
        %vm3210 = vmor %vm3208, %vm3209
        %v3211 = vsel %vm3210, %v3203, %v3207
        %v3212 = vand.u32 2147483647, %v3181
        %vm3213 = vcmp.eq.f32.partialorder %v3212, 8.507059e+37
        %v3214 = vand.u32 %v3181, 2147483648
        %v3215 = vor.u32 1.1754944e-38, %v3214
        %v3216 = vsel %vm3213, %v3215, %v3211
        %v3217 = vrcp.pop %v3184
        %v3218 = vmul.f32 %v3184, %v3217
        %v3219 = vsub.f32 1.0, %v3218
        %v3220 = vmul.f32 %v3217, %v3219
        %v3221 = vadd.f32 %v3217, %v3220
        %vm3222 = vweird.f32 %v3184
        %vm3223 = vweird.f32 %v3217
        %vm3224 = vmor %vm3222, %vm3223
        %v3225 = vsel %vm3224, %v3217, %v3221
        %v3226 = vand.u32 2147483647, %v3184
        %vm3227 = vcmp.eq.f32.partialorder %v3226, 8.507059e+37
        %v3228 = vand.u32 %v3184, 2147483648
        %v3229 = vor.u32 1.1754944e-38, %v3228
        %v3230 = vsel %vm3227, %v3229, %v3225
        %v3231 = vrcp.pop %v3187
        %v3232 = vmul.f32 %v3187, %v3231
        %v3233 = vsub.f32 1.0, %v3232
        %v3234 = vmul.f32 %v3231, %v3233
        %v3235 = vadd.f32 %v3231, %v3234
        %vm3236 = vweird.f32 %v3187
        %vm3237 = vweird.f32 %v3231
        %vm3238 = vmor %vm3236, %vm3237
        %v3239 = vsel %vm3238, %v3231, %v3235
        %v3240 = vand.u32 2147483647, %v3187
        %vm3241 = vcmp.eq.f32.partialorder %v3240, 8.507059e+37
        %v3242 = vand.u32 %v3187, 2147483648
        %v3243 = vor.u32 1.1754944e-38, %v3242
        %v3244 = vsel %vm3241, %v3243, %v3239
        %v3245 = vrcp.pop %v3190
        %v3246 = vmul.f32 %v3190, %v3245
        %v3247 = vsub.f32 1.0, %v3246
        %v3248 = vmul.f32 %v3245, %v3247
        %v3249 = vadd.f32 %v3245, %v3248
        %vm3250 = vweird.f32 %v3190
        %vm3251 = vweird.f32 %v3245
        %vm3252 = vmor %vm3250, %vm3251
        %v3253 = vsel %vm3252, %v3245, %v3249
        %v3254 = vand.u32 2147483647, %v3190
        %vm3255 = vcmp.eq.f32.partialorder %v3254, 8.507059e+37
        %v3256 = vand.u32 %v3190, 2147483648
        %v3257 = vor.u32 1.1754944e-38, %v3256
        %v3258 = vsel %vm3255, %v3257, %v3253
        %v3259 = vrcp.pop %v3193
        %v3260 = vmul.f32 %v3193, %v3259
        %v3261 = vsub.f32 1.0, %v3260
        %v3262 = vmul.f32 %v3259, %v3261
        %v3263 = vadd.f32 %v3259, %v3262
        %vm3264 = vweird.f32 %v3193
        %vm3265 = vweird.f32 %v3259
        %vm3266 = vmor %vm3264, %vm3265
        %v3267 = vsel %vm3266, %v3259, %v3263
        %v3268 = vand.u32 2147483647, %v3193
        %vm3269 = vcmp.eq.f32.partialorder %v3268, 8.507059e+37
        %v3270 = vand.u32 %v3193, 2147483648
        %v3271 = vor.u32 1.1754944e-38, %v3270
        %v3272 = vsel %vm3269, %v3271, %v3267
        %v3273 = vrcp.pop %v3196
        %v3274 = vmul.f32 %v3196, %v3273
        %v3275 = vsub.f32 1.0, %v3274
        %v3276 = vmul.f32 %v3273, %v3275
        %v3277 = vadd.f32 %v3273, %v3276
        %vm3278 = vweird.f32 %v3196
        %vm3279 = vweird.f32 %v3273
        %vm3280 = vmor %vm3278, %vm3279
        %v3281 = vsel %vm3280, %v3273, %v3277
        %v3282 = vand.u32 2147483647, %v3196
        %vm3283 = vcmp.eq.f32.partialorder %v3282, 8.507059e+37
        %v3284 = vand.u32 %v3196, 2147483648
        %v3285 = vor.u32 1.1754944e-38, %v3284
        %v3286 = vsel %vm3283, %v3285, %v3281
        %v3287 = vrcp.pop %v3199
        %v3288 = vmul.f32 %v3199, %v3287
        %v3289 = vsub.f32 1.0, %v3288
        %v3290 = vmul.f32 %v3287, %v3289
        %v3291 = vadd.f32 %v3287, %v3290
        %vm3292 = vweird.f32 %v3199
        %vm3293 = vweird.f32 %v3287
        %vm3294 = vmor %vm3292, %vm3293
        %v3295 = vsel %vm3294, %v3287, %v3291
        %v3296 = vand.u32 2147483647, %v3199
        %vm3297 = vcmp.eq.f32.partialorder %v3296, 8.507059e+37
        %v3298 = vand.u32 %v3199, 2147483648
        %v3299 = vor.u32 1.1754944e-38, %v3298
        %v3300 = vsel %vm3297, %v3299, %v3295
        %v3301 = vrcp.pop %v3202
        %v3302 = vmul.f32 %v3202, %v3301
        %v3303 = vsub.f32 1.0, %v3302
        %v3304 = vmul.f32 %v3301, %v3303
        %v3305 = vadd.f32 %v3301, %v3304
        %vm3306 = vweird.f32 %v3202
        %vm3307 = vweird.f32 %v3301
        %vm3308 = vmor %vm3306, %vm3307
        %v3309 = vsel %vm3308, %v3301, %v3305
        %v3310 = vand.u32 2147483647, %v3202
        %vm3311 = vcmp.eq.f32.partialorder %v3310, 8.507059e+37
        %v3312 = vand.u32 %v3202, 2147483648
        %v3313 = vor.u32 1.1754944e-38, %v3312
        %v3314 = vsel %vm3311, %v3313, %v3309
        %v3315 = vmul.f32 %v3164, %v3216
        %v3316 = vmul.f32 %v3166, %v3230
        %v3317 = vmul.f32 %v3168, %v3244
        %v3318 = vmul.f32 %v3170, %v3258
        %v3319 = vmul.f32 %v3172, %v3272
        %v3320 = vmul.f32 %v3174, %v3286
        %v3321 = vmul.f32 %v3176, %v3300
        %v3322 = vmul.f32 %v3178, %v3314
        %v3324 = vsel %vm577, %v3315, 0
        %3326 = vmatpush.msra.mxu0 0.0
        %3327 = vmatpush.msra.mxu0 0.0
        %3328 = vmatpush.msra.mxu0 0.0
        %3329 = vmatpush.msra.mxu0 0.0
        %3330 = vmatpush.msra.mxu0 0.0
        %3331 = vmatpush.msra.mxu0 0.0
        %3332 = vmatpush.msra.mxu0 0.0
        %3333 = vmatpush.msra.mxu0 0.0
        %3334 = vmatpush.msra.mxu0 0.0
        %3335 = vmatpush.msra.mxu0 0.0
        %3336 = vmatpush.msra.mxu0 0.0
        %3337 = vmatpush.msra.mxu0 0.0
        %3338 = vmatpush.msra.mxu0 0.0
        %3339 = vmatpush.msra.mxu0 0.0
        %3340 = vmatpush.msra.mxu0 0.0
        %3341 = vmatpush.msra.mxu0 %v2781
        %3342 = vmatmul.f32.gmra.mxu0 %v3324
        %v3343 = vpop.f32.mrf.mxu0
        %v3344 = vadd.f32 0.0, %v3343
        %3345 = vdwg.mxu0
        %v3347 = vsel %vm577, %v3316, 0
        %3349 = vmatpush.msra.mxu0 0.0
        %3350 = vmatpush.msra.mxu0 0.0
        %3351 = vmatpush.msra.mxu0 0.0
        %3352 = vmatpush.msra.mxu0 0.0
        %3353 = vmatpush.msra.mxu0 0.0
        %3354 = vmatpush.msra.mxu0 0.0
        %3355 = vmatpush.msra.mxu0 0.0
        %3356 = vmatpush.msra.mxu0 0.0
        %3357 = vmatpush.msra.mxu0 0.0
        %3358 = vmatpush.msra.mxu0 0.0
        %3359 = vmatpush.msra.mxu0 0.0
        %3360 = vmatpush.msra.mxu0 0.0
        %3361 = vmatpush.msra.mxu0 0.0
        %3362 = vmatpush.msra.mxu0 0.0
        %3363 = vmatpush.msra.mxu0 0.0
        %3364 = vmatpush.msra.mxu0 %v2801
        %3365 = vmatmul.f32.gmra.mxu0 %v3347
        %v3366 = vpop.f32.mrf.mxu0
        %v3367 = vadd.f32 0.0, %v3366
        %3368 = vdwg.mxu0
        %v3370 = vsel %vm577, %v3317, 0
        %3372 = vmatpush.msra.mxu0 0.0
        %3373 = vmatpush.msra.mxu0 0.0
        %3374 = vmatpush.msra.mxu0 0.0
        %3375 = vmatpush.msra.mxu0 0.0
        %3376 = vmatpush.msra.mxu0 0.0
        %3377 = vmatpush.msra.mxu0 0.0
        %3378 = vmatpush.msra.mxu0 0.0
        %3379 = vmatpush.msra.mxu0 0.0
        %3380 = vmatpush.msra.mxu0 0.0
        %3381 = vmatpush.msra.mxu0 0.0
        %3382 = vmatpush.msra.mxu0 0.0
        %3383 = vmatpush.msra.mxu0 0.0
        %3384 = vmatpush.msra.mxu0 0.0
        %3385 = vmatpush.msra.mxu0 0.0
        %3386 = vmatpush.msra.mxu0 0.0
        %3387 = vmatpush.msra.mxu0 %v2821
        %3388 = vmatmul.f32.gmra.mxu0 %v3370
        %v3389 = vpop.f32.mrf.mxu0
        %v3390 = vadd.f32 0.0, %v3389
        %3391 = vdwg.mxu0
        %v3393 = vsel %vm577, %v3318, 0
        %3395 = vmatpush.msra.mxu0 0.0
        %3396 = vmatpush.msra.mxu0 0.0
        %3397 = vmatpush.msra.mxu0 0.0
        %3398 = vmatpush.msra.mxu0 0.0
        %3399 = vmatpush.msra.mxu0 0.0
        %3400 = vmatpush.msra.mxu0 0.0
        %3401 = vmatpush.msra.mxu0 0.0
        %3402 = vmatpush.msra.mxu0 0.0
        %3403 = vmatpush.msra.mxu0 0.0
        %3404 = vmatpush.msra.mxu0 0.0
        %3405 = vmatpush.msra.mxu0 0.0
        %3406 = vmatpush.msra.mxu0 0.0
        %3407 = vmatpush.msra.mxu0 0.0
        %3408 = vmatpush.msra.mxu0 0.0
        %3409 = vmatpush.msra.mxu0 0.0
        %3410 = vmatpush.msra.mxu0 %v2841
        %3411 = vmatmul.f32.gmra.mxu0 %v3393
        %v3412 = vpop.f32.mrf.mxu0
        %v3413 = vadd.f32 0.0, %v3412
        %3414 = vdwg.mxu0
        %v3416 = vsel %vm577, %v3319, 0
        %3418 = vmatpush.msra.mxu0 0.0
        %3419 = vmatpush.msra.mxu0 0.0
        %3420 = vmatpush.msra.mxu0 0.0
        %3421 = vmatpush.msra.mxu0 0.0
        %3422 = vmatpush.msra.mxu0 0.0
        %3423 = vmatpush.msra.mxu0 0.0
        %3424 = vmatpush.msra.mxu0 0.0
        %3425 = vmatpush.msra.mxu0 0.0
        %3426 = vmatpush.msra.mxu0 0.0
        %3427 = vmatpush.msra.mxu0 0.0
        %3428 = vmatpush.msra.mxu0 0.0
        %3429 = vmatpush.msra.mxu0 0.0
        %3430 = vmatpush.msra.mxu0 0.0
        %3431 = vmatpush.msra.mxu0 0.0
        %3432 = vmatpush.msra.mxu0 0.0
        %3433 = vmatpush.msra.mxu0 %v2861
        %3434 = vmatmul.f32.gmra.mxu0 %v3416
        %v3435 = vpop.f32.mrf.mxu0
        %v3436 = vadd.f32 0.0, %v3435
        %3437 = vdwg.mxu0
        %v3439 = vsel %vm577, %v3320, 0
        %3441 = vmatpush.msra.mxu0 0.0
        %3442 = vmatpush.msra.mxu0 0.0
        %3443 = vmatpush.msra.mxu0 0.0
        %3444 = vmatpush.msra.mxu0 0.0
        %3445 = vmatpush.msra.mxu0 0.0
        %3446 = vmatpush.msra.mxu0 0.0
        %3447 = vmatpush.msra.mxu0 0.0
        %3448 = vmatpush.msra.mxu0 0.0
        %3449 = vmatpush.msra.mxu0 0.0
        %3450 = vmatpush.msra.mxu0 0.0
        %3451 = vmatpush.msra.mxu0 0.0
        %3452 = vmatpush.msra.mxu0 0.0
        %3453 = vmatpush.msra.mxu0 0.0
        %3454 = vmatpush.msra.mxu0 0.0
        %3455 = vmatpush.msra.mxu0 0.0
        %3456 = vmatpush.msra.mxu0 %v2881
        %3457 = vmatmul.f32.gmra.mxu0 %v3439
        %v3458 = vpop.f32.mrf.mxu0
        %v3459 = vadd.f32 0.0, %v3458
        %3460 = vdwg.mxu0
        %v3462 = vsel %vm577, %v3321, 0
        %3464 = vmatpush.msra.mxu0 0.0
        %3465 = vmatpush.msra.mxu0 0.0
        %3466 = vmatpush.msra.mxu0 0.0
        %3467 = vmatpush.msra.mxu0 0.0
        %3468 = vmatpush.msra.mxu0 0.0
        %3469 = vmatpush.msra.mxu0 0.0
        %3470 = vmatpush.msra.mxu0 0.0
        %3471 = vmatpush.msra.mxu0 0.0
        %3472 = vmatpush.msra.mxu0 0.0
        %3473 = vmatpush.msra.mxu0 0.0
        %3474 = vmatpush.msra.mxu0 0.0
        %3475 = vmatpush.msra.mxu0 0.0
        %3476 = vmatpush.msra.mxu0 0.0
        %3477 = vmatpush.msra.mxu0 0.0
        %3478 = vmatpush.msra.mxu0 0.0
        %3479 = vmatpush.msra.mxu0 %v2901
        %3480 = vmatmul.f32.gmra.mxu0 %v3462
        %v3481 = vpop.f32.mrf.mxu0
        %v3482 = vadd.f32 0.0, %v3481
        %3483 = vdwg.mxu0
        %v3485 = vsel %vm577, %v3322, 0
        %3487 = vmatpush.msra.mxu0 0.0
        %3488 = vmatpush.msra.mxu0 0.0
        %3489 = vmatpush.msra.mxu0 0.0
        %3490 = vmatpush.msra.mxu0 0.0
        %3491 = vmatpush.msra.mxu0 0.0
        %3492 = vmatpush.msra.mxu0 0.0
        %3493 = vmatpush.msra.mxu0 0.0
        %3494 = vmatpush.msra.mxu0 0.0
        %3495 = vmatpush.msra.mxu0 0.0
        %3496 = vmatpush.msra.mxu0 0.0
        %3497 = vmatpush.msra.mxu0 0.0
        %3498 = vmatpush.msra.mxu0 0.0
        %3499 = vmatpush.msra.mxu0 0.0
        %3500 = vmatpush.msra.mxu0 0.0
        %3501 = vmatpush.msra.mxu0 0.0
        %3502 = vmatpush.msra.mxu0 %v2921
        %3503 = vmatmul.f32.gmra.mxu0 %v3485
        %v3504 = vpop.f32.mrf.mxu0
        %v3505 = vadd.f32 0.0, %v3504
        %3506 = vdwg.mxu0
        %s3507 = scalar_lea.vmem %s6, 32
        %v3508 = vld [vmem:[%s3507] sm:$0xf]
        %v3509 = vld [vmem:[%s3507 + $0x4] sm:$0xf]
        %v3510 = vld [vmem:[%s3507 + $0x8] sm:$0xf]
        %v3511 = vld [vmem:[%s3507 + $0xc] sm:$0xf]
        %v3512 = vld [vmem:[%s3507 + $0x10] sm:$0xf]
        %v3513 = vld [vmem:[%s3507 + $0x14] sm:$0xf]
        %v3514 = vld [vmem:[%s3507 + $0x18] sm:$0xf]
        %v3515 = vld [vmem:[%s3507 + $0x1c] sm:$0xf]
        %v3517 = vsel %vm1279, %v3344, 0
        %v3520 = vsel %vm1875, %v3508, 0
        %3522 = vmatpush.msra.mxu0 0.0
        %3523 = vmatpush.msra.mxu0 0.0
        %3524 = vmatpush.msra.mxu0 0.0
        %3525 = vmatpush.msra.mxu0 0.0
        %3526 = vmatpush.msra.mxu0 0.0
        %3527 = vmatpush.msra.mxu0 0.0
        %3528 = vmatpush.msra.mxu0 0.0
        %3529 = vmatpush.msra.mxu0 0.0
        %3530 = vmatpush.msra.mxu0 0.0
        %3531 = vmatpush.msra.mxu0 0.0
        %3532 = vmatpush.msra.mxu0 0.0
        %3533 = vmatpush.msra.mxu0 0.0
        %3534 = vmatpush.msra.mxu0 0.0
        %3535 = vmatpush.msra.mxu0 0.0
        %3536 = vmatpush.msra.mxu0 0.0
        %3537 = vmatpush.msra.mxu0 %v3520
        %3538 = vmatmul.f32.gmra.mxu0 %v3517
        %v3539 = vpop.f32.mrf.mxu0
        %v3540 = vadd.f32 0.0, %v3539
        %3541 = vdwg.mxu0
        %v3543 = vsel %vm1279, %v3367, 0
        %v3546 = vsel %vm1875, %v3509, 0
        %3548 = vmatpush.msra.mxu0 0.0
        %3549 = vmatpush.msra.mxu0 0.0
        %3550 = vmatpush.msra.mxu0 0.0
        %3551 = vmatpush.msra.mxu0 0.0
        %3552 = vmatpush.msra.mxu0 0.0
        %3553 = vmatpush.msra.mxu0 0.0
        %3554 = vmatpush.msra.mxu0 0.0
        %3555 = vmatpush.msra.mxu0 0.0
        %3556 = vmatpush.msra.mxu0 0.0
        %3557 = vmatpush.msra.mxu0 0.0
        %3558 = vmatpush.msra.mxu0 0.0
        %3559 = vmatpush.msra.mxu0 0.0
        %3560 = vmatpush.msra.mxu0 0.0
        %3561 = vmatpush.msra.mxu0 0.0
        %3562 = vmatpush.msra.mxu0 0.0
        %3563 = vmatpush.msra.mxu0 %v3546
        %3564 = vmatmul.f32.gmra.mxu0 %v3543
        %v3565 = vpop.f32.mrf.mxu0
        %v3566 = vadd.f32 0.0, %v3565
        %3567 = vdwg.mxu0
        %v3569 = vsel %vm1279, %v3390, 0
        %v3572 = vsel %vm1875, %v3510, 0
        %3574 = vmatpush.msra.mxu0 0.0
        %3575 = vmatpush.msra.mxu0 0.0
        %3576 = vmatpush.msra.mxu0 0.0
        %3577 = vmatpush.msra.mxu0 0.0
        %3578 = vmatpush.msra.mxu0 0.0
        %3579 = vmatpush.msra.mxu0 0.0
        %3580 = vmatpush.msra.mxu0 0.0
        %3581 = vmatpush.msra.mxu0 0.0
        %3582 = vmatpush.msra.mxu0 0.0
        %3583 = vmatpush.msra.mxu0 0.0
        %3584 = vmatpush.msra.mxu0 0.0
        %3585 = vmatpush.msra.mxu0 0.0
        %3586 = vmatpush.msra.mxu0 0.0
        %3587 = vmatpush.msra.mxu0 0.0
        %3588 = vmatpush.msra.mxu0 0.0
        %3589 = vmatpush.msra.mxu0 %v3572
        %3590 = vmatmul.f32.gmra.mxu0 %v3569
        %v3591 = vpop.f32.mrf.mxu0
        %v3592 = vadd.f32 0.0, %v3591
        %3593 = vdwg.mxu0
        %v3595 = vsel %vm1279, %v3413, 0
        %v3598 = vsel %vm1875, %v3511, 0
        %3600 = vmatpush.msra.mxu0 0.0
        %3601 = vmatpush.msra.mxu0 0.0
        %3602 = vmatpush.msra.mxu0 0.0
        %3603 = vmatpush.msra.mxu0 0.0
        %3604 = vmatpush.msra.mxu0 0.0
        %3605 = vmatpush.msra.mxu0 0.0
        %3606 = vmatpush.msra.mxu0 0.0
        %3607 = vmatpush.msra.mxu0 0.0
        %3608 = vmatpush.msra.mxu0 0.0
        %3609 = vmatpush.msra.mxu0 0.0
        %3610 = vmatpush.msra.mxu0 0.0
        %3611 = vmatpush.msra.mxu0 0.0
        %3612 = vmatpush.msra.mxu0 0.0
        %3613 = vmatpush.msra.mxu0 0.0
        %3614 = vmatpush.msra.mxu0 0.0
        %3615 = vmatpush.msra.mxu0 %v3598
        %3616 = vmatmul.f32.gmra.mxu0 %v3595
        %v3617 = vpop.f32.mrf.mxu0
        %v3618 = vadd.f32 0.0, %v3617
        %3619 = vdwg.mxu0
        %v3621 = vsel %vm1279, %v3436, 0
        %v3624 = vsel %vm1875, %v3512, 0
        %3626 = vmatpush.msra.mxu0 0.0
        %3627 = vmatpush.msra.mxu0 0.0
        %3628 = vmatpush.msra.mxu0 0.0
        %3629 = vmatpush.msra.mxu0 0.0
        %3630 = vmatpush.msra.mxu0 0.0
        %3631 = vmatpush.msra.mxu0 0.0
        %3632 = vmatpush.msra.mxu0 0.0
        %3633 = vmatpush.msra.mxu0 0.0
        %3634 = vmatpush.msra.mxu0 0.0
        %3635 = vmatpush.msra.mxu0 0.0
        %3636 = vmatpush.msra.mxu0 0.0
        %3637 = vmatpush.msra.mxu0 0.0
        %3638 = vmatpush.msra.mxu0 0.0
        %3639 = vmatpush.msra.mxu0 0.0
        %3640 = vmatpush.msra.mxu0 0.0
        %3641 = vmatpush.msra.mxu0 %v3624
        %3642 = vmatmul.f32.gmra.mxu0 %v3621
        %v3643 = vpop.f32.mrf.mxu0
        %v3644 = vadd.f32 0.0, %v3643
        %3645 = vdwg.mxu0
        %v3647 = vsel %vm1279, %v3459, 0
        %v3650 = vsel %vm1875, %v3513, 0
        %3652 = vmatpush.msra.mxu0 0.0
        %3653 = vmatpush.msra.mxu0 0.0
        %3654 = vmatpush.msra.mxu0 0.0
        %3655 = vmatpush.msra.mxu0 0.0
        %3656 = vmatpush.msra.mxu0 0.0
        %3657 = vmatpush.msra.mxu0 0.0
        %3658 = vmatpush.msra.mxu0 0.0
        %3659 = vmatpush.msra.mxu0 0.0
        %3660 = vmatpush.msra.mxu0 0.0
        %3661 = vmatpush.msra.mxu0 0.0
        %3662 = vmatpush.msra.mxu0 0.0
        %3663 = vmatpush.msra.mxu0 0.0
        %3664 = vmatpush.msra.mxu0 0.0
        %3665 = vmatpush.msra.mxu0 0.0
        %3666 = vmatpush.msra.mxu0 0.0
        %3667 = vmatpush.msra.mxu0 %v3650
        %3668 = vmatmul.f32.gmra.mxu0 %v3647
        %v3669 = vpop.f32.mrf.mxu0
        %v3670 = vadd.f32 0.0, %v3669
        %3671 = vdwg.mxu0
        %v3673 = vsel %vm1279, %v3482, 0
        %v3676 = vsel %vm1875, %v3514, 0
        %3678 = vmatpush.msra.mxu0 0.0
        %3679 = vmatpush.msra.mxu0 0.0
        %3680 = vmatpush.msra.mxu0 0.0
        %3681 = vmatpush.msra.mxu0 0.0
        %3682 = vmatpush.msra.mxu0 0.0
        %3683 = vmatpush.msra.mxu0 0.0
        %3684 = vmatpush.msra.mxu0 0.0
        %3685 = vmatpush.msra.mxu0 0.0
        %3686 = vmatpush.msra.mxu0 0.0
        %3687 = vmatpush.msra.mxu0 0.0
        %3688 = vmatpush.msra.mxu0 0.0
        %3689 = vmatpush.msra.mxu0 0.0
        %3690 = vmatpush.msra.mxu0 0.0
        %3691 = vmatpush.msra.mxu0 0.0
        %3692 = vmatpush.msra.mxu0 0.0
        %3693 = vmatpush.msra.mxu0 %v3676
        %3694 = vmatmul.f32.gmra.mxu0 %v3673
        %v3695 = vpop.f32.mrf.mxu0
        %v3696 = vadd.f32 0.0, %v3695
        %3697 = vdwg.mxu0
        %v3699 = vsel %vm1279, %v3505, 0
        %v3702 = vsel %vm1875, %v3515, 0
        %3704 = vmatpush.msra.mxu0 0.0
        %3705 = vmatpush.msra.mxu0 0.0
        %3706 = vmatpush.msra.mxu0 0.0
        %3707 = vmatpush.msra.mxu0 0.0
        %3708 = vmatpush.msra.mxu0 0.0
        %3709 = vmatpush.msra.mxu0 0.0
        %3710 = vmatpush.msra.mxu0 0.0
        %3711 = vmatpush.msra.mxu0 0.0
        %3712 = vmatpush.msra.mxu0 0.0
        %3713 = vmatpush.msra.mxu0 0.0
        %3714 = vmatpush.msra.mxu0 0.0
        %3715 = vmatpush.msra.mxu0 0.0
        %3716 = vmatpush.msra.mxu0 0.0
        %3717 = vmatpush.msra.mxu0 0.0
        %3718 = vmatpush.msra.mxu0 0.0
        %3719 = vmatpush.msra.mxu0 %v3702
        %3720 = vmatmul.f32.gmra.mxu0 %v3699
        %v3721 = vpop.f32.mrf.mxu0
        %v3722 = vadd.f32 0.0, %v3721
        %3723 = vdwg.mxu0
        %v3724 = vsel %vm795, %v3540, 0.0
        %v3725 = vsel %vm795, %v3566, 0.0
        %v3726 = vadd.f32 %v3724, %v3725
        %v3727 = vsel %vm795, %v3592, 0.0
        %v3728 = vadd.f32 %v3726, %v3727
        %v3729 = vsel %vm795, %v3618, 0.0
        %v3730 = vadd.f32 %v3728, %v3729
        %v3731 = vsel %vm795, %v3644, 0.0
        %v3732 = vadd.f32 %v3730, %v3731
        %v3733 = vsel %vm795, %v3670, 0.0
        %v3734 = vadd.f32 %v3732, %v3733
        %v3735 = vsel %vm795, %v3696, 0.0
        %v3736 = vadd.f32 %v3734, %v3735
        %v3737 = vsel %vm795, %v3722, 0.0
        %v3738 = vadd.f32 %v3736, %v3737
        %s3739 = scalar_lea.vmem %s7, 1
        %v3740 = vld [vmem:[%s3739] sm:$0x1]
        %v3742 = vperm.slane %v3740, 0
        %v3744 = vadd.f32 %v3738, %v3742
        %v3745 = vadd.f32 %v2245, %v3744
        %s3746 = scalar_lea.vmem %s8, 1
        %v3747 = vld [vmem:[%s3746] sm:$0x1]
        %s3748 = scalar_lea.vmem %s9, 1
        %v3749 = vld [vmem:[%s3748] sm:$0x1]
        %v3750 = vsel %vm795, %v3745, 0.0
        %3751 = vadd.xlane.f32.xlu0 %v3750
        %v3752 = vpop.xlane.xlu0 %3751
        %v3753 = vmul.f32 %v3752, %v2113
        %v3754 = vsub.f32 %v3745, %v3753
        %v3755 = vmul.f32 %v3754, %v3754
        %v3756 = vsel %vm795, %v3755, 0.0
        %3757 = vadd.xlane.f32.xlu0 %v3756
        %v3758 = vpop.xlane.xlu0 %3757
        %v3759 = vmul.f32 %v3758, %v2113
        %v3760 = vadd.f32 %v3759, 1e-05
        %v3761 = vrsqrt.pop %v3760
        %v3762 = vmul.f32 %v3761, %v3760
        %v3763 = vmul.f32 %v3762, %v3761
        %v3764 = vmul.f32 0.5, %v3763
        %v3765 = vsub.f32 1.5, %v3764
        %v3766 = vmul.f32 %v3761, %v3765
        %vm3767 = vweird.f32 %v3760
        %vm3768 = vweird.f32 %v3761
        %vm3769 = vmor %vm3767, %vm3768
        %v3770 = vsel %vm3769, %v3761, %v3766
        %v3771 = vmul.f32 %v3754, %v3770
        %v3773 = vperm.slane %v3747, 0
        %v3775 = vmul.f32 %v3771, %v3773
        %v3777 = vperm.slane %v3749, 0
        %v3779 = vadd.f32 %v3775, %v3777
        %s3780 = scalar_lea.vmem %s10, 32
        %v3781 = vld [vmem:[%s3780] sm:$0xff]
        %v3782 = vld [vmem:[%s3780 + $0x8] sm:$0xff]
        %v3783 = vld [vmem:[%s3780 + $0x10] sm:$0xff]
        %v3784 = vld [vmem:[%s3780 + $0x18] sm:$0xff]
        %s3785 = scalar_lea.vmem %s11, 1
        %v3786 = vld [vmem:[%s3785] sm:$0x1]
        %v3788 = vperm.slane %v3786, 0
        %v3791 = vsel %vm795, %v3779, 0
        %3793 = vmatpush.msra.mxu0 0.0
        %3794 = vmatpush.msra.mxu0 0.0
        %3795 = vmatpush.msra.mxu0 0.0
        %3796 = vmatpush.msra.mxu0 0.0
        %3797 = vmatpush.msra.mxu0 0.0
        %3798 = vmatpush.msra.mxu0 0.0
        %3799 = vmatpush.msra.mxu0 0.0
        %3800 = vmatpush.msra.mxu0 0.0
        %3801 = vmatpush.msra.mxu0 0.0
        %3802 = vmatpush.msra.mxu0 0.0
        %3803 = vmatpush.msra.mxu0 0.0
        %3804 = vmatpush.msra.mxu0 0.0
        %3805 = vmatpush.msra.mxu0 %v3784
        %3806 = vmatpush.msra.mxu0 %v3783
        %3807 = vmatpush.msra.mxu0 %v3782
        %3808 = vmatpush.msra.mxu0 %v3781
        %3809 = vmatmul.f32.gmra.mxu0 %v3791
        %v3810 = vpop.f32.mrf.mxu0
        %v3811 = vadd.f32 %v3788, %v3810
        %3812 = vdwg.mxu0
        %v3813 = vmax.f32 %v3811, 0.0
        %s3814 = scalar_lea.vmem %s12, 128
        %v3815 = vld [vmem:[%s3814] sm:$0xff]
        %v3816 = vld [vmem:[%s3814 + $0x8] sm:$0xff]
        %v3817 = vld [vmem:[%s3814 + $0x10] sm:$0xff]
        %v3818 = vld [vmem:[%s3814 + $0x18] sm:$0xff]
        %v3819 = vld [vmem:[%s3814 + $0x20] sm:$0xff]
        %v3820 = vld [vmem:[%s3814 + $0x28] sm:$0xff]
        %v3821 = vld [vmem:[%s3814 + $0x30] sm:$0xff]
        %v3822 = vld [vmem:[%s3814 + $0x38] sm:$0xff]
        %v3823 = vld [vmem:[%s3814 + $0x40] sm:$0xff]
        %v3824 = vld [vmem:[%s3814 + $0x48] sm:$0xff]
        %v3825 = vld [vmem:[%s3814 + $0x50] sm:$0xff]
        %v3826 = vld [vmem:[%s3814 + $0x58] sm:$0xff]
        %v3827 = vld [vmem:[%s3814 + $0x60] sm:$0xff]
        %v3828 = vld [vmem:[%s3814 + $0x68] sm:$0xff]
        %v3829 = vld [vmem:[%s3814 + $0x70] sm:$0xff]
        %v3830 = vld [vmem:[%s3814 + $0x78] sm:$0xff]
        %s3831 = scalar_lea.vmem %s13, 1
        %v3832 = vld [vmem:[%s3831] sm:$0x1]
        %v3834 = vperm.slane %v3832, 0
        %3836 = vmatpush.msra.mxu0 %v3830
        %3837 = vmatpush.msra.mxu0 %v3829
        %3838 = vmatpush.msra.mxu0 %v3828
        %3839 = vmatpush.msra.mxu0 %v3827
        %3840 = vmatpush.msra.mxu0 %v3826
        %3841 = vmatpush.msra.mxu0 %v3825
        %3842 = vmatpush.msra.mxu0 %v3824
        %3843 = vmatpush.msra.mxu0 %v3823
        %3844 = vmatpush.msra.mxu0 %v3822
        %3845 = vmatpush.msra.mxu0 %v3821
        %3846 = vmatpush.msra.mxu0 %v3820
        %3847 = vmatpush.msra.mxu0 %v3819
        %3848 = vmatpush.msra.mxu0 %v3818
        %3849 = vmatpush.msra.mxu0 %v3817
        %3850 = vmatpush.msra.mxu0 %v3816
        %3851 = vmatpush.msra.mxu0 %v3815
        %3852 = vmatmul.f32.gmra.mxu0 %v3813
        %v3853 = vpop.f32.mrf.mxu0
        %v3854 = vadd.f32 %v3834, %v3853
        %3855 = vdwg.mxu0
        %v3856 = vadd.f32 %v3779, %v3854
        %s3857 = scalar_lea.vmem %s14, 1
        %v3858 = vld [vmem:[%s3857] sm:$0x1]
        %s3859 = scalar_lea.vmem %s15, 1
        %v3860 = vld [vmem:[%s3859] sm:$0x1]
        %v3861 = vsel %vm795, %v3856, 0.0
        %3862 = vadd.xlane.f32.xlu0 %v3861
        %v3863 = vpop.xlane.xlu0 %3862
        %v3864 = vmul.f32 %v3863, %v2113
        %v3865 = vsub.f32 %v3856, %v3864
        %v3866 = vmul.f32 %v3865, %v3865
        %v3867 = vsel %vm795, %v3866, 0.0
        %3868 = vadd.xlane.f32.xlu0 %v3867
        %v3869 = vpop.xlane.xlu0 %3868
        %v3870 = vmul.f32 %v3869, %v2113
        %v3871 = vadd.f32 %v3870, 1e-05
        %v3872 = vrsqrt.pop %v3871
        %v3873 = vmul.f32 %v3872, %v3871
        %v3874 = vmul.f32 %v3873, %v3872
        %v3875 = vmul.f32 0.5, %v3874
        %v3876 = vsub.f32 1.5, %v3875
        %v3877 = vmul.f32 %v3872, %v3876
        %vm3878 = vweird.f32 %v3871
        %vm3879 = vweird.f32 %v3872
        %vm3880 = vmor %vm3878, %vm3879
        %v3881 = vsel %vm3880, %v3872, %v3877
        %v3882 = vmul.f32 %v3865, %v3881
        %v3884 = vperm.slane %v3858, 0
        %v3886 = vmul.f32 %v3882, %v3884
        %v3888 = vperm.slane %v3860, 0
        %v3890 = vadd.f32 %v3886, %v3888
        %v3891 = vld [vmem:[%s16] sm:$0xff]
        %v3892 = vld [vmem:[%s16 + $0x8] sm:$0xff]
        %v3893 = vld [vmem:[%s16 + $0x10] sm:$0xff]
        %v3894 = vld [vmem:[%s16 + $0x18] sm:$0xff]
        %v3895 = vld [vmem:[%s17] sm:$0x1]
        %v3897 = vperm.slane %v3895, 0
        %v3900 = vsel %vm795, %v3890, 0
        %3902 = vmatpush.msra.mxu0 0.0
        %3903 = vmatpush.msra.mxu0 0.0
        %3904 = vmatpush.msra.mxu0 0.0
        %3905 = vmatpush.msra.mxu0 0.0
        %3906 = vmatpush.msra.mxu0 0.0
        %3907 = vmatpush.msra.mxu0 0.0
        %3908 = vmatpush.msra.mxu0 0.0
        %3909 = vmatpush.msra.mxu0 0.0
        %3910 = vmatpush.msra.mxu0 0.0
        %3911 = vmatpush.msra.mxu0 0.0
        %3912 = vmatpush.msra.mxu0 0.0
        %3913 = vmatpush.msra.mxu0 0.0
        %3914 = vmatpush.msra.mxu0 %v3894
        %3915 = vmatpush.msra.mxu0 %v3893
        %3916 = vmatpush.msra.mxu0 %v3892
        %3917 = vmatpush.msra.mxu0 %v3891
        %3918 = vmatmul.f32.gmra.mxu0 %v3900
        %v3919 = vpop.f32.mrf.mxu0
        %v3920 = vadd.f32 %v3897, %v3919
        %3921 = vdwg.mxu0
        %3922 = vst [vmem:[%s566] sm:$0xff] %v3920
        %s3923 = sand.u32 %s423, 1
        %s3924 = scalar_lea.sflag [#allocation3], %s3923
        %s3925 = sand.u32 %s423, 1
        %s3926 = smul.addr %s3925, 8
        %s3927 = scalar_lea.vmem [#allocation2], %s3926
        // Predicated region
        $region93: #{tpu_custom_call.1} parent=91 // pred_check
          %p3928 = pneg %p433
        $region94: #{tpu_custom_call.1} parent=91 // pred_check_branch
          %3930 = sbr.rel (%p3928) target = $region96
        $region95: #{tpu_custom_call.1} parent=91 // pred_region
          %3932 = vsyncadd %s3924, 0
          %s3933 = smul.addr %s32, 8
          %s3934 = scalar_lea.hbm %s18, %s3933
          %s3936 = sshll.u32 %s3927, 4
          %s3937 = int_to_ptr.vmem [resolvable:$true] %s3936
          %s3938 = sshll.u32 %s3934, 4
          %s3939 = int_to_ptr.hbm [resolvable:$true] %s3938
          %3941 = dma.vmem_to_hbm [thread:$0]  %s3937, 128, %s3939, %s3924
        $region96: #{tpu_custom_call.1} parent=91 // pred_fallthru
          _
      $region92: #{tpu_custom_call.1} parent=5 // pred_fallthru
        _
      %p3942 = scmp.le.s32.totalorder 2, %s27
      // Predicated region
      $region97: #{tpu_custom_call.1} parent=5 // pred_check
        %p3943 = pneg %p3942
      $region98: #{tpu_custom_call.1} parent=5 // pred_check_branch
        %3945 = sbr.rel (%p3943) target = $region100
      $region99: #{tpu_custom_call.1} parent=5 // pred_region
        %s3946 = ssub.s32 %s27, 2
        // Predicated region
        $region101: #{tpu_custom_call.1} parent=99 // pred_check
          %p3947 = pneg %p439
        $region102: #{tpu_custom_call.1} parent=99 // pred_check_branch
          %3949 = sbr.rel (%p3947) target = $region104
        $region103: #{tpu_custom_call.1} parent=99 // pred_region
          %s3950 = sand.u32 %s424, 1
          %s3951 = scalar_lea.sflag [#allocation3], %s3950
          %s3952 = sand.u32 %s424, 1
          %s3953 = smul.addr %s3952, 8
          %s3954 = scalar_lea.vmem [#allocation2], %s3953
          %3956 = dma.done %s3951, 128
        $region104: #{tpu_custom_call.1} parent=99 // pred_fallthru
          _
      $region100: #{tpu_custom_call.1} parent=5 // pred_fallthru
        _
    $region6: #{tpu_custom_call.1} parent=1 // loop_footer
      %s31 = sadd.s32 1, %s27
    $region7: #{tpu_custom_call.1} parent=1 // loop_footer_branch
      %26 = sbr.rel target = $region3
    $region8: #{tpu_custom_call.1} parent=1 // loop_exit
      _
    %3957 = vsyncpa [#allocation3], 1
    %s3958 = scalar_lea.sflag [#allocation3], 1
    %3959 = vsyncpa %s3958, 1

</llo_original>
